<compile_context>
chip_gen: v7x
topology: tpu7x:2x2x1
jax: 0.10.0
libtpu: 0.0.40
codegen_flags: <defaults>
</compile_context>

<pallas_src>
import numpy as np
import jax
import jax.numpy as jnp
from jax import lax
from jax.experimental import pallas as pl
from jax.experimental.pallas import tpu as pltpu


# ----------------------------------------------------------------------------
# Fused Pallas kernel
# ----------------------------------------------------------------------------
def _make_decoder_kernel(T, H, V, Vp, L):
    G = 4 * H          # per-direction gate width (i|f|g|o)

    def kernel(*refs):
        x_ref, h0_ref, c0_ref = refs[0], refs[1], refs[2]
        lstm_refs = refs[3:3 + 3 * L]
        wfin_ref, bfin_ref = refs[3 + 3 * L], refs[4 + 3 * L]
        out_ref, hn_ref, cn_ref = refs[5 + 3 * L], refs[6 + 3 * L], refs[7 + 3 * L]

        # ---- embedding folded into layer-0 input projection: exact row gather
        # as a one-hot matmul straight into gate space (layer-0 "wih" is
        # W0 = embedding @ [wih_fwd | wih_bwd], built in the wrapper).
        ids = x_ref[...]                                               # (T, 1) i32
        onehot = (ids == lax.broadcasted_iota(jnp.int32, (T, V), 1)
                  ).astype(jnp.float32)                                # (T, V)
        layer_in = onehot

        h_fin = []
        c_fin = []
        for l in range(L):
            wih_ref, whh_ref, b_ref = lstm_refs[3 * l: 3 * l + 3]
            # input projection, both directions, all timesteps: one MXU call
            gates = (jnp.dot(layer_in, wih_ref[...],
                             preferred_element_type=jnp.float32)
                     + b_ref[...])                                     # (T, 8H)
            g_dir = (gates[:, :G], gates[:, G:])      # fwd / bwd gates, sliced once
            whh_dir = (whh_ref[0:H, :], whh_ref[H:2 * H, :])   # (H, 4H) each

            ys = ([None] * T, [None] * T)
            for d in range(2):                        # two independent chains
                h = h0_ref[2 * l + d: 2 * l + d + 1, :]                # (1, H)
                c = c0_ref[2 * l + d: 2 * l + d + 1, :]                # (1, H)
                gd = g_dir[d]
                whh = whh_dir[d]
                steps = range(T) if d == 0 else range(T - 1, -1, -1)
                for t in steps:                                        # static unroll
                    g = gd[t:t + 1, :] + jnp.dot(h, whh,
                                                 preferred_element_type=jnp.float32)
                    s = jax.nn.sigmoid(g)                              # (1, 4H)
                    cg = jnp.tanh(g[:, 2 * H:3 * H])                   # (1, H) cell gate
                    c = s[:, H:2 * H] * c + s[:, 0:H] * cg
                    h = s[:, 3 * H:4 * H] * jnp.tanh(c)
                    ys[d][t] = h                                       # value, no store
                h_fin.append(h)
                c_fin.append(c)

            # layer output assembled from live values (no scratch store/reload)
            layer_in = jnp.concatenate(
                [jnp.concatenate(ys[0], axis=0),
                 jnp.concatenate(ys[1], axis=0)], axis=-1)             # (T, 2H)

        hn_ref[...] = jnp.concatenate(h_fin, axis=0)                   # (2L, H)
        cn_ref[...] = jnp.concatenate(c_fin, axis=0)                   # (2L, H)

        # ---- final linear + softmax (lane-dense Vp; padded lanes carry -1e30
        # in the bias, padded weight columns are zero -> no in-kernel mask).
        logits = (jnp.dot(layer_in, wfin_ref[...],
                          preferred_element_type=jnp.float32)
                  + bfin_ref[...])                                     # (T, Vp)
        m = jnp.max(logits, axis=-1, keepdims=True)
        e = jnp.exp(logits - m)
        ssum = jnp.sum(e, axis=-1, keepdims=True)
        r = pl.reciprocal(ssum, approx=True)
        r = r * (2.0 - ssum * r)                       # one Newton step -> ~f32 exact
        out_ref[...] = e * r

    return kernel


# ----------------------------------------------------------------------------
# Parameters (deterministic, PyTorch-style shapes, stored pre-transposed)
# ----------------------------------------------------------------------------
def init_decoder1_params(key, embed_dim, vocab_len, output_len, lstm_layers):
    H = output_len
    params = {}
    key, k_emb = jax.random.split(key)
    params["embedding"] = jax.random.normal(k_emb, (vocab_len, embed_dim), jnp.float32)

    k_lstm = 1.0 / float(np.sqrt(H))
    lstm = []
    for l in range(lstm_layers):
        d_in = embed_dim if l == 0 else 2 * H
        layer = []
        for _d in range(2):  # forward, reverse
            key, k1, k2, k3, k4 = jax.random.split(key, 5)
            wih = jax.random.uniform(k1, (d_in, 4 * H), jnp.float32, -k_lstm, k_lstm)
            whh = jax.random.uniform(k2, (H, 4 * H), jnp.float32, -k_lstm, k_lstm)
            bih = jax.random.uniform(k3, (1, 4 * H), jnp.float32, -k_lstm, k_lstm)
            bhh = jax.random.uniform(k4, (1, 4 * H), jnp.float32, -k_lstm, k_lstm)
            layer.append({"wih": wih, "whh": whh, "b": bih + bhh})
        lstm.append(layer)
    params["lstm"] = lstm

    k_fin = 1.0 / float(np.sqrt(2 * H))
    key, kf1, kf2 = jax.random.split(key, 3)
    params["w_final"] = jax.random.uniform(kf1, (2 * H, vocab_len), jnp.float32, -k_fin, k_fin)
    params["b_final"] = jax.random.uniform(kf2, (1, vocab_len), jnp.float32, -k_fin, k_fin)
    return params


# ----------------------------------------------------------------------------
# Decoder1.forward (single fused pallas_call)
# ----------------------------------------------------------------------------
def decoder1_forward(params, x, hidden):
    h0, c0 = hidden                                  # each (2*L, H)
    T = int(x.shape[0])
    V, E = params["embedding"].shape
    L = len(params["lstm"])
    H = params["lstm"][0][0]["whh"].shape[0]
    Vp = ((V + 127) // 128) * 128                    # lane-dense padded vocab

    inputs = [x.reshape(T, 1).astype(jnp.int32), h0, c0]
    for l, layer in enumerate(params["lstm"]):
        # fwd|bwd packed on lanes for the shared input projection: (d_in, 8H)
        wih_p = jnp.concatenate([layer[0]["wih"], layer[1]["wih"]], axis=1)
        if l == 0:
            # fold embedding into layer-0 input projection: (V, 8H)
            wih_p = jnp.dot(params["embedding"], wih_p,
                            precision=lax.Precision.HIGHEST)
        # per-direction recurrent weights stacked on rows: (2H, 4H)
        whh_s = jnp.concatenate([layer[0]["whh"], layer[1]["whh"]], axis=0)
        b_p = jnp.concatenate([layer[0]["b"], layer[1]["b"]], axis=1)   # (1, 8H)
        inputs += [wih_p, whh_s, b_p]
    inputs.append(jnp.pad(params["w_final"], ((0, 0), (0, Vp - V))))
    inputs.append(jnp.pad(params["b_final"], ((0, 0), (0, Vp - V)),
                          constant_values=-1e30))    # padded lanes pre-masked

    vmem = pl.BlockSpec(memory_space=pltpu.MemorySpace.VMEM)
    out_p, hn, cn = pl.pallas_call(
        _make_decoder_kernel(T, H, V, Vp, L),
        out_shape=(
            jax.ShapeDtypeStruct((T, Vp), jnp.float32),      # padded softmax probs
            jax.ShapeDtypeStruct((2 * L, H), jnp.float32),   # h_n
            jax.ShapeDtypeStruct((2 * L, H), jnp.float32),   # c_n
        ),
        in_specs=[vmem] * len(inputs),
        out_specs=(vmem, vmem, vmem),
    )(*inputs)
    return out_p[:, :V], (hn, cn)


# ----------------------------------------------------------------------------
# Pure-JAX reference (mirrors nn.LSTM / nn.Linear / F.softmax semantics)
# ----------------------------------------------------------------------------
def _ref_forward(params, x, hidden):
    h0, c0 = hidden
    layer_in = jnp.take(params["embedding"], x, axis=0)
    T = x.shape[0]
    h_fin, c_fin = [], []
    for l, layer in enumerate(params["lstm"]):
        outs = []
        for d, p in enumerate(layer):
            idx = 2 * l + d
            H = p["whh"].shape[0]
            h = h0[idx:idx + 1]
            c = c0[idx:idx + 1]
            times = range(T - 1, -1, -1) if d == 1 else range(T)
            ys = [None] * T
            for t in times:
                g = layer_in[t:t + 1] @ p["wih"] + h @ p["whh"] + p["b"]
                i_g = jax.nn.sigmoid(g[:, :H])
                f_g = jax.nn.sigmoid(g[:, H:2 * H])
                c_g = jnp.tanh(g[:, 2 * H:3 * H])
                o_g = jax.nn.sigmoid(g[:, 3 * H:])
                c = f_g * c + i_g * c_g
                h = o_g * jnp.tanh(c)
                ys[t] = h
            outs.append(jnp.concatenate(ys, axis=0))
            h_fin.append(h)
            c_fin.append(c)
        layer_in = jnp.concatenate(outs, axis=-1)
    logits = layer_in @ params["w_final"] + params["b_final"]
    return jax.nn.softmax(logits, axis=1), (jnp.concatenate(h_fin, 0),
                                            jnp.concatenate(c_fin, 0))


if __name__ == "__main__":
    embed_dim, vocab_len, output_len, lstm_layers = 32, 64, 16, 2
    T = 8

    key = jax.random.PRNGKey(0)
    key, kx, kh, kc, kp = jax.random.split(key, 5)
    params = init_decoder1_params(kp, embed_dim, vocab_len, output_len, lstm_layers)

    x = jax.random.randint(kx, (T,), 0, vocab_len, dtype=jnp.int32)
    h0 = jax.random.normal(kh, (2 * lstm_layers, output_len), jnp.float32)
    c0 = jax.random.normal(kc, (2 * lstm_layers, output_len), jnp.float32)

    output, (hn, cn) = decoder1_forward(params, x, (h0, c0))
    jax.block_until_ready((output, hn, cn))

    ref_out, (ref_hn, ref_cn) = _ref_forward(params, x, (h0, c0))
    assert output.shape == (T, vocab_len)
    assert hn.shape == (2 * lstm_layers, output_len)
    assert cn.shape == (2 * lstm_layers, output_len)
    np.testing.assert_allclose(np.asarray(output), np.asarray(ref_out), atol=1e-5, rtol=1e-5)
    np.testing.assert_allclose(np.asarray(hn), np.asarray(ref_hn), atol=1e-5, rtol=1e-5)
    np.testing.assert_allclose(np.asarray(cn), np.asarray(ref_cn), atol=1e-5, rtol=1e-5)

    print("KERNEL_OK")
</pallas_src>

<mosaic_0001>
module attributes {stable_mosaic.version = 11 : i64} {
  func.func @kernel(%arg0: memref<8x1xi32, #tpu.memory_space<vmem>>, %arg1: memref<4x16xf32, #tpu.memory_space<vmem>>, %arg2: memref<4x16xf32, #tpu.memory_space<vmem>>, %arg3: memref<64x128xf32, #tpu.memory_space<vmem>>, %arg4: memref<32x64xf32, #tpu.memory_space<vmem>>, %arg5: memref<1x128xf32, #tpu.memory_space<vmem>>, %arg6: memref<32x128xf32, #tpu.memory_space<vmem>>, %arg7: memref<32x64xf32, #tpu.memory_space<vmem>>, %arg8: memref<1x128xf32, #tpu.memory_space<vmem>>, %arg9: memref<32x128xf32, #tpu.memory_space<vmem>>, %arg10: memref<1x128xf32, #tpu.memory_space<vmem>>, %arg11: memref<8x128xf32, #tpu.memory_space<vmem>>, %arg12: memref<4x16xf32, #tpu.memory_space<vmem>>, %arg13: memref<4x16xf32, #tpu.memory_space<vmem>>) attributes {dimension_semantics = [], scalar_prefetch = 0 : i64, scratch_operands = 0 : i64, tpu.core_type = #tpu.core_type<tc>} {
    %c0 = arith.constant 0 : index
    %c0_0 = arith.constant 0 : index
    %0 = vector.load %arg0[%c0, %c0_0] : memref<8x1xi32, #tpu.memory_space<vmem>>, vector<8x1xi32>
    %1 = tpu.iota {dimensions = array<i32: 1>} : vector<8x64xi32>
    %2 = vector.broadcast %0 : vector<8x1xi32> to vector<8x64xi32>
    %3 = arith.cmpi eq, %2, %1 : vector<8x64xi32>
    %4 = arith.extui %3 : vector<8x64xi1> to vector<8x64xi32>
    %5 = arith.sitofp %4 : vector<8x64xi32> to vector<8x64xf32>
    %c0_1 = arith.constant 0 : index
    %c0_2 = arith.constant 0 : index
    %6 = vector.load %arg3[%c0_1, %c0_2] : memref<64x128xf32, #tpu.memory_space<vmem>>, vector<64x128xf32>
    %cst = arith.constant dense<0.000000e+00> : vector<8x128xf32>
    %7 = tpu.matmul %5, %6, %cst {dimension_numbers = #tpu.dot_dimension_numbers<[1], [0], [0], [1], [0, 0, 1, 1], [], []>} : vector<8x64xf32>, vector<64x128xf32>, vector<8x128xf32> -> vector<8x128xf32>
    %c0_3 = arith.constant 0 : index
    %c0_4 = arith.constant 0 : index
    %8 = vector.load %arg5[%c0_3, %c0_4] : memref<1x128xf32, #tpu.memory_space<vmem>>, vector<1x128xf32>
    %9 = vector.broadcast %8 : vector<1x128xf32> to vector<8x128xf32>
    %10 = arith.addf %7, %9 : vector<8x128xf32>
    %11 = vector.extract_strided_slice %10 {offsets = [0, 0], sizes = [8, 64], strides = [1, 1]} : vector<8x128xf32> to vector<8x64xf32>
    %12 = vector.extract_strided_slice %10 {offsets = [0, 64], sizes = [8, 64], strides = [1, 1]} : vector<8x128xf32> to vector<8x64xf32>
    %c0_5 = arith.constant 0 : index
    %c0_6 = arith.constant 0 : index
    %13 = vector.load %arg4[%c0_5, %c0_6] : memref<32x64xf32, #tpu.memory_space<vmem>>, vector<16x64xf32>
    %c16 = arith.constant 16 : index
    %c0_7 = arith.constant 0 : index
    %14 = vector.load %arg4[%c16, %c0_7] : memref<32x64xf32, #tpu.memory_space<vmem>>, vector<16x64xf32>
    %c0_8 = arith.constant 0 : index
    %c0_9 = arith.constant 0 : index
    %15 = vector.load %arg1[%c0_8, %c0_9] : memref<4x16xf32, #tpu.memory_space<vmem>>, vector<1x16xf32>
    %c0_10 = arith.constant 0 : index
    %c0_11 = arith.constant 0 : index
    %16 = vector.load %arg2[%c0_10, %c0_11] : memref<4x16xf32, #tpu.memory_space<vmem>>, vector<1x16xf32>
    %17 = vector.extract_strided_slice %11 {offsets = [0, 0], sizes = [1, 64], strides = [1, 1]} : vector<8x64xf32> to vector<1x64xf32>
    %cst_12 = arith.constant dense<0.000000e+00> : vector<1x64xf32>
    %18 = tpu.matmul %15, %13, %cst_12 {dimension_numbers = #tpu.dot_dimension_numbers<[1], [0], [0], [1], [0, 0, 1, 1], [], []>} : vector<1x16xf32>, vector<16x64xf32>, vector<1x64xf32> -> vector<1x64xf32>
    %19 = arith.addf %17, %18 : vector<1x64xf32>
    %20 = arith.negf %19 : vector<1x64xf32>
    %21 = math.exp %20 : vector<1x64xf32>
    %cst_13 = arith.constant 1.000000e+00 : f32
    %22 = vector.broadcast %cst_13 : f32 to vector<1x64xf32>
    %23 = arith.addf %22, %21 : vector<1x64xf32>
    %24 = arith.divf %22, %23 : vector<1x64xf32>
    %25 = vector.extract_strided_slice %19 {offsets = [0, 32], sizes = [1, 16], strides = [1, 1]} : vector<1x64xf32> to vector<1x16xf32>
    %26 = math.tanh %25 : vector<1x16xf32>
    %27 = vector.extract_strided_slice %24 {offsets = [0, 16], sizes = [1, 16], strides = [1, 1]} : vector<1x64xf32> to vector<1x16xf32>
    %28 = arith.mulf %27, %16 : vector<1x16xf32>
    %29 = vector.extract_strided_slice %24 {offsets = [0, 0], sizes = [1, 16], strides = [1, 1]} : vector<1x64xf32> to vector<1x16xf32>
    %30 = arith.mulf %29, %26 : vector<1x16xf32>
    %31 = arith.addf %28, %30 : vector<1x16xf32>
    %32 = vector.extract_strided_slice %24 {offsets = [0, 48], sizes = [1, 16], strides = [1, 1]} : vector<1x64xf32> to vector<1x16xf32>
    %33 = math.tanh %31 : vector<1x16xf32>
    %34 = arith.mulf %32, %33 : vector<1x16xf32>
    %35 = vector.extract_strided_slice %11 {offsets = [1, 0], sizes = [1, 64], strides = [1, 1]} : vector<8x64xf32> to vector<1x64xf32>
    %cst_14 = arith.constant dense<0.000000e+00> : vector<1x64xf32>
    %36 = tpu.matmul %34, %13, %cst_14 {dimension_numbers = #tpu.dot_dimension_numbers<[1], [0], [0], [1], [0, 0, 1, 1], [], []>} : vector<1x16xf32>, vector<16x64xf32>, vector<1x64xf32> -> vector<1x64xf32>
    %37 = arith.addf %35, %36 : vector<1x64xf32>
    %38 = arith.negf %37 : vector<1x64xf32>
    %39 = math.exp %38 : vector<1x64xf32>
    %cst_15 = arith.constant 1.000000e+00 : f32
    %40 = vector.broadcast %cst_15 : f32 to vector<1x64xf32>
    %41 = arith.addf %40, %39 : vector<1x64xf32>
    %42 = arith.divf %40, %41 : vector<1x64xf32>
    %43 = vector.extract_strided_slice %37 {offsets = [0, 32], sizes = [1, 16], strides = [1, 1]} : vector<1x64xf32> to vector<1x16xf32>
    %44 = math.tanh %43 : vector<1x16xf32>
    %45 = vector.extract_strided_slice %42 {offsets = [0, 16], sizes = [1, 16], strides = [1, 1]} : vector<1x64xf32> to vector<1x16xf32>
    %46 = arith.mulf %45, %31 : vector<1x16xf32>
    %47 = vector.extract_strided_slice %42 {offsets = [0, 0], sizes = [1, 16], strides = [1, 1]} : vector<1x64xf32> to vector<1x16xf32>
    %48 = arith.mulf %47, %44 : vector<1x16xf32>
    %49 = arith.addf %46, %48 : vector<1x16xf32>
    %50 = vector.extract_strided_slice %42 {offsets = [0, 48], sizes = [1, 16], strides = [1, 1]} : vector<1x64xf32> to vector<1x16xf32>
    %51 = math.tanh %49 : vector<1x16xf32>
    %52 = arith.mulf %50, %51 : vector<1x16xf32>
    %53 = vector.extract_strided_slice %11 {offsets = [2, 0], sizes = [1, 64], strides = [1, 1]} : vector<8x64xf32> to vector<1x64xf32>
    %cst_16 = arith.constant dense<0.000000e+00> : vector<1x64xf32>
    %54 = tpu.matmul %52, %13, %cst_16 {dimension_numbers = #tpu.dot_dimension_numbers<[1], [0], [0], [1], [0, 0, 1, 1], [], []>} : vector<1x16xf32>, vector<16x64xf32>, vector<1x64xf32> -> vector<1x64xf32>
    %55 = arith.addf %53, %54 : vector<1x64xf32>
    %56 = arith.negf %55 : vector<1x64xf32>
    %57 = math.exp %56 : vector<1x64xf32>
    %cst_17 = arith.constant 1.000000e+00 : f32
    %58 = vector.broadcast %cst_17 : f32 to vector<1x64xf32>
    %59 = arith.addf %58, %57 : vector<1x64xf32>
    %60 = arith.divf %58, %59 : vector<1x64xf32>
    %61 = vector.extract_strided_slice %55 {offsets = [0, 32], sizes = [1, 16], strides = [1, 1]} : vector<1x64xf32> to vector<1x16xf32>
    %62 = math.tanh %61 : vector<1x16xf32>
    %63 = vector.extract_strided_slice %60 {offsets = [0, 16], sizes = [1, 16], strides = [1, 1]} : vector<1x64xf32> to vector<1x16xf32>
    %64 = arith.mulf %63, %49 : vector<1x16xf32>
    %65 = vector.extract_strided_slice %60 {offsets = [0, 0], sizes = [1, 16], strides = [1, 1]} : vector<1x64xf32> to vector<1x16xf32>
    %66 = arith.mulf %65, %62 : vector<1x16xf32>
    %67 = arith.addf %64, %66 : vector<1x16xf32>
    %68 = vector.extract_strided_slice %60 {offsets = [0, 48], sizes = [1, 16], strides = [1, 1]} : vector<1x64xf32> to vector<1x16xf32>
    %69 = math.tanh %67 : vector<1x16xf32>
    %70 = arith.mulf %68, %69 : vector<1x16xf32>
    %71 = vector.extract_strided_slice %11 {offsets = [3, 0], sizes = [1, 64], strides = [1, 1]} : vector<8x64xf32> to vector<1x64xf32>
    %cst_18 = arith.constant dense<0.000000e+00> : vector<1x64xf32>
    %72 = tpu.matmul %70, %13, %cst_18 {dimension_numbers = #tpu.dot_dimension_numbers<[1], [0], [0], [1], [0, 0, 1, 1], [], []>} : vector<1x16xf32>, vector<16x64xf32>, vector<1x64xf32> -> vector<1x64xf32>
    %73 = arith.addf %71, %72 : vector<1x64xf32>
    %74 = arith.negf %73 : vector<1x64xf32>
    %75 = math.exp %74 : vector<1x64xf32>
    %cst_19 = arith.constant 1.000000e+00 : f32
    %76 = vector.broadcast %cst_19 : f32 to vector<1x64xf32>
    %77 = arith.addf %76, %75 : vector<1x64xf32>
    %78 = arith.divf %76, %77 : vector<1x64xf32>
    %79 = vector.extract_strided_slice %73 {offsets = [0, 32], sizes = [1, 16], strides = [1, 1]} : vector<1x64xf32> to vector<1x16xf32>
    %80 = math.tanh %79 : vector<1x16xf32>
    %81 = vector.extract_strided_slice %78 {offsets = [0, 16], sizes = [1, 16], strides = [1, 1]} : vector<1x64xf32> to vector<1x16xf32>
    %82 = arith.mulf %81, %67 : vector<1x16xf32>
    %83 = vector.extract_strided_slice %78 {offsets = [0, 0], sizes = [1, 16], strides = [1, 1]} : vector<1x64xf32> to vector<1x16xf32>
    %84 = arith.mulf %83, %80 : vector<1x16xf32>
    %85 = arith.addf %82, %84 : vector<1x16xf32>
    %86 = vector.extract_strided_slice %78 {offsets = [0, 48], sizes = [1, 16], strides = [1, 1]} : vector<1x64xf32> to vector<1x16xf32>
    %87 = math.tanh %85 : vector<1x16xf32>
    %88 = arith.mulf %86, %87 : vector<1x16xf32>
    %89 = vector.extract_strided_slice %11 {offsets = [4, 0], sizes = [1, 64], strides = [1, 1]} : vector<8x64xf32> to vector<1x64xf32>
    %cst_20 = arith.constant dense<0.000000e+00> : vector<1x64xf32>
    %90 = tpu.matmul %88, %13, %cst_20 {dimension_numbers = #tpu.dot_dimension_numbers<[1], [0], [0], [1], [0, 0, 1, 1], [], []>} : vector<1x16xf32>, vector<16x64xf32>, vector<1x64xf32> -> vector<1x64xf32>
    %91 = arith.addf %89, %90 : vector<1x64xf32>
    %92 = arith.negf %91 : vector<1x64xf32>
    %93 = math.exp %92 : vector<1x64xf32>
    %cst_21 = arith.constant 1.000000e+00 : f32
    %94 = vector.broadcast %cst_21 : f32 to vector<1x64xf32>
    %95 = arith.addf %94, %93 : vector<1x64xf32>
    %96 = arith.divf %94, %95 : vector<1x64xf32>
    %97 = vector.extract_strided_slice %91 {offsets = [0, 32], sizes = [1, 16], strides = [1, 1]} : vector<1x64xf32> to vector<1x16xf32>
    %98 = math.tanh %97 : vector<1x16xf32>
    %99 = vector.extract_strided_slice %96 {offsets = [0, 16], sizes = [1, 16], strides = [1, 1]} : vector<1x64xf32> to vector<1x16xf32>
    %100 = arith.mulf %99, %85 : vector<1x16xf32>
    %101 = vector.extract_strided_slice %96 {offsets = [0, 0], sizes = [1, 16], strides = [1, 1]} : vector<1x64xf32> to vector<1x16xf32>
    %102 = arith.mulf %101, %98 : vector<1x16xf32>
    %103 = arith.addf %100, %102 : vector<1x16xf32>
    %104 = vector.extract_strided_slice %96 {offsets = [0, 48], sizes = [1, 16], strides = [1, 1]} : vector<1x64xf32> to vector<1x16xf32>
    %105 = math.tanh %103 : vector<1x16xf32>
    %106 = arith.mulf %104, %105 : vector<1x16xf32>
    %107 = vector.extract_strided_slice %11 {offsets = [5, 0], sizes = [1, 64], strides = [1, 1]} : vector<8x64xf32> to vector<1x64xf32>
    %cst_22 = arith.constant dense<0.000000e+00> : vector<1x64xf32>
    %108 = tpu.matmul %106, %13, %cst_22 {dimension_numbers = #tpu.dot_dimension_numbers<[1], [0], [0], [1], [0, 0, 1, 1], [], []>} : vector<1x16xf32>, vector<16x64xf32>, vector<1x64xf32> -> vector<1x64xf32>
    %109 = arith.addf %107, %108 : vector<1x64xf32>
    %110 = arith.negf %109 : vector<1x64xf32>
    %111 = math.exp %110 : vector<1x64xf32>
    %cst_23 = arith.constant 1.000000e+00 : f32
    %112 = vector.broadcast %cst_23 : f32 to vector<1x64xf32>
    %113 = arith.addf %112, %111 : vector<1x64xf32>
    %114 = arith.divf %112, %113 : vector<1x64xf32>
    %115 = vector.extract_strided_slice %109 {offsets = [0, 32], sizes = [1, 16], strides = [1, 1]} : vector<1x64xf32> to vector<1x16xf32>
    %116 = math.tanh %115 : vector<1x16xf32>
    %117 = vector.extract_strided_slice %114 {offsets = [0, 16], sizes = [1, 16], strides = [1, 1]} : vector<1x64xf32> to vector<1x16xf32>
    %118 = arith.mulf %117, %103 : vector<1x16xf32>
    %119 = vector.extract_strided_slice %114 {offsets = [0, 0], sizes = [1, 16], strides = [1, 1]} : vector<1x64xf32> to vector<1x16xf32>
    %120 = arith.mulf %119, %116 : vector<1x16xf32>
    %121 = arith.addf %118, %120 : vector<1x16xf32>
    %122 = vector.extract_strided_slice %114 {offsets = [0, 48], sizes = [1, 16], strides = [1, 1]} : vector<1x64xf32> to vector<1x16xf32>
    %123 = math.tanh %121 : vector<1x16xf32>
    %124 = arith.mulf %122, %123 : vector<1x16xf32>
    %125 = vector.extract_strided_slice %11 {offsets = [6, 0], sizes = [1, 64], strides = [1, 1]} : vector<8x64xf32> to vector<1x64xf32>
    %cst_24 = arith.constant dense<0.000000e+00> : vector<1x64xf32>
    %126 = tpu.matmul %124, %13, %cst_24 {dimension_numbers = #tpu.dot_dimension_numbers<[1], [0], [0], [1], [0, 0, 1, 1], [], []>} : vector<1x16xf32>, vector<16x64xf32>, vector<1x64xf32> -> vector<1x64xf32>
    %127 = arith.addf %125, %126 : vector<1x64xf32>
    %128 = arith.negf %127 : vector<1x64xf32>
    %129 = math.exp %128 : vector<1x64xf32>
    %cst_25 = arith.constant 1.000000e+00 : f32
    %130 = vector.broadcast %cst_25 : f32 to vector<1x64xf32>
    %131 = arith.addf %130, %129 : vector<1x64xf32>
    %132 = arith.divf %130, %131 : vector<1x64xf32>
    %133 = vector.extract_strided_slice %127 {offsets = [0, 32], sizes = [1, 16], strides = [1, 1]} : vector<1x64xf32> to vector<1x16xf32>
    %134 = math.tanh %133 : vector<1x16xf32>
    %135 = vector.extract_strided_slice %132 {offsets = [0, 16], sizes = [1, 16], strides = [1, 1]} : vector<1x64xf32> to vector<1x16xf32>
    %136 = arith.mulf %135, %121 : vector<1x16xf32>
    %137 = vector.extract_strided_slice %132 {offsets = [0, 0], sizes = [1, 16], strides = [1, 1]} : vector<1x64xf32> to vector<1x16xf32>
    %138 = arith.mulf %137, %134 : vector<1x16xf32>
    %139 = arith.addf %136, %138 : vector<1x16xf32>
    %140 = vector.extract_strided_slice %132 {offsets = [0, 48], sizes = [1, 16], strides = [1, 1]} : vector<1x64xf32> to vector<1x16xf32>
    %141 = math.tanh %139 : vector<1x16xf32>
    %142 = arith.mulf %140, %141 : vector<1x16xf32>
    %143 = vector.extract_strided_slice %11 {offsets = [7, 0], sizes = [1, 64], strides = [1, 1]} : vector<8x64xf32> to vector<1x64xf32>
    %cst_26 = arith.constant dense<0.000000e+00> : vector<1x64xf32>
    %144 = tpu.matmul %142, %13, %cst_26 {dimension_numbers = #tpu.dot_dimension_numbers<[1], [0], [0], [1], [0, 0, 1, 1], [], []>} : vector<1x16xf32>, vector<16x64xf32>, vector<1x64xf32> -> vector<1x64xf32>
    %145 = arith.addf %143, %144 : vector<1x64xf32>
    %146 = arith.negf %145 : vector<1x64xf32>
    %147 = math.exp %146 : vector<1x64xf32>
    %cst_27 = arith.constant 1.000000e+00 : f32
    %148 = vector.broadcast %cst_27 : f32 to vector<1x64xf32>
    %149 = arith.addf %148, %147 : vector<1x64xf32>
    %150 = arith.divf %148, %149 : vector<1x64xf32>
    %151 = vector.extract_strided_slice %145 {offsets = [0, 32], sizes = [1, 16], strides = [1, 1]} : vector<1x64xf32> to vector<1x16xf32>
    %152 = math.tanh %151 : vector<1x16xf32>
    %153 = vector.extract_strided_slice %150 {offsets = [0, 16], sizes = [1, 16], strides = [1, 1]} : vector<1x64xf32> to vector<1x16xf32>
    %154 = arith.mulf %153, %139 : vector<1x16xf32>
    %155 = vector.extract_strided_slice %150 {offsets = [0, 0], sizes = [1, 16], strides = [1, 1]} : vector<1x64xf32> to vector<1x16xf32>
    %156 = arith.mulf %155, %152 : vector<1x16xf32>
    %157 = arith.addf %154, %156 : vector<1x16xf32>
    %158 = vector.extract_strided_slice %150 {offsets = [0, 48], sizes = [1, 16], strides = [1, 1]} : vector<1x64xf32> to vector<1x16xf32>
    %159 = math.tanh %157 : vector<1x16xf32>
    %160 = arith.mulf %158, %159 : vector<1x16xf32>
    %c1 = arith.constant 1 : index
    %c0_28 = arith.constant 0 : index
    %161 = vector.load %arg1[%c1, %c0_28] : memref<4x16xf32, #tpu.memory_space<vmem>>, vector<1x16xf32>
    %c1_29 = arith.constant 1 : index
    %c0_30 = arith.constant 0 : index
    %162 = vector.load %arg2[%c1_29, %c0_30] : memref<4x16xf32, #tpu.memory_space<vmem>>, vector<1x16xf32>
    %163 = vector.extract_strided_slice %12 {offsets = [7, 0], sizes = [1, 64], strides = [1, 1]} : vector<8x64xf32> to vector<1x64xf32>
    %cst_31 = arith.constant dense<0.000000e+00> : vector<1x64xf32>
    %164 = tpu.matmul %161, %14, %cst_31 {dimension_numbers = #tpu.dot_dimension_numbers<[1], [0], [0], [1], [0, 0, 1, 1], [], []>} : vector<1x16xf32>, vector<16x64xf32>, vector<1x64xf32> -> vector<1x64xf32>
    %165 = arith.addf %163, %164 : vector<1x64xf32>
    %166 = arith.negf %165 : vector<1x64xf32>
    %167 = math.exp %166 : vector<1x64xf32>
    %cst_32 = arith.constant 1.000000e+00 : f32
    %168 = vector.broadcast %cst_32 : f32 to vector<1x64xf32>
    %169 = arith.addf %168, %167 : vector<1x64xf32>
    %170 = arith.divf %168, %169 : vector<1x64xf32>
    %171 = vector.extract_strided_slice %165 {offsets = [0, 32], sizes = [1, 16], strides = [1, 1]} : vector<1x64xf32> to vector<1x16xf32>
    %172 = math.tanh %171 : vector<1x16xf32>
    %173 = vector.extract_strided_slice %170 {offsets = [0, 16], sizes = [1, 16], strides = [1, 1]} : vector<1x64xf32> to vector<1x16xf32>
    %174 = arith.mulf %173, %162 : vector<1x16xf32>
    %175 = vector.extract_strided_slice %170 {offsets = [0, 0], sizes = [1, 16], strides = [1, 1]} : vector<1x64xf32> to vector<1x16xf32>
    %176 = arith.mulf %175, %172 : vector<1x16xf32>
    %177 = arith.addf %174, %176 : vector<1x16xf32>
    %178 = vector.extract_strided_slice %170 {offsets = [0, 48], sizes = [1, 16], strides = [1, 1]} : vector<1x64xf32> to vector<1x16xf32>
    %179 = math.tanh %177 : vector<1x16xf32>
    %180 = arith.mulf %178, %179 : vector<1x16xf32>
    %181 = vector.extract_strided_slice %12 {offsets = [6, 0], sizes = [1, 64], strides = [1, 1]} : vector<8x64xf32> to vector<1x64xf32>
    %cst_33 = arith.constant dense<0.000000e+00> : vector<1x64xf32>
    %182 = tpu.matmul %180, %14, %cst_33 {dimension_numbers = #tpu.dot_dimension_numbers<[1], [0], [0], [1], [0, 0, 1, 1], [], []>} : vector<1x16xf32>, vector<16x64xf32>, vector<1x64xf32> -> vector<1x64xf32>
    %183 = arith.addf %181, %182 : vector<1x64xf32>
    %184 = arith.negf %183 : vector<1x64xf32>
    %185 = math.exp %184 : vector<1x64xf32>
    %cst_34 = arith.constant 1.000000e+00 : f32
    %186 = vector.broadcast %cst_34 : f32 to vector<1x64xf32>
    %187 = arith.addf %186, %185 : vector<1x64xf32>
    %188 = arith.divf %186, %187 : vector<1x64xf32>
    %189 = vector.extract_strided_slice %183 {offsets = [0, 32], sizes = [1, 16], strides = [1, 1]} : vector<1x64xf32> to vector<1x16xf32>
    %190 = math.tanh %189 : vector<1x16xf32>
    %191 = vector.extract_strided_slice %188 {offsets = [0, 16], sizes = [1, 16], strides = [1, 1]} : vector<1x64xf32> to vector<1x16xf32>
    %192 = arith.mulf %191, %177 : vector<1x16xf32>
    %193 = vector.extract_strided_slice %188 {offsets = [0, 0], sizes = [1, 16], strides = [1, 1]} : vector<1x64xf32> to vector<1x16xf32>
    %194 = arith.mulf %193, %190 : vector<1x16xf32>
    %195 = arith.addf %192, %194 : vector<1x16xf32>
    %196 = vector.extract_strided_slice %188 {offsets = [0, 48], sizes = [1, 16], strides = [1, 1]} : vector<1x64xf32> to vector<1x16xf32>
    %197 = math.tanh %195 : vector<1x16xf32>
    %198 = arith.mulf %196, %197 : vector<1x16xf32>
    %199 = vector.extract_strided_slice %12 {offsets = [5, 0], sizes = [1, 64], strides = [1, 1]} : vector<8x64xf32> to vector<1x64xf32>
    %cst_35 = arith.constant dense<0.000000e+00> : vector<1x64xf32>
    %200 = tpu.matmul %198, %14, %cst_35 {dimension_numbers = #tpu.dot_dimension_numbers<[1], [0], [0], [1], [0, 0, 1, 1], [], []>} : vector<1x16xf32>, vector<16x64xf32>, vector<1x64xf32> -> vector<1x64xf32>
    %201 = arith.addf %199, %200 : vector<1x64xf32>
    %202 = arith.negf %201 : vector<1x64xf32>
    %203 = math.exp %202 : vector<1x64xf32>
    %cst_36 = arith.constant 1.000000e+00 : f32
    %204 = vector.broadcast %cst_36 : f32 to vector<1x64xf32>
    %205 = arith.addf %204, %203 : vector<1x64xf32>
    %206 = arith.divf %204, %205 : vector<1x64xf32>
    %207 = vector.extract_strided_slice %201 {offsets = [0, 32], sizes = [1, 16], strides = [1, 1]} : vector<1x64xf32> to vector<1x16xf32>
    %208 = math.tanh %207 : vector<1x16xf32>
    %209 = vector.extract_strided_slice %206 {offsets = [0, 16], sizes = [1, 16], strides = [1, 1]} : vector<1x64xf32> to vector<1x16xf32>
    %210 = arith.mulf %209, %195 : vector<1x16xf32>
    %211 = vector.extract_strided_slice %206 {offsets = [0, 0], sizes = [1, 16], strides = [1, 1]} : vector<1x64xf32> to vector<1x16xf32>
    %212 = arith.mulf %211, %208 : vector<1x16xf32>
    %213 = arith.addf %210, %212 : vector<1x16xf32>
    %214 = vector.extract_strided_slice %206 {offsets = [0, 48], sizes = [1, 16], strides = [1, 1]} : vector<1x64xf32> to vector<1x16xf32>
    %215 = math.tanh %213 : vector<1x16xf32>
    %216 = arith.mulf %214, %215 : vector<1x16xf32>
    %217 = vector.extract_strided_slice %12 {offsets = [4, 0], sizes = [1, 64], strides = [1, 1]} : vector<8x64xf32> to vector<1x64xf32>
    %cst_37 = arith.constant dense<0.000000e+00> : vector<1x64xf32>
    %218 = tpu.matmul %216, %14, %cst_37 {dimension_numbers = #tpu.dot_dimension_numbers<[1], [0], [0], [1], [0, 0, 1, 1], [], []>} : vector<1x16xf32>, vector<16x64xf32>, vector<1x64xf32> -> vector<1x64xf32>
    %219 = arith.addf %217, %218 : vector<1x64xf32>
    %220 = arith.negf %219 : vector<1x64xf32>
    %221 = math.exp %220 : vector<1x64xf32>
    %cst_38 = arith.constant 1.000000e+00 : f32
    %222 = vector.broadcast %cst_38 : f32 to vector<1x64xf32>
    %223 = arith.addf %222, %221 : vector<1x64xf32>
    %224 = arith.divf %222, %223 : vector<1x64xf32>
    %225 = vector.extract_strided_slice %219 {offsets = [0, 32], sizes = [1, 16], strides = [1, 1]} : vector<1x64xf32> to vector<1x16xf32>
    %226 = math.tanh %225 : vector<1x16xf32>
    %227 = vector.extract_strided_slice %224 {offsets = [0, 16], sizes = [1, 16], strides = [1, 1]} : vector<1x64xf32> to vector<1x16xf32>
    %228 = arith.mulf %227, %213 : vector<1x16xf32>
    %229 = vector.extract_strided_slice %224 {offsets = [0, 0], sizes = [1, 16], strides = [1, 1]} : vector<1x64xf32> to vector<1x16xf32>
    %230 = arith.mulf %229, %226 : vector<1x16xf32>
    %231 = arith.addf %228, %230 : vector<1x16xf32>
    %232 = vector.extract_strided_slice %224 {offsets = [0, 48], sizes = [1, 16], strides = [1, 1]} : vector<1x64xf32> to vector<1x16xf32>
    %233 = math.tanh %231 : vector<1x16xf32>
    %234 = arith.mulf %232, %233 : vector<1x16xf32>
    %235 = vector.extract_strided_slice %12 {offsets = [3, 0], sizes = [1, 64], strides = [1, 1]} : vector<8x64xf32> to vector<1x64xf32>
    %cst_39 = arith.constant dense<0.000000e+00> : vector<1x64xf32>
    %236 = tpu.matmul %234, %14, %cst_39 {dimension_numbers = #tpu.dot_dimension_numbers<[1], [0], [0], [1], [0, 0, 1, 1], [], []>} : vector<1x16xf32>, vector<16x64xf32>, vector<1x64xf32> -> vector<1x64xf32>
    %237 = arith.addf %235, %236 : vector<1x64xf32>
    %238 = arith.negf %237 : vector<1x64xf32>
    %239 = math.exp %238 : vector<1x64xf32>
    %cst_40 = arith.constant 1.000000e+00 : f32
    %240 = vector.broadcast %cst_40 : f32 to vector<1x64xf32>
    %241 = arith.addf %240, %239 : vector<1x64xf32>
    %242 = arith.divf %240, %241 : vector<1x64xf32>
    %243 = vector.extract_strided_slice %237 {offsets = [0, 32], sizes = [1, 16], strides = [1, 1]} : vector<1x64xf32> to vector<1x16xf32>
    %244 = math.tanh %243 : vector<1x16xf32>
    %245 = vector.extract_strided_slice %242 {offsets = [0, 16], sizes = [1, 16], strides = [1, 1]} : vector<1x64xf32> to vector<1x16xf32>
    %246 = arith.mulf %245, %231 : vector<1x16xf32>
    %247 = vector.extract_strided_slice %242 {offsets = [0, 0], sizes = [1, 16], strides = [1, 1]} : vector<1x64xf32> to vector<1x16xf32>
    %248 = arith.mulf %247, %244 : vector<1x16xf32>
    %249 = arith.addf %246, %248 : vector<1x16xf32>
    %250 = vector.extract_strided_slice %242 {offsets = [0, 48], sizes = [1, 16], strides = [1, 1]} : vector<1x64xf32> to vector<1x16xf32>
    %251 = math.tanh %249 : vector<1x16xf32>
    %252 = arith.mulf %250, %251 : vector<1x16xf32>
    %253 = vector.extract_strided_slice %12 {offsets = [2, 0], sizes = [1, 64], strides = [1, 1]} : vector<8x64xf32> to vector<1x64xf32>
    %cst_41 = arith.constant dense<0.000000e+00> : vector<1x64xf32>
    %254 = tpu.matmul %252, %14, %cst_41 {dimension_numbers = #tpu.dot_dimension_numbers<[1], [0], [0], [1], [0, 0, 1, 1], [], []>} : vector<1x16xf32>, vector<16x64xf32>, vector<1x64xf32> -> vector<1x64xf32>
    %255 = arith.addf %253, %254 : vector<1x64xf32>
    %256 = arith.negf %255 : vector<1x64xf32>
    %257 = math.exp %256 : vector<1x64xf32>
    %cst_42 = arith.constant 1.000000e+00 : f32
    %258 = vector.broadcast %cst_42 : f32 to vector<1x64xf32>
    %259 = arith.addf %258, %257 : vector<1x64xf32>
    %260 = arith.divf %258, %259 : vector<1x64xf32>
    %261 = vector.extract_strided_slice %255 {offsets = [0, 32], sizes = [1, 16], strides = [1, 1]} : vector<1x64xf32> to vector<1x16xf32>
    %262 = math.tanh %261 : vector<1x16xf32>
    %263 = vector.extract_strided_slice %260 {offsets = [0, 16], sizes = [1, 16], strides = [1, 1]} : vector<1x64xf32> to vector<1x16xf32>
    %264 = arith.mulf %263, %249 : vector<1x16xf32>
    %265 = vector.extract_strided_slice %260 {offsets = [0, 0], sizes = [1, 16], strides = [1, 1]} : vector<1x64xf32> to vector<1x16xf32>
    %266 = arith.mulf %265, %262 : vector<1x16xf32>
    %267 = arith.addf %264, %266 : vector<1x16xf32>
    %268 = vector.extract_strided_slice %260 {offsets = [0, 48], sizes = [1, 16], strides = [1, 1]} : vector<1x64xf32> to vector<1x16xf32>
    %269 = math.tanh %267 : vector<1x16xf32>
    %270 = arith.mulf %268, %269 : vector<1x16xf32>
    %271 = vector.extract_strided_slice %12 {offsets = [1, 0], sizes = [1, 64], strides = [1, 1]} : vector<8x64xf32> to vector<1x64xf32>
    %cst_43 = arith.constant dense<0.000000e+00> : vector<1x64xf32>
    %272 = tpu.matmul %270, %14, %cst_43 {dimension_numbers = #tpu.dot_dimension_numbers<[1], [0], [0], [1], [0, 0, 1, 1], [], []>} : vector<1x16xf32>, vector<16x64xf32>, vector<1x64xf32> -> vector<1x64xf32>
    %273 = arith.addf %271, %272 : vector<1x64xf32>
    %274 = arith.negf %273 : vector<1x64xf32>
    %275 = math.exp %274 : vector<1x64xf32>
    %cst_44 = arith.constant 1.000000e+00 : f32
    %276 = vector.broadcast %cst_44 : f32 to vector<1x64xf32>
    %277 = arith.addf %276, %275 : vector<1x64xf32>
    %278 = arith.divf %276, %277 : vector<1x64xf32>
    %279 = vector.extract_strided_slice %273 {offsets = [0, 32], sizes = [1, 16], strides = [1, 1]} : vector<1x64xf32> to vector<1x16xf32>
    %280 = math.tanh %279 : vector<1x16xf32>
    %281 = vector.extract_strided_slice %278 {offsets = [0, 16], sizes = [1, 16], strides = [1, 1]} : vector<1x64xf32> to vector<1x16xf32>
    %282 = arith.mulf %281, %267 : vector<1x16xf32>
    %283 = vector.extract_strided_slice %278 {offsets = [0, 0], sizes = [1, 16], strides = [1, 1]} : vector<1x64xf32> to vector<1x16xf32>
    %284 = arith.mulf %283, %280 : vector<1x16xf32>
    %285 = arith.addf %282, %284 : vector<1x16xf32>
    %286 = vector.extract_strided_slice %278 {offsets = [0, 48], sizes = [1, 16], strides = [1, 1]} : vector<1x64xf32> to vector<1x16xf32>
    %287 = math.tanh %285 : vector<1x16xf32>
    %288 = arith.mulf %286, %287 : vector<1x16xf32>
    %289 = vector.extract_strided_slice %12 {offsets = [0, 0], sizes = [1, 64], strides = [1, 1]} : vector<8x64xf32> to vector<1x64xf32>
    %cst_45 = arith.constant dense<0.000000e+00> : vector<1x64xf32>
    %290 = tpu.matmul %288, %14, %cst_45 {dimension_numbers = #tpu.dot_dimension_numbers<[1], [0], [0], [1], [0, 0, 1, 1], [], []>} : vector<1x16xf32>, vector<16x64xf32>, vector<1x64xf32> -> vector<1x64xf32>
    %291 = arith.addf %289, %290 : vector<1x64xf32>
    %292 = arith.negf %291 : vector<1x64xf32>
    %293 = math.exp %292 : vector<1x64xf32>
    %cst_46 = arith.constant 1.000000e+00 : f32
    %294 = vector.broadcast %cst_46 : f32 to vector<1x64xf32>
    %295 = arith.addf %294, %293 : vector<1x64xf32>
    %296 = arith.divf %294, %295 : vector<1x64xf32>
    %297 = vector.extract_strided_slice %291 {offsets = [0, 32], sizes = [1, 16], strides = [1, 1]} : vector<1x64xf32> to vector<1x16xf32>
    %298 = math.tanh %297 : vector<1x16xf32>
    %299 = vector.extract_strided_slice %296 {offsets = [0, 16], sizes = [1, 16], strides = [1, 1]} : vector<1x64xf32> to vector<1x16xf32>
    %300 = arith.mulf %299, %285 : vector<1x16xf32>
    %301 = vector.extract_strided_slice %296 {offsets = [0, 0], sizes = [1, 16], strides = [1, 1]} : vector<1x64xf32> to vector<1x16xf32>
    %302 = arith.mulf %301, %298 : vector<1x16xf32>
    %303 = arith.addf %300, %302 : vector<1x16xf32>
    %304 = vector.extract_strided_slice %296 {offsets = [0, 48], sizes = [1, 16], strides = [1, 1]} : vector<1x64xf32> to vector<1x16xf32>
    %305 = math.tanh %303 : vector<1x16xf32>
    %306 = arith.mulf %304, %305 : vector<1x16xf32>
    %307 = tpu.concatenate %34, %52, %70, %88, %106, %124, %142, %160 in 0 : vector<1x16xf32>, vector<1x16xf32>, vector<1x16xf32>, vector<1x16xf32>, vector<1x16xf32>, vector<1x16xf32>, vector<1x16xf32>, vector<1x16xf32> -> vector<8x16xf32>
    %308 = tpu.concatenate %306, %288, %270, %252, %234, %216, %198, %180 in 0 : vector<1x16xf32>, vector<1x16xf32>, vector<1x16xf32>, vector<1x16xf32>, vector<1x16xf32>, vector<1x16xf32>, vector<1x16xf32>, vector<1x16xf32> -> vector<8x16xf32>
    %309 = tpu.concatenate %307, %308 in 1 : vector<8x16xf32>, vector<8x16xf32> -> vector<8x32xf32>
    %c0_47 = arith.constant 0 : index
    %c0_48 = arith.constant 0 : index
    %310 = vector.load %arg6[%c0_47, %c0_48] : memref<32x128xf32, #tpu.memory_space<vmem>>, vector<32x128xf32>
    %cst_49 = arith.constant dense<0.000000e+00> : vector<8x128xf32>
    %311 = tpu.matmul %309, %310, %cst_49 {dimension_numbers = #tpu.dot_dimension_numbers<[1], [0], [0], [1], [0, 0, 1, 1], [], []>} : vector<8x32xf32>, vector<32x128xf32>, vector<8x128xf32> -> vector<8x128xf32>
    %c0_50 = arith.constant 0 : index
    %c0_51 = arith.constant 0 : index
    %312 = vector.load %arg8[%c0_50, %c0_51] : memref<1x128xf32, #tpu.memory_space<vmem>>, vector<1x128xf32>
    %313 = vector.broadcast %312 : vector<1x128xf32> to vector<8x128xf32>
    %314 = arith.addf %311, %313 : vector<8x128xf32>
    %315 = vector.extract_strided_slice %314 {offsets = [0, 0], sizes = [8, 64], strides = [1, 1]} : vector<8x128xf32> to vector<8x64xf32>
    %316 = vector.extract_strided_slice %314 {offsets = [0, 64], sizes = [8, 64], strides = [1, 1]} : vector<8x128xf32> to vector<8x64xf32>
    %c0_52 = arith.constant 0 : index
    %c0_53 = arith.constant 0 : index
    %317 = vector.load %arg7[%c0_52, %c0_53] : memref<32x64xf32, #tpu.memory_space<vmem>>, vector<16x64xf32>
    %c16_54 = arith.constant 16 : index
    %c0_55 = arith.constant 0 : index
    %318 = vector.load %arg7[%c16_54, %c0_55] : memref<32x64xf32, #tpu.memory_space<vmem>>, vector<16x64xf32>
    %c2 = arith.constant 2 : index
    %c0_56 = arith.constant 0 : index
    %319 = vector.load %arg1[%c2, %c0_56] : memref<4x16xf32, #tpu.memory_space<vmem>>, vector<1x16xf32>
    %c2_57 = arith.constant 2 : index
    %c0_58 = arith.constant 0 : index
    %320 = vector.load %arg2[%c2_57, %c0_58] : memref<4x16xf32, #tpu.memory_space<vmem>>, vector<1x16xf32>
    %321 = vector.extract_strided_slice %315 {offsets = [0, 0], sizes = [1, 64], strides = [1, 1]} : vector<8x64xf32> to vector<1x64xf32>
    %cst_59 = arith.constant dense<0.000000e+00> : vector<1x64xf32>
    %322 = tpu.matmul %319, %317, %cst_59 {dimension_numbers = #tpu.dot_dimension_numbers<[1], [0], [0], [1], [0, 0, 1, 1], [], []>} : vector<1x16xf32>, vector<16x64xf32>, vector<1x64xf32> -> vector<1x64xf32>
    %323 = arith.addf %321, %322 : vector<1x64xf32>
    %324 = arith.negf %323 : vector<1x64xf32>
    %325 = math.exp %324 : vector<1x64xf32>
    %cst_60 = arith.constant 1.000000e+00 : f32
    %326 = vector.broadcast %cst_60 : f32 to vector<1x64xf32>
    %327 = arith.addf %326, %325 : vector<1x64xf32>
    %328 = arith.divf %326, %327 : vector<1x64xf32>
    %329 = vector.extract_strided_slice %323 {offsets = [0, 32], sizes = [1, 16], strides = [1, 1]} : vector<1x64xf32> to vector<1x16xf32>
    %330 = math.tanh %329 : vector<1x16xf32>
    %331 = vector.extract_strided_slice %328 {offsets = [0, 16], sizes = [1, 16], strides = [1, 1]} : vector<1x64xf32> to vector<1x16xf32>
    %332 = arith.mulf %331, %320 : vector<1x16xf32>
    %333 = vector.extract_strided_slice %328 {offsets = [0, 0], sizes = [1, 16], strides = [1, 1]} : vector<1x64xf32> to vector<1x16xf32>
    %334 = arith.mulf %333, %330 : vector<1x16xf32>
    %335 = arith.addf %332, %334 : vector<1x16xf32>
    %336 = vector.extract_strided_slice %328 {offsets = [0, 48], sizes = [1, 16], strides = [1, 1]} : vector<1x64xf32> to vector<1x16xf32>
    %337 = math.tanh %335 : vector<1x16xf32>
    %338 = arith.mulf %336, %337 : vector<1x16xf32>
    %339 = vector.extract_strided_slice %315 {offsets = [1, 0], sizes = [1, 64], strides = [1, 1]} : vector<8x64xf32> to vector<1x64xf32>
    %cst_61 = arith.constant dense<0.000000e+00> : vector<1x64xf32>
    %340 = tpu.matmul %338, %317, %cst_61 {dimension_numbers = #tpu.dot_dimension_numbers<[1], [0], [0], [1], [0, 0, 1, 1], [], []>} : vector<1x16xf32>, vector<16x64xf32>, vector<1x64xf32> -> vector<1x64xf32>
    %341 = arith.addf %339, %340 : vector<1x64xf32>
    %342 = arith.negf %341 : vector<1x64xf32>
    %343 = math.exp %342 : vector<1x64xf32>
    %cst_62 = arith.constant 1.000000e+00 : f32
    %344 = vector.broadcast %cst_62 : f32 to vector<1x64xf32>
    %345 = arith.addf %344, %343 : vector<1x64xf32>
    %346 = arith.divf %344, %345 : vector<1x64xf32>
    %347 = vector.extract_strided_slice %341 {offsets = [0, 32], sizes = [1, 16], strides = [1, 1]} : vector<1x64xf32> to vector<1x16xf32>
    %348 = math.tanh %347 : vector<1x16xf32>
    %349 = vector.extract_strided_slice %346 {offsets = [0, 16], sizes = [1, 16], strides = [1, 1]} : vector<1x64xf32> to vector<1x16xf32>
    %350 = arith.mulf %349, %335 : vector<1x16xf32>
    %351 = vector.extract_strided_slice %346 {offsets = [0, 0], sizes = [1, 16], strides = [1, 1]} : vector<1x64xf32> to vector<1x16xf32>
    %352 = arith.mulf %351, %348 : vector<1x16xf32>
    %353 = arith.addf %350, %352 : vector<1x16xf32>
    %354 = vector.extract_strided_slice %346 {offsets = [0, 48], sizes = [1, 16], strides = [1, 1]} : vector<1x64xf32> to vector<1x16xf32>
    %355 = math.tanh %353 : vector<1x16xf32>
    %356 = arith.mulf %354, %355 : vector<1x16xf32>
    %357 = vector.extract_strided_slice %315 {offsets = [2, 0], sizes = [1, 64], strides = [1, 1]} : vector<8x64xf32> to vector<1x64xf32>
    %cst_63 = arith.constant dense<0.000000e+00> : vector<1x64xf32>
    %358 = tpu.matmul %356, %317, %cst_63 {dimension_numbers = #tpu.dot_dimension_numbers<[1], [0], [0], [1], [0, 0, 1, 1], [], []>} : vector<1x16xf32>, vector<16x64xf32>, vector<1x64xf32> -> vector<1x64xf32>
    %359 = arith.addf %357, %358 : vector<1x64xf32>
    %360 = arith.negf %359 : vector<1x64xf32>
    %361 = math.exp %360 : vector<1x64xf32>
    %cst_64 = arith.constant 1.000000e+00 : f32
    %362 = vector.broadcast %cst_64 : f32 to vector<1x64xf32>
    %363 = arith.addf %362, %361 : vector<1x64xf32>
    %364 = arith.divf %362, %363 : vector<1x64xf32>
    %365 = vector.extract_strided_slice %359 {offsets = [0, 32], sizes = [1, 16], strides = [1, 1]} : vector<1x64xf32> to vector<1x16xf32>
    %366 = math.tanh %365 : vector<1x16xf32>
    %367 = vector.extract_strided_slice %364 {offsets = [0, 16], sizes = [1, 16], strides = [1, 1]} : vector<1x64xf32> to vector<1x16xf32>
    %368 = arith.mulf %367, %353 : vector<1x16xf32>
    %369 = vector.extract_strided_slice %364 {offsets = [0, 0], sizes = [1, 16], strides = [1, 1]} : vector<1x64xf32> to vector<1x16xf32>
    %370 = arith.mulf %369, %366 : vector<1x16xf32>
    %371 = arith.addf %368, %370 : vector<1x16xf32>
    %372 = vector.extract_strided_slice %364 {offsets = [0, 48], sizes = [1, 16], strides = [1, 1]} : vector<1x64xf32> to vector<1x16xf32>
    %373 = math.tanh %371 : vector<1x16xf32>
    %374 = arith.mulf %372, %373 : vector<1x16xf32>
    %375 = vector.extract_strided_slice %315 {offsets = [3, 0], sizes = [1, 64], strides = [1, 1]} : vector<8x64xf32> to vector<1x64xf32>
    %cst_65 = arith.constant dense<0.000000e+00> : vector<1x64xf32>
    %376 = tpu.matmul %374, %317, %cst_65 {dimension_numbers = #tpu.dot_dimension_numbers<[1], [0], [0], [1], [0, 0, 1, 1], [], []>} : vector<1x16xf32>, vector<16x64xf32>, vector<1x64xf32> -> vector<1x64xf32>
    %377 = arith.addf %375, %376 : vector<1x64xf32>
    %378 = arith.negf %377 : vector<1x64xf32>
    %379 = math.exp %378 : vector<1x64xf32>
    %cst_66 = arith.constant 1.000000e+00 : f32
    %380 = vector.broadcast %cst_66 : f32 to vector<1x64xf32>
    %381 = arith.addf %380, %379 : vector<1x64xf32>
    %382 = arith.divf %380, %381 : vector<1x64xf32>
    %383 = vector.extract_strided_slice %377 {offsets = [0, 32], sizes = [1, 16], strides = [1, 1]} : vector<1x64xf32> to vector<1x16xf32>
    %384 = math.tanh %383 : vector<1x16xf32>
    %385 = vector.extract_strided_slice %382 {offsets = [0, 16], sizes = [1, 16], strides = [1, 1]} : vector<1x64xf32> to vector<1x16xf32>
    %386 = arith.mulf %385, %371 : vector<1x16xf32>
    %387 = vector.extract_strided_slice %382 {offsets = [0, 0], sizes = [1, 16], strides = [1, 1]} : vector<1x64xf32> to vector<1x16xf32>
    %388 = arith.mulf %387, %384 : vector<1x16xf32>
    %389 = arith.addf %386, %388 : vector<1x16xf32>
    %390 = vector.extract_strided_slice %382 {offsets = [0, 48], sizes = [1, 16], strides = [1, 1]} : vector<1x64xf32> to vector<1x16xf32>
    %391 = math.tanh %389 : vector<1x16xf32>
    %392 = arith.mulf %390, %391 : vector<1x16xf32>
    %393 = vector.extract_strided_slice %315 {offsets = [4, 0], sizes = [1, 64], strides = [1, 1]} : vector<8x64xf32> to vector<1x64xf32>
    %cst_67 = arith.constant dense<0.000000e+00> : vector<1x64xf32>
    %394 = tpu.matmul %392, %317, %cst_67 {dimension_numbers = #tpu.dot_dimension_numbers<[1], [0], [0], [1], [0, 0, 1, 1], [], []>} : vector<1x16xf32>, vector<16x64xf32>, vector<1x64xf32> -> vector<1x64xf32>
    %395 = arith.addf %393, %394 : vector<1x64xf32>
    %396 = arith.negf %395 : vector<1x64xf32>
    %397 = math.exp %396 : vector<1x64xf32>
    %cst_68 = arith.constant 1.000000e+00 : f32
    %398 = vector.broadcast %cst_68 : f32 to vector<1x64xf32>
    %399 = arith.addf %398, %397 : vector<1x64xf32>
    %400 = arith.divf %398, %399 : vector<1x64xf32>
    %401 = vector.extract_strided_slice %395 {offsets = [0, 32], sizes = [1, 16], strides = [1, 1]} : vector<1x64xf32> to vector<1x16xf32>
    %402 = math.tanh %401 : vector<1x16xf32>
    %403 = vector.extract_strided_slice %400 {offsets = [0, 16], sizes = [1, 16], strides = [1, 1]} : vector<1x64xf32> to vector<1x16xf32>
    %404 = arith.mulf %403, %389 : vector<1x16xf32>
    %405 = vector.extract_strided_slice %400 {offsets = [0, 0], sizes = [1, 16], strides = [1, 1]} : vector<1x64xf32> to vector<1x16xf32>
    %406 = arith.mulf %405, %402 : vector<1x16xf32>
    %407 = arith.addf %404, %406 : vector<1x16xf32>
    %408 = vector.extract_strided_slice %400 {offsets = [0, 48], sizes = [1, 16], strides = [1, 1]} : vector<1x64xf32> to vector<1x16xf32>
    %409 = math.tanh %407 : vector<1x16xf32>
    %410 = arith.mulf %408, %409 : vector<1x16xf32>
    %411 = vector.extract_strided_slice %315 {offsets = [5, 0], sizes = [1, 64], strides = [1, 1]} : vector<8x64xf32> to vector<1x64xf32>
    %cst_69 = arith.constant dense<0.000000e+00> : vector<1x64xf32>
    %412 = tpu.matmul %410, %317, %cst_69 {dimension_numbers = #tpu.dot_dimension_numbers<[1], [0], [0], [1], [0, 0, 1, 1], [], []>} : vector<1x16xf32>, vector<16x64xf32>, vector<1x64xf32> -> vector<1x64xf32>
    %413 = arith.addf %411, %412 : vector<1x64xf32>
    %414 = arith.negf %413 : vector<1x64xf32>
    %415 = math.exp %414 : vector<1x64xf32>
    %cst_70 = arith.constant 1.000000e+00 : f32
    %416 = vector.broadcast %cst_70 : f32 to vector<1x64xf32>
    %417 = arith.addf %416, %415 : vector<1x64xf32>
    %418 = arith.divf %416, %417 : vector<1x64xf32>
    %419 = vector.extract_strided_slice %413 {offsets = [0, 32], sizes = [1, 16], strides = [1, 1]} : vector<1x64xf32> to vector<1x16xf32>
    %420 = math.tanh %419 : vector<1x16xf32>
    %421 = vector.extract_strided_slice %418 {offsets = [0, 16], sizes = [1, 16], strides = [1, 1]} : vector<1x64xf32> to vector<1x16xf32>
    %422 = arith.mulf %421, %407 : vector<1x16xf32>
    %423 = vector.extract_strided_slice %418 {offsets = [0, 0], sizes = [1, 16], strides = [1, 1]} : vector<1x64xf32> to vector<1x16xf32>
    %424 = arith.mulf %423, %420 : vector<1x16xf32>
    %425 = arith.addf %422, %424 : vector<1x16xf32>
    %426 = vector.extract_strided_slice %418 {offsets = [0, 48], sizes = [1, 16], strides = [1, 1]} : vector<1x64xf32> to vector<1x16xf32>
    %427 = math.tanh %425 : vector<1x16xf32>
    %428 = arith.mulf %426, %427 : vector<1x16xf32>
    %429 = vector.extract_strided_slice %315 {offsets = [6, 0], sizes = [1, 64], strides = [1, 1]} : vector<8x64xf32> to vector<1x64xf32>
    %cst_71 = arith.constant dense<0.000000e+00> : vector<1x64xf32>
    %430 = tpu.matmul %428, %317, %cst_71 {dimension_numbers = #tpu.dot_dimension_numbers<[1], [0], [0], [1], [0, 0, 1, 1], [], []>} : vector<1x16xf32>, vector<16x64xf32>, vector<1x64xf32> -> vector<1x64xf32>
    %431 = arith.addf %429, %430 : vector<1x64xf32>
    %432 = arith.negf %431 : vector<1x64xf32>
    %433 = math.exp %432 : vector<1x64xf32>
    %cst_72 = arith.constant 1.000000e+00 : f32
    %434 = vector.broadcast %cst_72 : f32 to vector<1x64xf32>
    %435 = arith.addf %434, %433 : vector<1x64xf32>
    %436 = arith.divf %434, %435 : vector<1x64xf32>
    %437 = vector.extract_strided_slice %431 {offsets = [0, 32], sizes = [1, 16], strides = [1, 1]} : vector<1x64xf32> to vector<1x16xf32>
    %438 = math.tanh %437 : vector<1x16xf32>
    %439 = vector.extract_strided_slice %436 {offsets = [0, 16], sizes = [1, 16], strides = [1, 1]} : vector<1x64xf32> to vector<1x16xf32>
    %440 = arith.mulf %439, %425 : vector<1x16xf32>
    %441 = vector.extract_strided_slice %436 {offsets = [0, 0], sizes = [1, 16], strides = [1, 1]} : vector<1x64xf32> to vector<1x16xf32>
    %442 = arith.mulf %441, %438 : vector<1x16xf32>
    %443 = arith.addf %440, %442 : vector<1x16xf32>
    %444 = vector.extract_strided_slice %436 {offsets = [0, 48], sizes = [1, 16], strides = [1, 1]} : vector<1x64xf32> to vector<1x16xf32>
    %445 = math.tanh %443 : vector<1x16xf32>
    %446 = arith.mulf %444, %445 : vector<1x16xf32>
    %447 = vector.extract_strided_slice %315 {offsets = [7, 0], sizes = [1, 64], strides = [1, 1]} : vector<8x64xf32> to vector<1x64xf32>
    %cst_73 = arith.constant dense<0.000000e+00> : vector<1x64xf32>
    %448 = tpu.matmul %446, %317, %cst_73 {dimension_numbers = #tpu.dot_dimension_numbers<[1], [0], [0], [1], [0, 0, 1, 1], [], []>} : vector<1x16xf32>, vector<16x64xf32>, vector<1x64xf32> -> vector<1x64xf32>
    %449 = arith.addf %447, %448 : vector<1x64xf32>
    %450 = arith.negf %449 : vector<1x64xf32>
    %451 = math.exp %450 : vector<1x64xf32>
    %cst_74 = arith.constant 1.000000e+00 : f32
    %452 = vector.broadcast %cst_74 : f32 to vector<1x64xf32>
    %453 = arith.addf %452, %451 : vector<1x64xf32>
    %454 = arith.divf %452, %453 : vector<1x64xf32>
    %455 = vector.extract_strided_slice %449 {offsets = [0, 32], sizes = [1, 16], strides = [1, 1]} : vector<1x64xf32> to vector<1x16xf32>
    %456 = math.tanh %455 : vector<1x16xf32>
    %457 = vector.extract_strided_slice %454 {offsets = [0, 16], sizes = [1, 16], strides = [1, 1]} : vector<1x64xf32> to vector<1x16xf32>
    %458 = arith.mulf %457, %443 : vector<1x16xf32>
    %459 = vector.extract_strided_slice %454 {offsets = [0, 0], sizes = [1, 16], strides = [1, 1]} : vector<1x64xf32> to vector<1x16xf32>
    %460 = arith.mulf %459, %456 : vector<1x16xf32>
    %461 = arith.addf %458, %460 : vector<1x16xf32>
    %462 = vector.extract_strided_slice %454 {offsets = [0, 48], sizes = [1, 16], strides = [1, 1]} : vector<1x64xf32> to vector<1x16xf32>
    %463 = math.tanh %461 : vector<1x16xf32>
    %464 = arith.mulf %462, %463 : vector<1x16xf32>
    %c3 = arith.constant 3 : index
    %c0_75 = arith.constant 0 : index
    %465 = vector.load %arg1[%c3, %c0_75] : memref<4x16xf32, #tpu.memory_space<vmem>>, vector<1x16xf32>
    %c3_76 = arith.constant 3 : index
    %c0_77 = arith.constant 0 : index
    %466 = vector.load %arg2[%c3_76, %c0_77] : memref<4x16xf32, #tpu.memory_space<vmem>>, vector<1x16xf32>
    %467 = vector.extract_strided_slice %316 {offsets = [7, 0], sizes = [1, 64], strides = [1, 1]} : vector<8x64xf32> to vector<1x64xf32>
    %cst_78 = arith.constant dense<0.000000e+00> : vector<1x64xf32>
    %468 = tpu.matmul %465, %318, %cst_78 {dimension_numbers = #tpu.dot_dimension_numbers<[1], [0], [0], [1], [0, 0, 1, 1], [], []>} : vector<1x16xf32>, vector<16x64xf32>, vector<1x64xf32> -> vector<1x64xf32>
    %469 = arith.addf %467, %468 : vector<1x64xf32>
    %470 = arith.negf %469 : vector<1x64xf32>
    %471 = math.exp %470 : vector<1x64xf32>
    %cst_79 = arith.constant 1.000000e+00 : f32
    %472 = vector.broadcast %cst_79 : f32 to vector<1x64xf32>
    %473 = arith.addf %472, %471 : vector<1x64xf32>
    %474 = arith.divf %472, %473 : vector<1x64xf32>
    %475 = vector.extract_strided_slice %469 {offsets = [0, 32], sizes = [1, 16], strides = [1, 1]} : vector<1x64xf32> to vector<1x16xf32>
    %476 = math.tanh %475 : vector<1x16xf32>
    %477 = vector.extract_strided_slice %474 {offsets = [0, 16], sizes = [1, 16], strides = [1, 1]} : vector<1x64xf32> to vector<1x16xf32>
    %478 = arith.mulf %477, %466 : vector<1x16xf32>
    %479 = vector.extract_strided_slice %474 {offsets = [0, 0], sizes = [1, 16], strides = [1, 1]} : vector<1x64xf32> to vector<1x16xf32>
    %480 = arith.mulf %479, %476 : vector<1x16xf32>
    %481 = arith.addf %478, %480 : vector<1x16xf32>
    %482 = vector.extract_strided_slice %474 {offsets = [0, 48], sizes = [1, 16], strides = [1, 1]} : vector<1x64xf32> to vector<1x16xf32>
    %483 = math.tanh %481 : vector<1x16xf32>
    %484 = arith.mulf %482, %483 : vector<1x16xf32>
    %485 = vector.extract_strided_slice %316 {offsets = [6, 0], sizes = [1, 64], strides = [1, 1]} : vector<8x64xf32> to vector<1x64xf32>
    %cst_80 = arith.constant dense<0.000000e+00> : vector<1x64xf32>
    %486 = tpu.matmul %484, %318, %cst_80 {dimension_numbers = #tpu.dot_dimension_numbers<[1], [0], [0], [1], [0, 0, 1, 1], [], []>} : vector<1x16xf32>, vector<16x64xf32>, vector<1x64xf32> -> vector<1x64xf32>
    %487 = arith.addf %485, %486 : vector<1x64xf32>
    %488 = arith.negf %487 : vector<1x64xf32>
    %489 = math.exp %488 : vector<1x64xf32>
    %cst_81 = arith.constant 1.000000e+00 : f32
    %490 = vector.broadcast %cst_81 : f32 to vector<1x64xf32>
    %491 = arith.addf %490, %489 : vector<1x64xf32>
    %492 = arith.divf %490, %491 : vector<1x64xf32>
    %493 = vector.extract_strided_slice %487 {offsets = [0, 32], sizes = [1, 16], strides = [1, 1]} : vector<1x64xf32> to vector<1x16xf32>
    %494 = math.tanh %493 : vector<1x16xf32>
    %495 = vector.extract_strided_slice %492 {offsets = [0, 16], sizes = [1, 16], strides = [1, 1]} : vector<1x64xf32> to vector<1x16xf32>
    %496 = arith.mulf %495, %481 : vector<1x16xf32>
    %497 = vector.extract_strided_slice %492 {offsets = [0, 0], sizes = [1, 16], strides = [1, 1]} : vector<1x64xf32> to vector<1x16xf32>
    %498 = arith.mulf %497, %494 : vector<1x16xf32>
    %499 = arith.addf %496, %498 : vector<1x16xf32>
    %500 = vector.extract_strided_slice %492 {offsets = [0, 48], sizes = [1, 16], strides = [1, 1]} : vector<1x64xf32> to vector<1x16xf32>
    %501 = math.tanh %499 : vector<1x16xf32>
    %502 = arith.mulf %500, %501 : vector<1x16xf32>
    %503 = vector.extract_strided_slice %316 {offsets = [5, 0], sizes = [1, 64], strides = [1, 1]} : vector<8x64xf32> to vector<1x64xf32>
    %cst_82 = arith.constant dense<0.000000e+00> : vector<1x64xf32>
    %504 = tpu.matmul %502, %318, %cst_82 {dimension_numbers = #tpu.dot_dimension_numbers<[1], [0], [0], [1], [0, 0, 1, 1], [], []>} : vector<1x16xf32>, vector<16x64xf32>, vector<1x64xf32> -> vector<1x64xf32>
    %505 = arith.addf %503, %504 : vector<1x64xf32>
    %506 = arith.negf %505 : vector<1x64xf32>
    %507 = math.exp %506 : vector<1x64xf32>
    %cst_83 = arith.constant 1.000000e+00 : f32
    %508 = vector.broadcast %cst_83 : f32 to vector<1x64xf32>
    %509 = arith.addf %508, %507 : vector<1x64xf32>
    %510 = arith.divf %508, %509 : vector<1x64xf32>
    %511 = vector.extract_strided_slice %505 {offsets = [0, 32], sizes = [1, 16], strides = [1, 1]} : vector<1x64xf32> to vector<1x16xf32>
    %512 = math.tanh %511 : vector<1x16xf32>
    %513 = vector.extract_strided_slice %510 {offsets = [0, 16], sizes = [1, 16], strides = [1, 1]} : vector<1x64xf32> to vector<1x16xf32>
    %514 = arith.mulf %513, %499 : vector<1x16xf32>
    %515 = vector.extract_strided_slice %510 {offsets = [0, 0], sizes = [1, 16], strides = [1, 1]} : vector<1x64xf32> to vector<1x16xf32>
    %516 = arith.mulf %515, %512 : vector<1x16xf32>
    %517 = arith.addf %514, %516 : vector<1x16xf32>
    %518 = vector.extract_strided_slice %510 {offsets = [0, 48], sizes = [1, 16], strides = [1, 1]} : vector<1x64xf32> to vector<1x16xf32>
    %519 = math.tanh %517 : vector<1x16xf32>
    %520 = arith.mulf %518, %519 : vector<1x16xf32>
    %521 = vector.extract_strided_slice %316 {offsets = [4, 0], sizes = [1, 64], strides = [1, 1]} : vector<8x64xf32> to vector<1x64xf32>
    %cst_84 = arith.constant dense<0.000000e+00> : vector<1x64xf32>
    %522 = tpu.matmul %520, %318, %cst_84 {dimension_numbers = #tpu.dot_dimension_numbers<[1], [0], [0], [1], [0, 0, 1, 1], [], []>} : vector<1x16xf32>, vector<16x64xf32>, vector<1x64xf32> -> vector<1x64xf32>
    %523 = arith.addf %521, %522 : vector<1x64xf32>
    %524 = arith.negf %523 : vector<1x64xf32>
    %525 = math.exp %524 : vector<1x64xf32>
    %cst_85 = arith.constant 1.000000e+00 : f32
    %526 = vector.broadcast %cst_85 : f32 to vector<1x64xf32>
    %527 = arith.addf %526, %525 : vector<1x64xf32>
    %528 = arith.divf %526, %527 : vector<1x64xf32>
    %529 = vector.extract_strided_slice %523 {offsets = [0, 32], sizes = [1, 16], strides = [1, 1]} : vector<1x64xf32> to vector<1x16xf32>
    %530 = math.tanh %529 : vector<1x16xf32>
    %531 = vector.extract_strided_slice %528 {offsets = [0, 16], sizes = [1, 16], strides = [1, 1]} : vector<1x64xf32> to vector<1x16xf32>
    %532 = arith.mulf %531, %517 : vector<1x16xf32>
    %533 = vector.extract_strided_slice %528 {offsets = [0, 0], sizes = [1, 16], strides = [1, 1]} : vector<1x64xf32> to vector<1x16xf32>
    %534 = arith.mulf %533, %530 : vector<1x16xf32>
    %535 = arith.addf %532, %534 : vector<1x16xf32>
    %536 = vector.extract_strided_slice %528 {offsets = [0, 48], sizes = [1, 16], strides = [1, 1]} : vector<1x64xf32> to vector<1x16xf32>
    %537 = math.tanh %535 : vector<1x16xf32>
    %538 = arith.mulf %536, %537 : vector<1x16xf32>
    %539 = vector.extract_strided_slice %316 {offsets = [3, 0], sizes = [1, 64], strides = [1, 1]} : vector<8x64xf32> to vector<1x64xf32>
    %cst_86 = arith.constant dense<0.000000e+00> : vector<1x64xf32>
    %540 = tpu.matmul %538, %318, %cst_86 {dimension_numbers = #tpu.dot_dimension_numbers<[1], [0], [0], [1], [0, 0, 1, 1], [], []>} : vector<1x16xf32>, vector<16x64xf32>, vector<1x64xf32> -> vector<1x64xf32>
    %541 = arith.addf %539, %540 : vector<1x64xf32>
    %542 = arith.negf %541 : vector<1x64xf32>
    %543 = math.exp %542 : vector<1x64xf32>
    %cst_87 = arith.constant 1.000000e+00 : f32
    %544 = vector.broadcast %cst_87 : f32 to vector<1x64xf32>
    %545 = arith.addf %544, %543 : vector<1x64xf32>
    %546 = arith.divf %544, %545 : vector<1x64xf32>
    %547 = vector.extract_strided_slice %541 {offsets = [0, 32], sizes = [1, 16], strides = [1, 1]} : vector<1x64xf32> to vector<1x16xf32>
    %548 = math.tanh %547 : vector<1x16xf32>
    %549 = vector.extract_strided_slice %546 {offsets = [0, 16], sizes = [1, 16], strides = [1, 1]} : vector<1x64xf32> to vector<1x16xf32>
    %550 = arith.mulf %549, %535 : vector<1x16xf32>
    %551 = vector.extract_strided_slice %546 {offsets = [0, 0], sizes = [1, 16], strides = [1, 1]} : vector<1x64xf32> to vector<1x16xf32>
    %552 = arith.mulf %551, %548 : vector<1x16xf32>
    %553 = arith.addf %550, %552 : vector<1x16xf32>
    %554 = vector.extract_strided_slice %546 {offsets = [0, 48], sizes = [1, 16], strides = [1, 1]} : vector<1x64xf32> to vector<1x16xf32>
    %555 = math.tanh %553 : vector<1x16xf32>
    %556 = arith.mulf %554, %555 : vector<1x16xf32>
    %557 = vector.extract_strided_slice %316 {offsets = [2, 0], sizes = [1, 64], strides = [1, 1]} : vector<8x64xf32> to vector<1x64xf32>
    %cst_88 = arith.constant dense<0.000000e+00> : vector<1x64xf32>
    %558 = tpu.matmul %556, %318, %cst_88 {dimension_numbers = #tpu.dot_dimension_numbers<[1], [0], [0], [1], [0, 0, 1, 1], [], []>} : vector<1x16xf32>, vector<16x64xf32>, vector<1x64xf32> -> vector<1x64xf32>
    %559 = arith.addf %557, %558 : vector<1x64xf32>
    %560 = arith.negf %559 : vector<1x64xf32>
    %561 = math.exp %560 : vector<1x64xf32>
    %cst_89 = arith.constant 1.000000e+00 : f32
    %562 = vector.broadcast %cst_89 : f32 to vector<1x64xf32>
    %563 = arith.addf %562, %561 : vector<1x64xf32>
    %564 = arith.divf %562, %563 : vector<1x64xf32>
    %565 = vector.extract_strided_slice %559 {offsets = [0, 32], sizes = [1, 16], strides = [1, 1]} : vector<1x64xf32> to vector<1x16xf32>
    %566 = math.tanh %565 : vector<1x16xf32>
    %567 = vector.extract_strided_slice %564 {offsets = [0, 16], sizes = [1, 16], strides = [1, 1]} : vector<1x64xf32> to vector<1x16xf32>
    %568 = arith.mulf %567, %553 : vector<1x16xf32>
    %569 = vector.extract_strided_slice %564 {offsets = [0, 0], sizes = [1, 16], strides = [1, 1]} : vector<1x64xf32> to vector<1x16xf32>
    %570 = arith.mulf %569, %566 : vector<1x16xf32>
    %571 = arith.addf %568, %570 : vector<1x16xf32>
    %572 = vector.extract_strided_slice %564 {offsets = [0, 48], sizes = [1, 16], strides = [1, 1]} : vector<1x64xf32> to vector<1x16xf32>
    %573 = math.tanh %571 : vector<1x16xf32>
    %574 = arith.mulf %572, %573 : vector<1x16xf32>
    %575 = vector.extract_strided_slice %316 {offsets = [1, 0], sizes = [1, 64], strides = [1, 1]} : vector<8x64xf32> to vector<1x64xf32>
    %cst_90 = arith.constant dense<0.000000e+00> : vector<1x64xf32>
    %576 = tpu.matmul %574, %318, %cst_90 {dimension_numbers = #tpu.dot_dimension_numbers<[1], [0], [0], [1], [0, 0, 1, 1], [], []>} : vector<1x16xf32>, vector<16x64xf32>, vector<1x64xf32> -> vector<1x64xf32>
    %577 = arith.addf %575, %576 : vector<1x64xf32>
    %578 = arith.negf %577 : vector<1x64xf32>
    %579 = math.exp %578 : vector<1x64xf32>
    %cst_91 = arith.constant 1.000000e+00 : f32
    %580 = vector.broadcast %cst_91 : f32 to vector<1x64xf32>
    %581 = arith.addf %580, %579 : vector<1x64xf32>
    %582 = arith.divf %580, %581 : vector<1x64xf32>
    %583 = vector.extract_strided_slice %577 {offsets = [0, 32], sizes = [1, 16], strides = [1, 1]} : vector<1x64xf32> to vector<1x16xf32>
    %584 = math.tanh %583 : vector<1x16xf32>
    %585 = vector.extract_strided_slice %582 {offsets = [0, 16], sizes = [1, 16], strides = [1, 1]} : vector<1x64xf32> to vector<1x16xf32>
    %586 = arith.mulf %585, %571 : vector<1x16xf32>
    %587 = vector.extract_strided_slice %582 {offsets = [0, 0], sizes = [1, 16], strides = [1, 1]} : vector<1x64xf32> to vector<1x16xf32>
    %588 = arith.mulf %587, %584 : vector<1x16xf32>
    %589 = arith.addf %586, %588 : vector<1x16xf32>
    %590 = vector.extract_strided_slice %582 {offsets = [0, 48], sizes = [1, 16], strides = [1, 1]} : vector<1x64xf32> to vector<1x16xf32>
    %591 = math.tanh %589 : vector<1x16xf32>
    %592 = arith.mulf %590, %591 : vector<1x16xf32>
    %593 = vector.extract_strided_slice %316 {offsets = [0, 0], sizes = [1, 64], strides = [1, 1]} : vector<8x64xf32> to vector<1x64xf32>
    %cst_92 = arith.constant dense<0.000000e+00> : vector<1x64xf32>
    %594 = tpu.matmul %592, %318, %cst_92 {dimension_numbers = #tpu.dot_dimension_numbers<[1], [0], [0], [1], [0, 0, 1, 1], [], []>} : vector<1x16xf32>, vector<16x64xf32>, vector<1x64xf32> -> vector<1x64xf32>
    %595 = arith.addf %593, %594 : vector<1x64xf32>
    %596 = arith.negf %595 : vector<1x64xf32>
    %597 = math.exp %596 : vector<1x64xf32>
    %cst_93 = arith.constant 1.000000e+00 : f32
    %598 = vector.broadcast %cst_93 : f32 to vector<1x64xf32>
    %599 = arith.addf %598, %597 : vector<1x64xf32>
    %600 = arith.divf %598, %599 : vector<1x64xf32>
    %601 = vector.extract_strided_slice %595 {offsets = [0, 32], sizes = [1, 16], strides = [1, 1]} : vector<1x64xf32> to vector<1x16xf32>
    %602 = math.tanh %601 : vector<1x16xf32>
    %603 = vector.extract_strided_slice %600 {offsets = [0, 16], sizes = [1, 16], strides = [1, 1]} : vector<1x64xf32> to vector<1x16xf32>
    %604 = arith.mulf %603, %589 : vector<1x16xf32>
    %605 = vector.extract_strided_slice %600 {offsets = [0, 0], sizes = [1, 16], strides = [1, 1]} : vector<1x64xf32> to vector<1x16xf32>
    %606 = arith.mulf %605, %602 : vector<1x16xf32>
    %607 = arith.addf %604, %606 : vector<1x16xf32>
    %608 = vector.extract_strided_slice %600 {offsets = [0, 48], sizes = [1, 16], strides = [1, 1]} : vector<1x64xf32> to vector<1x16xf32>
    %609 = math.tanh %607 : vector<1x16xf32>
    %610 = arith.mulf %608, %609 : vector<1x16xf32>
    %611 = tpu.concatenate %338, %356, %374, %392, %410, %428, %446, %464 in 0 : vector<1x16xf32>, vector<1x16xf32>, vector<1x16xf32>, vector<1x16xf32>, vector<1x16xf32>, vector<1x16xf32>, vector<1x16xf32>, vector<1x16xf32> -> vector<8x16xf32>
    %612 = tpu.concatenate %610, %592, %574, %556, %538, %520, %502, %484 in 0 : vector<1x16xf32>, vector<1x16xf32>, vector<1x16xf32>, vector<1x16xf32>, vector<1x16xf32>, vector<1x16xf32>, vector<1x16xf32>, vector<1x16xf32> -> vector<8x16xf32>
    %613 = tpu.concatenate %611, %612 in 1 : vector<8x16xf32>, vector<8x16xf32> -> vector<8x32xf32>
    %614 = tpu.concatenate %160, %306, %464, %610 in 0 : vector<1x16xf32>, vector<1x16xf32>, vector<1x16xf32>, vector<1x16xf32> -> vector<4x16xf32>
    %c0_94 = arith.constant 0 : index
    %c0_95 = arith.constant 0 : index
    %615 = vector.load %arg12[%c0_94, %c0_95] : memref<4x16xf32, #tpu.memory_space<vmem>>, vector<4x16xf32>
    tpu.vector_store %arg12[%c0_94, %c0_95], %614 {strides = array<i32>} : memref<4x16xf32, #tpu.memory_space<vmem>>, vector<4x16xf32>,
    %616 = tpu.concatenate %157, %303, %461, %607 in 0 : vector<1x16xf32>, vector<1x16xf32>, vector<1x16xf32>, vector<1x16xf32> -> vector<4x16xf32>
    %c0_96 = arith.constant 0 : index
    %c0_97 = arith.constant 0 : index
    %617 = vector.load %arg13[%c0_96, %c0_97] : memref<4x16xf32, #tpu.memory_space<vmem>>, vector<4x16xf32>
    tpu.vector_store %arg13[%c0_96, %c0_97], %616 {strides = array<i32>} : memref<4x16xf32, #tpu.memory_space<vmem>>, vector<4x16xf32>,
    %c0_98 = arith.constant 0 : index
    %c0_99 = arith.constant 0 : index
    %618 = vector.load %arg9[%c0_98, %c0_99] : memref<32x128xf32, #tpu.memory_space<vmem>>, vector<32x128xf32>
    %cst_100 = arith.constant dense<0.000000e+00> : vector<8x128xf32>
    %619 = tpu.matmul %613, %618, %cst_100 {dimension_numbers = #tpu.dot_dimension_numbers<[1], [0], [0], [1], [0, 0, 1, 1], [], []>} : vector<8x32xf32>, vector<32x128xf32>, vector<8x128xf32> -> vector<8x128xf32>
    %c0_101 = arith.constant 0 : index
    %c0_102 = arith.constant 0 : index
    %620 = vector.load %arg10[%c0_101, %c0_102] : memref<1x128xf32, #tpu.memory_space<vmem>>, vector<1x128xf32>
    %621 = vector.broadcast %620 : vector<1x128xf32> to vector<8x128xf32>
    %622 = arith.addf %619, %621 : vector<8x128xf32>
    %cst_103 = arith.constant dense<0xFF800000> : vector<8xf32>
    %623 = vector.multi_reduction <maximumf>, %622, %cst_103 [1] : vector<8x128xf32> to vector<8xf32>
    %624 = vector.shape_cast %623 : vector<8xf32> to vector<8x1xf32>
    %625 = vector.broadcast %624 : vector<8x1xf32> to vector<8x128xf32>
    %626 = arith.subf %622, %625 : vector<8x128xf32>
    %627 = math.exp %626 : vector<8x128xf32>
    %cst_104 = arith.constant dense<0.000000e+00> : vector<8xf32>
    %628 = vector.multi_reduction <add>, %627, %cst_104 [1] : vector<8x128xf32> to vector<8xf32>
    %629 = vector.shape_cast %628 : vector<8xf32> to vector<8x1xf32>
    %630 = tpu.reciprocal %629 {approx = true} : vector<8x1xf32> -> vector<8x1xf32>
    %631 = arith.mulf %629, %630 : vector<8x1xf32>
    %cst_105 = arith.constant 2.000000e+00 : f32
    %632 = vector.broadcast %cst_105 : f32 to vector<8x1xf32>
    %633 = arith.subf %632, %631 : vector<8x1xf32>
    %634 = arith.mulf %630, %633 : vector<8x1xf32>
    %635 = vector.broadcast %634 : vector<8x1xf32> to vector<8x128xf32>
    %636 = arith.mulf %627, %635 : vector<8x128xf32>
    %c0_106 = arith.constant 0 : index
    %c0_107 = arith.constant 0 : index
    %637 = vector.load %arg11[%c0_106, %c0_107] : memref<8x128xf32, #tpu.memory_space<vmem>>, vector<8x128xf32>
    tpu.vector_store %arg11[%c0_106, %c0_107], %636 {strides = array<i32>} : memref<8x128xf32, #tpu.memory_space<vmem>>, vector<8x128xf32>,
    return
  }
}

</mosaic_0001>

<llo_original>
// kernel: tpu_custom_call.1
$region0: #{tpu_custom_call.1}
  #allocation0 [shape = 'u32[]', space=smem, size = 0x4, offset = 0x4, fixed_abs, tag = 'smem constant byte address 0x4 - core index']
  #allocation1 [shape = 'u32[144,128]{1,0:T(1,128)}', space=vmem, size = 0x12000, scoped, tag = 'internal scratch']
  %s0 = inlined_call_operand.vmem [shape: s32[8,1], index: 0, kind: input, shape index: {}]
  %s1 = inlined_call_operand.hbm [shape: f32[4,16], index: 1, kind: input, shape index: {}]
  %s2 = inlined_call_operand.hbm [shape: f32[4,16], index: 2, kind: input, shape index: {}]
  %s3 = inlined_call_operand.hbm [shape: f32[64,128], index: 3, kind: input, shape index: {}]
  %s4 = inlined_call_operand.hbm [shape: f32[32,64], index: 4, kind: input, shape index: {}]
  %s5 = inlined_call_operand.vmem [shape: f32[1,128], index: 5, kind: input, shape index: {}]
  %s6 = inlined_call_operand.hbm [shape: f32[32,128], index: 6, kind: input, shape index: {}]
  %s7 = inlined_call_operand.vmem [shape: f32[32,64], index: 7, kind: input, shape index: {}]
  %s8 = inlined_call_operand.vmem [shape: f32[1,128], index: 8, kind: input, shape index: {}]
  %s9 = inlined_call_operand.hbm [shape: f32[32,128], index: 9, kind: input, shape index: {}]
  %s10 = inlined_call_operand.vmem [shape: f32[1,128], index: 10, kind: input, shape index: {}]
  %s11 = inlined_call_operand.hbm [shape: f32[8,128], index: 11, kind: output, shape index: {0}]
  %s12 = inlined_call_operand.hbm [shape: f32[4,16], index: 12, kind: output, shape index: {1}]
  %s13 = inlined_call_operand.hbm [shape: f32[4,16], index: 13, kind: output, shape index: {2}]
  %14 = xla_tuple %s11, %s12, %s13
  %s15 = sld [smem:[#allocation0]]
  $region94: #{tpu_custom_call.1} parent=0
    _
  %s17 = ssub.s32 1, %s15
  %s18 = scalar_select 0, %s17, %s15
  $region1: #{tpu_custom_call.1} parent=0
    #allocation2 [shape = 'u8[2048]{0}', space=vmem, size = 0x800, scoped, tag = 'input window, operand 1, single buffered']
    #allocation3 [shape = 's32[1]{0}', space=sflag, size = 0x4, scoped, tag = 'scoped memory for tpu_custom_call.1']
    #allocation4 [shape = 's32[1]{0}', space=sflag, size = 0x4, scoped, tag = 'scoped memory for tpu_custom_call.1']
    #allocation5 [shape = 'u8[2048]{0}', space=vmem, size = 0x800, scoped, tag = 'input window, operand 2, single buffered']
    #allocation6 [shape = 's32[1]{0}', space=sflag, size = 0x4, scoped, tag = 'scoped memory for tpu_custom_call.1']
    #allocation7 [shape = 'u8[32768]{0}', space=vmem, size = 0x8000, scoped, tag = 'input window, operand 3, single buffered']
    #allocation8 [shape = 'u8[16384]{0}', space=vmem, size = 0x4000, scoped, tag = 'input window, operand 4, single buffered']
    #allocation9 [shape = 's32[1]{0}', space=sflag, size = 0x4, scoped, tag = 'scoped memory for tpu_custom_call.1']
    #allocation10 [shape = 'u8[16384]{0}', space=vmem, size = 0x4000, scoped, tag = 'input window, operand 6, single buffered']
    #allocation11 [shape = 'u8[16384]{0}', space=vmem, size = 0x4000, scoped, tag = 'input window, operand 9, single buffered']
    #allocation12 [shape = 's32[1]{0}', space=sflag, size = 0x4, scoped, tag = 'scoped memory for tpu_custom_call.1']
    #allocation13 [shape = 'u8[4096]{0}', space=vmem, size = 0x1000, scoped, tag = 'output window, operand 0, single buffered']
    #allocation14 [shape = 'u8[2048]{0}', space=vmem, size = 0x800, scoped, tag = 'output window, operand 1, single buffered']
    #allocation15 [shape = 's32[1]{0}', space=sflag, size = 0x4, scoped, tag = 'scoped memory for tpu_custom_call.1']
    #allocation16 [shape = 'u8[2048]{0}', space=vmem, size = 0x800, scoped, tag = 'output window, operand 2, single buffered']
    %19 = vsyncpa [#allocation3], 0
    %20 = vsyncpa [#allocation6], 0
    %21 = vsyncpa [#allocation9], 0
    %22 = vsyncpa [#allocation12], 0
    %23 = vsyncpa [#allocation4], 0
    %24 = vsyncpa [#allocation15], 0
    // Predicated region
    $region2: #{tpu_custom_call.1} parent=1 // pred_check
      _
    $region3: #{tpu_custom_call.1} parent=1 // pred_check_branch
      %26 = sbr.rel (0) target = $region5
    $region4: #{tpu_custom_call.1} parent=1 // pred_region
      _
    $region5: #{tpu_custom_call.1} parent=1 // pred_fallthru
      _
    // Predicated region
    $region6: #{tpu_custom_call.1} parent=1 // pred_check
      _
    $region7: #{tpu_custom_call.1} parent=1 // pred_check_branch
      %28 = sbr.rel (0) target = $region9
    $region8: #{tpu_custom_call.1} parent=1 // pred_region
      %s30 = ssub.s32 64, 64
      %31 = vsyncadd [#allocation3], %s30
      %s33 = sshll.u32 [#allocation2], 4
      %s34 = int_to_ptr.vmem [resolvable:$true] %s33
      %36 = dma.hbm_to_vmem [thread:$0]  %s1, 64, %s34, [#allocation3]
    $region9: #{tpu_custom_call.1} parent=1 // pred_fallthru
      _
    // Predicated region
    $region10: #{tpu_custom_call.1} parent=1 // pred_check
      _
    $region11: #{tpu_custom_call.1} parent=1 // pred_check_branch
      %38 = sbr.rel (0) target = $region13
    $region12: #{tpu_custom_call.1} parent=1 // pred_region
      %s40 = ssub.s32 64, 64
      %41 = vsyncadd [#allocation6], %s40
      %s43 = sshll.u32 [#allocation5], 4
      %s44 = int_to_ptr.vmem [resolvable:$true] %s43
      %46 = dma.hbm_to_vmem [thread:$0]  %s2, 64, %s44, [#allocation6]
    $region13: #{tpu_custom_call.1} parent=1 // pred_fallthru
      _
    // Predicated region
    $region14: #{tpu_custom_call.1} parent=1 // pred_check
      _
    $region15: #{tpu_custom_call.1} parent=1 // pred_check_branch
      %48 = sbr.rel (0) target = $region17
    $region16: #{tpu_custom_call.1} parent=1 // pred_region
      %s50 = ssub.s32 1024, 1024
      %51 = vsyncadd [#allocation6], %s50
      %s52 = sshll.u32 [#allocation7], 4
      %s53 = int_to_ptr.vmem [resolvable:$true] %s52
      %58 = dma.hbm_to_vmem [thread:$0]  %s3, 1024, %s53, [#allocation6], 128, 128, 8
    $region17: #{tpu_custom_call.1} parent=1 // pred_fallthru
      _
    // Predicated region
    $region18: #{tpu_custom_call.1} parent=1 // pred_check
      _
    $region19: #{tpu_custom_call.1} parent=1 // pred_check_branch
      %60 = sbr.rel (0) target = $region21
    $region20: #{tpu_custom_call.1} parent=1 // pred_region
      %s62 = ssub.s32 512, 512
      %63 = vsyncadd [#allocation9], %s62
      %s64 = sshll.u32 [#allocation8], 4
      %s65 = int_to_ptr.vmem [resolvable:$true] %s64
      %70 = dma.hbm_to_vmem [thread:$0]  %s4, 512, %s65, [#allocation9], 128, 128, 8
    $region21: #{tpu_custom_call.1} parent=1 // pred_fallthru
      _
    // Predicated region
    $region22: #{tpu_custom_call.1} parent=1 // pred_check
      _
    $region23: #{tpu_custom_call.1} parent=1 // pred_check_branch
      %72 = sbr.rel (0) target = $region25
    $region24: #{tpu_custom_call.1} parent=1 // pred_region
      _
    $region25: #{tpu_custom_call.1} parent=1 // pred_fallthru
      _
    // Predicated region
    $region26: #{tpu_custom_call.1} parent=1 // pred_check
      _
    $region27: #{tpu_custom_call.1} parent=1 // pred_check_branch
      %74 = sbr.rel (0) target = $region29
    $region28: #{tpu_custom_call.1} parent=1 // pred_region
      %s76 = ssub.s32 512, 512
      %77 = vsyncadd [#allocation9], %s76
      %s78 = sshll.u32 [#allocation10], 4
      %s79 = int_to_ptr.vmem [resolvable:$true] %s78
      %84 = dma.hbm_to_vmem [thread:$0]  %s6, 512, %s79, [#allocation9], 128, 128, 8
    $region29: #{tpu_custom_call.1} parent=1 // pred_fallthru
      _
    // Predicated region
    $region30: #{tpu_custom_call.1} parent=1 // pred_check
      _
    $region31: #{tpu_custom_call.1} parent=1 // pred_check_branch
      %86 = sbr.rel (0) target = $region33
    $region32: #{tpu_custom_call.1} parent=1 // pred_region
      _
    $region33: #{tpu_custom_call.1} parent=1 // pred_fallthru
      _
    // Predicated region
    $region34: #{tpu_custom_call.1} parent=1 // pred_check
      _
    $region35: #{tpu_custom_call.1} parent=1 // pred_check_branch
      %88 = sbr.rel (0) target = $region37
    $region36: #{tpu_custom_call.1} parent=1 // pred_region
      _
    $region37: #{tpu_custom_call.1} parent=1 // pred_fallthru
      _
    // Predicated region
    $region38: #{tpu_custom_call.1} parent=1 // pred_check
      _
    $region39: #{tpu_custom_call.1} parent=1 // pred_check_branch
      %90 = sbr.rel (0) target = $region41
    $region40: #{tpu_custom_call.1} parent=1 // pred_region
      %s92 = ssub.s32 512, 512
      %93 = vsyncadd [#allocation12], %s92
      %s94 = sshll.u32 [#allocation11], 4
      %s95 = int_to_ptr.vmem [resolvable:$true] %s94
      %100 = dma.hbm_to_vmem [thread:$0]  %s9, 512, %s95, [#allocation12], 128, 128, 8
    $region41: #{tpu_custom_call.1} parent=1 // pred_fallthru
      _
    // Predicated region
    $region42: #{tpu_custom_call.1} parent=1 // pred_check
      _
    $region43: #{tpu_custom_call.1} parent=1 // pred_check_branch
      %102 = sbr.rel (0) target = $region45
    $region44: #{tpu_custom_call.1} parent=1 // pred_region
      _
    $region45: #{tpu_custom_call.1} parent=1 // pred_fallthru
      _
    // Predicated region
    $region46: #{tpu_custom_call.1} parent=1 // pred_check
      _
    $region47: #{tpu_custom_call.1} parent=1 // pred_check_branch
      %104 = sbr.rel (0) target = $region49
    $region48: #{tpu_custom_call.1} parent=1 // pred_region
      %105 = dma.done [#allocation3], 64
    $region49: #{tpu_custom_call.1} parent=1 // pred_fallthru
      _
    // Predicated region
    $region50: #{tpu_custom_call.1} parent=1 // pred_check
      _
    $region51: #{tpu_custom_call.1} parent=1 // pred_check_branch
      %107 = sbr.rel (0) target = $region53
    $region52: #{tpu_custom_call.1} parent=1 // pred_region
      %108 = dma.done [#allocation6], 64
    $region53: #{tpu_custom_call.1} parent=1 // pred_fallthru
      _
    // Predicated region
    $region54: #{tpu_custom_call.1} parent=1 // pred_check
      _
    $region55: #{tpu_custom_call.1} parent=1 // pred_check_branch
      %110 = sbr.rel (0) target = $region57
    $region56: #{tpu_custom_call.1} parent=1 // pred_region
      %111 = dma.done [#allocation6], 1024
    $region57: #{tpu_custom_call.1} parent=1 // pred_fallthru
      _
    // Predicated region
    $region58: #{tpu_custom_call.1} parent=1 // pred_check
      _
    $region59: #{tpu_custom_call.1} parent=1 // pred_check_branch
      %113 = sbr.rel (0) target = $region61
    $region60: #{tpu_custom_call.1} parent=1 // pred_region
      %114 = dma.done [#allocation9], 512
    $region61: #{tpu_custom_call.1} parent=1 // pred_fallthru
      _
    // Predicated region
    $region62: #{tpu_custom_call.1} parent=1 // pred_check
      _
    $region63: #{tpu_custom_call.1} parent=1 // pred_check_branch
      %116 = sbr.rel (0) target = $region65
    $region64: #{tpu_custom_call.1} parent=1 // pred_region
      %117 = dma.done [#allocation9], 512
    $region65: #{tpu_custom_call.1} parent=1 // pred_fallthru
      _
    // Predicated region
    $region66: #{tpu_custom_call.1} parent=1 // pred_check
      _
    $region67: #{tpu_custom_call.1} parent=1 // pred_check_branch
      %119 = sbr.rel (0) target = $region69
    $region68: #{tpu_custom_call.1} parent=1 // pred_region
      %120 = dma.done [#allocation12], 512
    $region69: #{tpu_custom_call.1} parent=1 // pred_fallthru
      _
    %v121 = vld [vmem:[%s0] sm:$0xff]
    %v122 = vlaneseq
    %v123 = vand.u32 %v122, 127
    %124 = vset.pattern.permute.xlu0 0
    %125 = vperm.xlu0 %124, %v121
    %v126 = vpop.permute.xlu0 %125
    %vm127 = vcmp.eq.s32.totalorder %v126, %v123
    %v128 = vsel %vm127, 1, 0
    %v129 = vcvt.s32.f32 %v128
    %v130 = vld [vmem:[#allocation7] sm:$0xff]
    %v131 = vld [vmem:[#allocation7 + $0x8] sm:$0xff]
    %v132 = vld [vmem:[#allocation7 + $0x10] sm:$0xff]
    %v133 = vld [vmem:[#allocation7 + $0x18] sm:$0xff]
    %v134 = vld [vmem:[#allocation7 + $0x20] sm:$0xff]
    %v135 = vld [vmem:[#allocation7 + $0x28] sm:$0xff]
    %v136 = vld [vmem:[#allocation7 + $0x30] sm:$0xff]
    %v137 = vld [vmem:[#allocation7 + $0x38] sm:$0xff]
    %v138 = vld [vmem:[%s5] sm:$0x1]
    %v140 = vlaneseq
    %v141 = vshrl.u32 %v140, 7
    %v142 = vsub.s32 0, %v141
    %v143 = vrot.slane %v138, %v142
    %vm145 = vcmask 523264
    %v147 = vsel %vm145, %v129, 0
    %149 = vmatprep.subr.mxu0 0.0
    %150 = vmatpush1.msra.mxu0 %v130
    %151 = vmatprep.subr.mxu0 0.0
    %152 = vmatpush1.msra.mxu0 %v131
    %153 = vmatprep.subr.mxu0 0.0
    %154 = vmatpush1.msra.mxu0 %v132
    %155 = vmatprep.subr.mxu0 0.0
    %156 = vmatpush1.msra.mxu0 %v133
    %157 = vmatprep.subr.mxu0 0.0
    %158 = vmatpush1.msra.mxu0 %v134
    %159 = vmatprep.subr.mxu0 0.0
    %160 = vmatpush1.msra.mxu0 %v135
    %161 = vmatprep.subr.mxu0 0.0
    %162 = vmatpush1.msra.mxu0 %v136
    %163 = vmatprep.subr.mxu0 0.0
    %164 = vmatpush1.msra.mxu0 %v137
    %165 = vmatprep.subr.mxu0 0.0
    %166 = vmatpush1.msra.mxu0 0.0
    %167 = vmatprep.subr.mxu0 0.0
    %168 = vmatpush1.msra.mxu0 0.0
    %169 = vmatprep.subr.mxu0 0.0
    %170 = vmatpush1.msra.mxu0 0.0
    %171 = vmatprep.subr.mxu0 0.0
    %172 = vmatpush1.msra.mxu0 0.0
    %173 = vmatprep.subr.mxu0 0.0
    %174 = vmatpush1.msra.mxu0 0.0
    %175 = vmatprep.subr.mxu0 0.0
    %176 = vmatpush1.msra.mxu0 0.0
    %177 = vmatprep.subr.mxu0 0.0
    %178 = vmatpush1.msra.mxu0 0.0
    %179 = vmatprep.subr.mxu0 0.0
    %180 = vmatpush1.msra.mxu0 0.0
    %181 = vmatprep.subr.mxu0 0.0
    %182 = vmatpush1.msra.mxu0 0.0
    %183 = vmatprep.subr.mxu0 0.0
    %184 = vmatpush1.msra.mxu0 0.0
    %185 = vmatprep.subr.mxu0 0.0
    %186 = vmatpush1.msra.mxu0 0.0
    %187 = vmatprep.subr.mxu0 0.0
    %188 = vmatpush1.msra.mxu0 0.0
    %189 = vmatprep.subr.mxu0 0.0
    %190 = vmatpush1.msra.mxu0 0.0
    %191 = vmatprep.subr.mxu0 0.0
    %192 = vmatpush1.msra.mxu0 0.0
    %193 = vmatprep.subr.mxu0 0.0
    %194 = vmatpush1.msra.mxu0 0.0
    %195 = vmatprep.subr.mxu0 0.0
    %196 = vmatpush1.msra.mxu0 0.0
    %197 = vmatprep.subr.mxu0 0.0
    %198 = vmatpush1.msra.mxu0 0.0
    %199 = vmatprep.subr.mxu0 0.0
    %200 = vmatpush1.msra.mxu0 0.0
    %201 = vmatprep.subr.mxu0 0.0
    %202 = vmatpush1.msra.mxu0 0.0
    %203 = vmatprep.subr.mxu0 0.0
    %204 = vmatpush1.msra.mxu0 0.0
    %205 = vmatprep.subr.mxu0 0.0
    %206 = vmatpush1.msra.mxu0 0.0
    %207 = vmatprep.subr.mxu0 0.0
    %208 = vmatpush1.msra.mxu0 0.0
    %209 = vmatprep.subr.mxu0 0.0
    %210 = vmatpush1.msra.mxu0 0.0
    %211 = vmatprep.subr.mxu0 0.0
    %212 = vmatpush1.msra.mxu0 0.0
    %213 = vmatprep.mubr.f32.mxu0 0.0
    %214 = vmatmul.mubr.f32.gmra.mrb[0].mxu0 %v147
    %v215 = vpop.f32.mrb[0].mxu0
    %v216 = vadd.f32 %v143, %v215
    %v217 = vpop.f32.mrb[0].mxu0
    %218 = vdwg.mxu0
    %v219 = vld [vmem:[#allocation8] sm:$0xff]
    %v220 = vld [vmem:[#allocation8 + $0x8] sm:$0xff]
    %v221 = vld [vmem:[#allocation8 + $0x10] sm:$0xff]
    %v222 = vld [vmem:[#allocation8 + $0x18] sm:$0xff]
    %v223 = vld [vmem:[#allocation2] sm:$0x1]
    %v224 = vld [vmem:[#allocation5] sm:$0x1]
    %vm225 = vcmask 130048
    %v227 = vsel %vm225, %v223, 0
    %229 = vmatprep.subr.mxu0 0.0
    %230 = vmatpush1.msra.mxu0 %v219
    %231 = vmatprep.subr.mxu0 0.0
    %232 = vmatpush1.msra.mxu0 %v220
    %233 = vmatprep.subr.mxu0 0.0
    %234 = vmatpush1.msra.mxu0 0.0
    %235 = vmatprep.subr.mxu0 0.0
    %236 = vmatpush1.msra.mxu0 0.0
    %237 = vmatprep.subr.mxu0 0.0
    %238 = vmatpush1.msra.mxu0 0.0
    %239 = vmatprep.subr.mxu0 0.0
    %240 = vmatpush1.msra.mxu0 0.0
    %241 = vmatprep.subr.mxu0 0.0
    %242 = vmatpush1.msra.mxu0 0.0
    %243 = vmatprep.subr.mxu0 0.0
    %244 = vmatpush1.msra.mxu0 0.0
    %245 = vmatprep.subr.mxu0 0.0
    %246 = vmatpush1.msra.mxu0 0.0
    %247 = vmatprep.subr.mxu0 0.0
    %248 = vmatpush1.msra.mxu0 0.0
    %249 = vmatprep.subr.mxu0 0.0
    %250 = vmatpush1.msra.mxu0 0.0
    %251 = vmatprep.subr.mxu0 0.0
    %252 = vmatpush1.msra.mxu0 0.0
    %253 = vmatprep.subr.mxu0 0.0
    %254 = vmatpush1.msra.mxu0 0.0
    %255 = vmatprep.subr.mxu0 0.0
    %256 = vmatpush1.msra.mxu0 0.0
    %257 = vmatprep.subr.mxu0 0.0
    %258 = vmatpush1.msra.mxu0 0.0
    %259 = vmatprep.subr.mxu0 0.0
    %260 = vmatpush1.msra.mxu0 0.0
    %261 = vmatprep.subr.mxu0 0.0
    %262 = vmatpush1.msra.mxu0 0.0
    %263 = vmatprep.subr.mxu0 0.0
    %264 = vmatpush1.msra.mxu0 0.0
    %265 = vmatprep.subr.mxu0 0.0
    %266 = vmatpush1.msra.mxu0 0.0
    %267 = vmatprep.subr.mxu0 0.0
    %268 = vmatpush1.msra.mxu0 0.0
    %269 = vmatprep.subr.mxu0 0.0
    %270 = vmatpush1.msra.mxu0 0.0
    %271 = vmatprep.subr.mxu0 0.0
    %272 = vmatpush1.msra.mxu0 0.0
    %273 = vmatprep.subr.mxu0 0.0
    %274 = vmatpush1.msra.mxu0 0.0
    %275 = vmatprep.subr.mxu0 0.0
    %276 = vmatpush1.msra.mxu0 0.0
    %277 = vmatprep.subr.mxu0 0.0
    %278 = vmatpush1.msra.mxu0 0.0
    %279 = vmatprep.subr.mxu0 0.0
    %280 = vmatpush1.msra.mxu0 0.0
    %281 = vmatprep.subr.mxu0 0.0
    %282 = vmatpush1.msra.mxu0 0.0
    %283 = vmatprep.subr.mxu0 0.0
    %284 = vmatpush1.msra.mxu0 0.0
    %285 = vmatprep.subr.mxu0 0.0
    %286 = vmatpush1.msra.mxu0 0.0
    %287 = vmatprep.subr.mxu0 0.0
    %288 = vmatpush1.msra.mxu0 0.0
    %289 = vmatprep.subr.mxu0 0.0
    %290 = vmatpush1.msra.mxu0 0.0
    %291 = vmatprep.subr.mxu0 0.0
    %292 = vmatpush1.msra.mxu0 0.0
    %293 = vmatprep.mubr.f32.mxu0 0.0
    %294 = vmatmul.mubr.f32.gmra.mrb[0].mxu0 %v227
    %v295 = vpop.f32.mrb[0].mxu0
    %v296 = vadd.f32 0.0, %v295
    %v297 = vpop.f32.mrb[0].mxu0
    %298 = vdwg.mxu0
    %v299 = vadd.f32 %v216, %v296
    %v300 = vxor.u32 %v299, 2147483648
    %v301 = vmul.f32 %v300, 1.442695
    %v302 = vpow.pop %v301
    %v303 = vadd.f32 %v302, 1.0
    %v304 = vrcp.pop %v303
    %v305 = vmul.f32 1.0, %v304
    %v306 = vtanh.pop %v299
    %308 = vrot.lane.b32.xlu0 %v224, 16
    %v309 = vpop.permute.xlu0 %308
    %v311 = vmul.f32 %v305, %v309
    %313 = vrot.lane.b32.xlu0 %v306, 96
    %v314 = vpop.permute.xlu0 %313
    %v316 = vmul.f32 %v305, %v314
    %318 = vrot.lane.b32.xlu0 %v316, 16
    %v319 = vpop.permute.xlu0 %318
    %v321 = vadd.f32 %v311, %v319
    %v322 = vtanh.pop %v321
    %324 = vrot.lane.b32.xlu0 %v322, 32
    %v325 = vpop.permute.xlu0 %324
    %v327 = vmul.f32 %v305, %v325
    %329 = vrot.lane.b32.xlu0 %v327, 80
    %v330 = vpop.permute.xlu0 %329
    %v331 = vsel %vm225, %v330, 0
    %333 = vmatprep.subr.mxu0 0.0
    %334 = vmatpush1.msra.mxu0 %v219
    %335 = vmatprep.subr.mxu0 0.0
    %336 = vmatpush1.msra.mxu0 %v220
    %337 = vmatprep.subr.mxu0 0.0
    %338 = vmatpush1.msra.mxu0 0.0
    %339 = vmatprep.subr.mxu0 0.0
    %340 = vmatpush1.msra.mxu0 0.0
    %341 = vmatprep.subr.mxu0 0.0
    %342 = vmatpush1.msra.mxu0 0.0
    %343 = vmatprep.subr.mxu0 0.0
    %344 = vmatpush1.msra.mxu0 0.0
    %345 = vmatprep.subr.mxu0 0.0
    %346 = vmatpush1.msra.mxu0 0.0
    %347 = vmatprep.subr.mxu0 0.0
    %348 = vmatpush1.msra.mxu0 0.0
    %349 = vmatprep.subr.mxu0 0.0
    %350 = vmatpush1.msra.mxu0 0.0
    %351 = vmatprep.subr.mxu0 0.0
    %352 = vmatpush1.msra.mxu0 0.0
    %353 = vmatprep.subr.mxu0 0.0
    %354 = vmatpush1.msra.mxu0 0.0
    %355 = vmatprep.subr.mxu0 0.0
    %356 = vmatpush1.msra.mxu0 0.0
    %357 = vmatprep.subr.mxu0 0.0
    %358 = vmatpush1.msra.mxu0 0.0
    %359 = vmatprep.subr.mxu0 0.0
    %360 = vmatpush1.msra.mxu0 0.0
    %361 = vmatprep.subr.mxu0 0.0
    %362 = vmatpush1.msra.mxu0 0.0
    %363 = vmatprep.subr.mxu0 0.0
    %364 = vmatpush1.msra.mxu0 0.0
    %365 = vmatprep.subr.mxu0 0.0
    %366 = vmatpush1.msra.mxu0 0.0
    %367 = vmatprep.subr.mxu0 0.0
    %368 = vmatpush1.msra.mxu0 0.0
    %369 = vmatprep.subr.mxu0 0.0
    %370 = vmatpush1.msra.mxu0 0.0
    %371 = vmatprep.subr.mxu0 0.0
    %372 = vmatpush1.msra.mxu0 0.0
    %373 = vmatprep.subr.mxu0 0.0
    %374 = vmatpush1.msra.mxu0 0.0
    %375 = vmatprep.subr.mxu0 0.0
    %376 = vmatpush1.msra.mxu0 0.0
    %377 = vmatprep.subr.mxu0 0.0
    %378 = vmatpush1.msra.mxu0 0.0
    %379 = vmatprep.subr.mxu0 0.0
    %380 = vmatpush1.msra.mxu0 0.0
    %381 = vmatprep.subr.mxu0 0.0
    %382 = vmatpush1.msra.mxu0 0.0
    %383 = vmatprep.subr.mxu0 0.0
    %384 = vmatpush1.msra.mxu0 0.0
    %385 = vmatprep.subr.mxu0 0.0
    %386 = vmatpush1.msra.mxu0 0.0
    %387 = vmatprep.subr.mxu0 0.0
    %388 = vmatpush1.msra.mxu0 0.0
    %389 = vmatprep.subr.mxu0 0.0
    %390 = vmatpush1.msra.mxu0 0.0
    %391 = vmatprep.subr.mxu0 0.0
    %392 = vmatpush1.msra.mxu0 0.0
    %393 = vmatprep.subr.mxu0 0.0
    %394 = vmatpush1.msra.mxu0 0.0
    %395 = vmatprep.subr.mxu0 0.0
    %396 = vmatpush1.msra.mxu0 0.0
    %397 = vmatprep.mubr.f32.mxu0 0.0
    %398 = vmatmul.mubr.f32.gmra.mrb[0].mxu0 %v331
    %v399 = vpop.f32.mrb[0].mxu0
    %v400 = vadd.f32 0.0, %v399
    %v401 = vpop.f32.mrb[0].mxu0
    %402 = vdwg.mxu0
    %v404 = vrot.slane %v400, 7
    %v406 = vadd.f32 %v216, %v404
    %v407 = vxor.u32 %v406, 2147483648
    %v408 = vmul.f32 %v407, 1.442695
    %v409 = vpow.pop %v408
    %v410 = vadd.f32 %v409, 1.0
    %v411 = vrcp.pop %v410
    %v412 = vmul.f32 1.0, %v411
    %v413 = vtanh.pop %v406
    %v415 = vrot.slane %v321, 7
    %v417 = vmul.f32 %v412, %v415
    %419 = vrot.lane.b32.xlu0 %v413, 96
    %v420 = vpop.permute.xlu0 %419
    %v422 = vmul.f32 %v412, %v420
    %424 = vrot.lane.b32.xlu0 %v422, 16
    %v425 = vpop.permute.xlu0 %424
    %v427 = vadd.f32 %v417, %v425
    %v428 = vtanh.pop %v427
    %430 = vrot.lane.b32.xlu0 %v428, 32
    %v431 = vpop.permute.xlu0 %430
    %v433 = vmul.f32 %v412, %v431
    %v435 = vrot.slane %v433, 1
    %436 = vrot.lane.b32.xlu0 %v435, 80
    %v437 = vpop.permute.xlu0 %436
    %v438 = vsel %vm225, %v437, 0
    %440 = vmatprep.subr.mxu0 0.0
    %441 = vmatpush1.msra.mxu0 %v219
    %442 = vmatprep.subr.mxu0 0.0
    %443 = vmatpush1.msra.mxu0 %v220
    %444 = vmatprep.subr.mxu0 0.0
    %445 = vmatpush1.msra.mxu0 0.0
    %446 = vmatprep.subr.mxu0 0.0
    %447 = vmatpush1.msra.mxu0 0.0
    %448 = vmatprep.subr.mxu0 0.0
    %449 = vmatpush1.msra.mxu0 0.0
    %450 = vmatprep.subr.mxu0 0.0
    %451 = vmatpush1.msra.mxu0 0.0
    %452 = vmatprep.subr.mxu0 0.0
    %453 = vmatpush1.msra.mxu0 0.0
    %454 = vmatprep.subr.mxu0 0.0
    %455 = vmatpush1.msra.mxu0 0.0
    %456 = vmatprep.subr.mxu0 0.0
    %457 = vmatpush1.msra.mxu0 0.0
    %458 = vmatprep.subr.mxu0 0.0
    %459 = vmatpush1.msra.mxu0 0.0
    %460 = vmatprep.subr.mxu0 0.0
    %461 = vmatpush1.msra.mxu0 0.0
    %462 = vmatprep.subr.mxu0 0.0
    %463 = vmatpush1.msra.mxu0 0.0
    %464 = vmatprep.subr.mxu0 0.0
    %465 = vmatpush1.msra.mxu0 0.0
    %466 = vmatprep.subr.mxu0 0.0
    %467 = vmatpush1.msra.mxu0 0.0
    %468 = vmatprep.subr.mxu0 0.0
    %469 = vmatpush1.msra.mxu0 0.0
    %470 = vmatprep.subr.mxu0 0.0
    %471 = vmatpush1.msra.mxu0 0.0
    %472 = vmatprep.subr.mxu0 0.0
    %473 = vmatpush1.msra.mxu0 0.0
    %474 = vmatprep.subr.mxu0 0.0
    %475 = vmatpush1.msra.mxu0 0.0
    %476 = vmatprep.subr.mxu0 0.0
    %477 = vmatpush1.msra.mxu0 0.0
    %478 = vmatprep.subr.mxu0 0.0
    %479 = vmatpush1.msra.mxu0 0.0
    %480 = vmatprep.subr.mxu0 0.0
    %481 = vmatpush1.msra.mxu0 0.0
    %482 = vmatprep.subr.mxu0 0.0
    %483 = vmatpush1.msra.mxu0 0.0
    %484 = vmatprep.subr.mxu0 0.0
    %485 = vmatpush1.msra.mxu0 0.0
    %486 = vmatprep.subr.mxu0 0.0
    %487 = vmatpush1.msra.mxu0 0.0
    %488 = vmatprep.subr.mxu0 0.0
    %489 = vmatpush1.msra.mxu0 0.0
    %490 = vmatprep.subr.mxu0 0.0
    %491 = vmatpush1.msra.mxu0 0.0
    %492 = vmatprep.subr.mxu0 0.0
    %493 = vmatpush1.msra.mxu0 0.0
    %494 = vmatprep.subr.mxu0 0.0
    %495 = vmatpush1.msra.mxu0 0.0
    %496 = vmatprep.subr.mxu0 0.0
    %497 = vmatpush1.msra.mxu0 0.0
    %498 = vmatprep.subr.mxu0 0.0
    %499 = vmatpush1.msra.mxu0 0.0
    %500 = vmatprep.subr.mxu0 0.0
    %501 = vmatpush1.msra.mxu0 0.0
    %502 = vmatprep.subr.mxu0 0.0
    %503 = vmatpush1.msra.mxu0 0.0
    %504 = vmatprep.mubr.f32.mxu0 0.0
    %505 = vmatmul.mubr.f32.gmra.mrb[0].mxu0 %v438
    %v506 = vpop.f32.mrb[0].mxu0
    %v507 = vadd.f32 0.0, %v506
    %v508 = vpop.f32.mrb[0].mxu0
    %509 = vdwg.mxu0
    %v511 = vrot.slane %v507, 6
    %v513 = vadd.f32 %v216, %v511
    %v514 = vxor.u32 %v513, 2147483648
    %v515 = vmul.f32 %v514, 1.442695
    %v516 = vpow.pop %v515
    %v517 = vadd.f32 %v516, 1.0
    %v518 = vrcp.pop %v517
    %v519 = vmul.f32 1.0, %v518
    %v520 = vtanh.pop %v513
    %v522 = vrot.slane %v427, 7
    %v524 = vmul.f32 %v519, %v522
    %526 = vrot.lane.b32.xlu0 %v520, 96
    %v527 = vpop.permute.xlu0 %526
    %v529 = vmul.f32 %v519, %v527
    %531 = vrot.lane.b32.xlu0 %v529, 16
    %v532 = vpop.permute.xlu0 %531
    %v534 = vadd.f32 %v524, %v532
    %v535 = vtanh.pop %v534
    %537 = vrot.lane.b32.xlu0 %v535, 32
    %v538 = vpop.permute.xlu0 %537
    %v540 = vmul.f32 %v519, %v538
    %v542 = vrot.slane %v540, 2
    %543 = vrot.lane.b32.xlu0 %v542, 80
    %v544 = vpop.permute.xlu0 %543
    %v545 = vsel %vm225, %v544, 0
    %547 = vmatprep.subr.mxu0 0.0
    %548 = vmatpush1.msra.mxu0 %v219
    %549 = vmatprep.subr.mxu0 0.0
    %550 = vmatpush1.msra.mxu0 %v220
    %551 = vmatprep.subr.mxu0 0.0
    %552 = vmatpush1.msra.mxu0 0.0
    %553 = vmatprep.subr.mxu0 0.0
    %554 = vmatpush1.msra.mxu0 0.0
    %555 = vmatprep.subr.mxu0 0.0
    %556 = vmatpush1.msra.mxu0 0.0
    %557 = vmatprep.subr.mxu0 0.0
    %558 = vmatpush1.msra.mxu0 0.0
    %559 = vmatprep.subr.mxu0 0.0
    %560 = vmatpush1.msra.mxu0 0.0
    %561 = vmatprep.subr.mxu0 0.0
    %562 = vmatpush1.msra.mxu0 0.0
    %563 = vmatprep.subr.mxu0 0.0
    %564 = vmatpush1.msra.mxu0 0.0
    %565 = vmatprep.subr.mxu0 0.0
    %566 = vmatpush1.msra.mxu0 0.0
    %567 = vmatprep.subr.mxu0 0.0
    %568 = vmatpush1.msra.mxu0 0.0
    %569 = vmatprep.subr.mxu0 0.0
    %570 = vmatpush1.msra.mxu0 0.0
    %571 = vmatprep.subr.mxu0 0.0
    %572 = vmatpush1.msra.mxu0 0.0
    %573 = vmatprep.subr.mxu0 0.0
    %574 = vmatpush1.msra.mxu0 0.0
    %575 = vmatprep.subr.mxu0 0.0
    %576 = vmatpush1.msra.mxu0 0.0
    %577 = vmatprep.subr.mxu0 0.0
    %578 = vmatpush1.msra.mxu0 0.0
    %579 = vmatprep.subr.mxu0 0.0
    %580 = vmatpush1.msra.mxu0 0.0
    %581 = vmatprep.subr.mxu0 0.0
    %582 = vmatpush1.msra.mxu0 0.0
    %583 = vmatprep.subr.mxu0 0.0
    %584 = vmatpush1.msra.mxu0 0.0
    %585 = vmatprep.subr.mxu0 0.0
    %586 = vmatpush1.msra.mxu0 0.0
    %587 = vmatprep.subr.mxu0 0.0
    %588 = vmatpush1.msra.mxu0 0.0
    %589 = vmatprep.subr.mxu0 0.0
    %590 = vmatpush1.msra.mxu0 0.0
    %591 = vmatprep.subr.mxu0 0.0
    %592 = vmatpush1.msra.mxu0 0.0
    %593 = vmatprep.subr.mxu0 0.0
    %594 = vmatpush1.msra.mxu0 0.0
    %595 = vmatprep.subr.mxu0 0.0
    %596 = vmatpush1.msra.mxu0 0.0
    %597 = vmatprep.subr.mxu0 0.0
    %598 = vmatpush1.msra.mxu0 0.0
    %599 = vmatprep.subr.mxu0 0.0
    %600 = vmatpush1.msra.mxu0 0.0
    %601 = vmatprep.subr.mxu0 0.0
    %602 = vmatpush1.msra.mxu0 0.0
    %603 = vmatprep.subr.mxu0 0.0
    %604 = vmatpush1.msra.mxu0 0.0
    %605 = vmatprep.subr.mxu0 0.0
    %606 = vmatpush1.msra.mxu0 0.0
    %607 = vmatprep.subr.mxu0 0.0
    %608 = vmatpush1.msra.mxu0 0.0
    %609 = vmatprep.subr.mxu0 0.0
    %610 = vmatpush1.msra.mxu0 0.0
    %611 = vmatprep.mubr.f32.mxu0 0.0
    %612 = vmatmul.mubr.f32.gmra.mrb[0].mxu0 %v545
    %v613 = vpop.f32.mrb[0].mxu0
    %v614 = vadd.f32 0.0, %v613
    %v615 = vpop.f32.mrb[0].mxu0
    %616 = vdwg.mxu0
    %v618 = vrot.slane %v614, 5
    %v620 = vadd.f32 %v216, %v618
    %v621 = vxor.u32 %v620, 2147483648
    %v622 = vmul.f32 %v621, 1.442695
    %v623 = vpow.pop %v622
    %v624 = vadd.f32 %v623, 1.0
    %v625 = vrcp.pop %v624
    %v626 = vmul.f32 1.0, %v625
    %v627 = vtanh.pop %v620
    %v629 = vrot.slane %v534, 7
    %v631 = vmul.f32 %v626, %v629
    %633 = vrot.lane.b32.xlu0 %v627, 96
    %v634 = vpop.permute.xlu0 %633
    %v636 = vmul.f32 %v626, %v634
    %638 = vrot.lane.b32.xlu0 %v636, 16
    %v639 = vpop.permute.xlu0 %638
    %v641 = vadd.f32 %v631, %v639
    %v642 = vtanh.pop %v641
    %644 = vrot.lane.b32.xlu0 %v642, 32
    %v645 = vpop.permute.xlu0 %644
    %v647 = vmul.f32 %v626, %v645
    %v649 = vrot.slane %v647, 3
    %650 = vrot.lane.b32.xlu0 %v649, 80
    %v651 = vpop.permute.xlu0 %650
    %v652 = vsel %vm225, %v651, 0
    %654 = vmatprep.subr.mxu0 0.0
    %655 = vmatpush1.msra.mxu0 %v219
    %656 = vmatprep.subr.mxu0 0.0
    %657 = vmatpush1.msra.mxu0 %v220
    %658 = vmatprep.subr.mxu0 0.0
    %659 = vmatpush1.msra.mxu0 0.0
    %660 = vmatprep.subr.mxu0 0.0
    %661 = vmatpush1.msra.mxu0 0.0
    %662 = vmatprep.subr.mxu0 0.0
    %663 = vmatpush1.msra.mxu0 0.0
    %664 = vmatprep.subr.mxu0 0.0
    %665 = vmatpush1.msra.mxu0 0.0
    %666 = vmatprep.subr.mxu0 0.0
    %667 = vmatpush1.msra.mxu0 0.0
    %668 = vmatprep.subr.mxu0 0.0
    %669 = vmatpush1.msra.mxu0 0.0
    %670 = vmatprep.subr.mxu0 0.0
    %671 = vmatpush1.msra.mxu0 0.0
    %672 = vmatprep.subr.mxu0 0.0
    %673 = vmatpush1.msra.mxu0 0.0
    %674 = vmatprep.subr.mxu0 0.0
    %675 = vmatpush1.msra.mxu0 0.0
    %676 = vmatprep.subr.mxu0 0.0
    %677 = vmatpush1.msra.mxu0 0.0
    %678 = vmatprep.subr.mxu0 0.0
    %679 = vmatpush1.msra.mxu0 0.0
    %680 = vmatprep.subr.mxu0 0.0
    %681 = vmatpush1.msra.mxu0 0.0
    %682 = vmatprep.subr.mxu0 0.0
    %683 = vmatpush1.msra.mxu0 0.0
    %684 = vmatprep.subr.mxu0 0.0
    %685 = vmatpush1.msra.mxu0 0.0
    %686 = vmatprep.subr.mxu0 0.0
    %687 = vmatpush1.msra.mxu0 0.0
    %688 = vmatprep.subr.mxu0 0.0
    %689 = vmatpush1.msra.mxu0 0.0
    %690 = vmatprep.subr.mxu0 0.0
    %691 = vmatpush1.msra.mxu0 0.0
    %692 = vmatprep.subr.mxu0 0.0
    %693 = vmatpush1.msra.mxu0 0.0
    %694 = vmatprep.subr.mxu0 0.0
    %695 = vmatpush1.msra.mxu0 0.0
    %696 = vmatprep.subr.mxu0 0.0
    %697 = vmatpush1.msra.mxu0 0.0
    %698 = vmatprep.subr.mxu0 0.0
    %699 = vmatpush1.msra.mxu0 0.0
    %700 = vmatprep.subr.mxu0 0.0
    %701 = vmatpush1.msra.mxu0 0.0
    %702 = vmatprep.subr.mxu0 0.0
    %703 = vmatpush1.msra.mxu0 0.0
    %704 = vmatprep.subr.mxu0 0.0
    %705 = vmatpush1.msra.mxu0 0.0
    %706 = vmatprep.subr.mxu0 0.0
    %707 = vmatpush1.msra.mxu0 0.0
    %708 = vmatprep.subr.mxu0 0.0
    %709 = vmatpush1.msra.mxu0 0.0
    %710 = vmatprep.subr.mxu0 0.0
    %711 = vmatpush1.msra.mxu0 0.0
    %712 = vmatprep.subr.mxu0 0.0
    %713 = vmatpush1.msra.mxu0 0.0
    %714 = vmatprep.subr.mxu0 0.0
    %715 = vmatpush1.msra.mxu0 0.0
    %716 = vmatprep.subr.mxu0 0.0
    %717 = vmatpush1.msra.mxu0 0.0
    %718 = vmatprep.mubr.f32.mxu0 0.0
    %719 = vmatmul.mubr.f32.gmra.mrb[0].mxu0 %v652
    %v720 = vpop.f32.mrb[0].mxu0
    %v721 = vadd.f32 0.0, %v720
    %v722 = vpop.f32.mrb[0].mxu0
    %723 = vdwg.mxu0
    %v725 = vrot.slane %v721, 4
    %v727 = vadd.f32 %v216, %v725
    %v728 = vxor.u32 %v727, 2147483648
    %v729 = vmul.f32 %v728, 1.442695
    %v730 = vpow.pop %v729
    %v731 = vadd.f32 %v730, 1.0
    %v732 = vrcp.pop %v731
    %v733 = vmul.f32 1.0, %v732
    %v734 = vtanh.pop %v727
    %v736 = vrot.slane %v641, 7
    %v738 = vmul.f32 %v733, %v736
    %740 = vrot.lane.b32.xlu0 %v734, 96
    %v741 = vpop.permute.xlu0 %740
    %v743 = vmul.f32 %v733, %v741
    %745 = vrot.lane.b32.xlu0 %v743, 16
    %v746 = vpop.permute.xlu0 %745
    %v748 = vadd.f32 %v738, %v746
    %v749 = vtanh.pop %v748
    %751 = vrot.lane.b32.xlu0 %v749, 32
    %v752 = vpop.permute.xlu0 %751
    %v754 = vmul.f32 %v733, %v752
    %v756 = vrot.slane %v754, 4
    %757 = vrot.lane.b32.xlu0 %v756, 80
    %v758 = vpop.permute.xlu0 %757
    %v759 = vsel %vm225, %v758, 0
    %761 = vmatprep.subr.mxu0 0.0
    %762 = vmatpush1.msra.mxu0 %v219
    %763 = vmatprep.subr.mxu0 0.0
    %764 = vmatpush1.msra.mxu0 %v220
    %765 = vmatprep.subr.mxu0 0.0
    %766 = vmatpush1.msra.mxu0 0.0
    %767 = vmatprep.subr.mxu0 0.0
    %768 = vmatpush1.msra.mxu0 0.0
    %769 = vmatprep.subr.mxu0 0.0
    %770 = vmatpush1.msra.mxu0 0.0
    %771 = vmatprep.subr.mxu0 0.0
    %772 = vmatpush1.msra.mxu0 0.0
    %773 = vmatprep.subr.mxu0 0.0
    %774 = vmatpush1.msra.mxu0 0.0
    %775 = vmatprep.subr.mxu0 0.0
    %776 = vmatpush1.msra.mxu0 0.0
    %777 = vmatprep.subr.mxu0 0.0
    %778 = vmatpush1.msra.mxu0 0.0
    %779 = vmatprep.subr.mxu0 0.0
    %780 = vmatpush1.msra.mxu0 0.0
    %781 = vmatprep.subr.mxu0 0.0
    %782 = vmatpush1.msra.mxu0 0.0
    %783 = vmatprep.subr.mxu0 0.0
    %784 = vmatpush1.msra.mxu0 0.0
    %785 = vmatprep.subr.mxu0 0.0
    %786 = vmatpush1.msra.mxu0 0.0
    %787 = vmatprep.subr.mxu0 0.0
    %788 = vmatpush1.msra.mxu0 0.0
    %789 = vmatprep.subr.mxu0 0.0
    %790 = vmatpush1.msra.mxu0 0.0
    %791 = vmatprep.subr.mxu0 0.0
    %792 = vmatpush1.msra.mxu0 0.0
    %793 = vmatprep.subr.mxu0 0.0
    %794 = vmatpush1.msra.mxu0 0.0
    %795 = vmatprep.subr.mxu0 0.0
    %796 = vmatpush1.msra.mxu0 0.0
    %797 = vmatprep.subr.mxu0 0.0
    %798 = vmatpush1.msra.mxu0 0.0
    %799 = vmatprep.subr.mxu0 0.0
    %800 = vmatpush1.msra.mxu0 0.0
    %801 = vmatprep.subr.mxu0 0.0
    %802 = vmatpush1.msra.mxu0 0.0
    %803 = vmatprep.subr.mxu0 0.0
    %804 = vmatpush1.msra.mxu0 0.0
    %805 = vmatprep.subr.mxu0 0.0
    %806 = vmatpush1.msra.mxu0 0.0
    %807 = vmatprep.subr.mxu0 0.0
    %808 = vmatpush1.msra.mxu0 0.0
    %809 = vmatprep.subr.mxu0 0.0
    %810 = vmatpush1.msra.mxu0 0.0
    %811 = vmatprep.subr.mxu0 0.0
    %812 = vmatpush1.msra.mxu0 0.0
    %813 = vmatprep.subr.mxu0 0.0
    %814 = vmatpush1.msra.mxu0 0.0
    %815 = vmatprep.subr.mxu0 0.0
    %816 = vmatpush1.msra.mxu0 0.0
    %817 = vmatprep.subr.mxu0 0.0
    %818 = vmatpush1.msra.mxu0 0.0
    %819 = vmatprep.subr.mxu0 0.0
    %820 = vmatpush1.msra.mxu0 0.0
    %821 = vmatprep.subr.mxu0 0.0
    %822 = vmatpush1.msra.mxu0 0.0
    %823 = vmatprep.subr.mxu0 0.0
    %824 = vmatpush1.msra.mxu0 0.0
    %825 = vmatprep.mubr.f32.mxu0 0.0
    %826 = vmatmul.mubr.f32.gmra.mrb[0].mxu0 %v759
    %v827 = vpop.f32.mrb[0].mxu0
    %v828 = vadd.f32 0.0, %v827
    %v829 = vpop.f32.mrb[0].mxu0
    %830 = vdwg.mxu0
    %v832 = vrot.slane %v828, 3
    %v834 = vadd.f32 %v216, %v832
    %v835 = vxor.u32 %v834, 2147483648
    %v836 = vmul.f32 %v835, 1.442695
    %v837 = vpow.pop %v836
    %v838 = vadd.f32 %v837, 1.0
    %v839 = vrcp.pop %v838
    %v840 = vmul.f32 1.0, %v839
    %v841 = vtanh.pop %v834
    %v843 = vrot.slane %v748, 7
    %v845 = vmul.f32 %v840, %v843
    %847 = vrot.lane.b32.xlu0 %v841, 96
    %v848 = vpop.permute.xlu0 %847
    %v850 = vmul.f32 %v840, %v848
    %852 = vrot.lane.b32.xlu0 %v850, 16
    %v853 = vpop.permute.xlu0 %852
    %v855 = vadd.f32 %v845, %v853
    %v856 = vtanh.pop %v855
    %858 = vrot.lane.b32.xlu0 %v856, 32
    %v859 = vpop.permute.xlu0 %858
    %v861 = vmul.f32 %v840, %v859
    %v863 = vrot.slane %v861, 5
    %864 = vrot.lane.b32.xlu0 %v863, 80
    %v865 = vpop.permute.xlu0 %864
    %v866 = vsel %vm225, %v865, 0
    %868 = vmatprep.subr.mxu0 0.0
    %869 = vmatpush1.msra.mxu0 %v219
    %870 = vmatprep.subr.mxu0 0.0
    %871 = vmatpush1.msra.mxu0 %v220
    %872 = vmatprep.subr.mxu0 0.0
    %873 = vmatpush1.msra.mxu0 0.0
    %874 = vmatprep.subr.mxu0 0.0
    %875 = vmatpush1.msra.mxu0 0.0
    %876 = vmatprep.subr.mxu0 0.0
    %877 = vmatpush1.msra.mxu0 0.0
    %878 = vmatprep.subr.mxu0 0.0
    %879 = vmatpush1.msra.mxu0 0.0
    %880 = vmatprep.subr.mxu0 0.0
    %881 = vmatpush1.msra.mxu0 0.0
    %882 = vmatprep.subr.mxu0 0.0
    %883 = vmatpush1.msra.mxu0 0.0
    %884 = vmatprep.subr.mxu0 0.0
    %885 = vmatpush1.msra.mxu0 0.0
    %886 = vmatprep.subr.mxu0 0.0
    %887 = vmatpush1.msra.mxu0 0.0
    %888 = vmatprep.subr.mxu0 0.0
    %889 = vmatpush1.msra.mxu0 0.0
    %890 = vmatprep.subr.mxu0 0.0
    %891 = vmatpush1.msra.mxu0 0.0
    %892 = vmatprep.subr.mxu0 0.0
    %893 = vmatpush1.msra.mxu0 0.0
    %894 = vmatprep.subr.mxu0 0.0
    %895 = vmatpush1.msra.mxu0 0.0
    %896 = vmatprep.subr.mxu0 0.0
    %897 = vmatpush1.msra.mxu0 0.0
    %898 = vmatprep.subr.mxu0 0.0
    %899 = vmatpush1.msra.mxu0 0.0
    %900 = vmatprep.subr.mxu0 0.0
    %901 = vmatpush1.msra.mxu0 0.0
    %902 = vmatprep.subr.mxu0 0.0
    %903 = vmatpush1.msra.mxu0 0.0
    %904 = vmatprep.subr.mxu0 0.0
    %905 = vmatpush1.msra.mxu0 0.0
    %906 = vmatprep.subr.mxu0 0.0
    %907 = vmatpush1.msra.mxu0 0.0
    %908 = vmatprep.subr.mxu0 0.0
    %909 = vmatpush1.msra.mxu0 0.0
    %910 = vmatprep.subr.mxu0 0.0
    %911 = vmatpush1.msra.mxu0 0.0
    %912 = vmatprep.subr.mxu0 0.0
    %913 = vmatpush1.msra.mxu0 0.0
    %914 = vmatprep.subr.mxu0 0.0
    %915 = vmatpush1.msra.mxu0 0.0
    %916 = vmatprep.subr.mxu0 0.0
    %917 = vmatpush1.msra.mxu0 0.0
    %918 = vmatprep.subr.mxu0 0.0
    %919 = vmatpush1.msra.mxu0 0.0
    %920 = vmatprep.subr.mxu0 0.0
    %921 = vmatpush1.msra.mxu0 0.0
    %922 = vmatprep.subr.mxu0 0.0
    %923 = vmatpush1.msra.mxu0 0.0
    %924 = vmatprep.subr.mxu0 0.0
    %925 = vmatpush1.msra.mxu0 0.0
    %926 = vmatprep.subr.mxu0 0.0
    %927 = vmatpush1.msra.mxu0 0.0
    %928 = vmatprep.subr.mxu0 0.0
    %929 = vmatpush1.msra.mxu0 0.0
    %930 = vmatprep.subr.mxu0 0.0
    %931 = vmatpush1.msra.mxu0 0.0
    %932 = vmatprep.mubr.f32.mxu0 0.0
    %933 = vmatmul.mubr.f32.gmra.mrb[0].mxu0 %v866
    %v934 = vpop.f32.mrb[0].mxu0
    %v935 = vadd.f32 0.0, %v934
    %v936 = vpop.f32.mrb[0].mxu0
    %937 = vdwg.mxu0
    %v939 = vrot.slane %v935, 2
    %v941 = vadd.f32 %v216, %v939
    %v942 = vxor.u32 %v941, 2147483648
    %v943 = vmul.f32 %v942, 1.442695
    %v944 = vpow.pop %v943
    %v945 = vadd.f32 %v944, 1.0
    %v946 = vrcp.pop %v945
    %v947 = vmul.f32 1.0, %v946
    %v948 = vtanh.pop %v941
    %v950 = vrot.slane %v855, 7
    %v952 = vmul.f32 %v947, %v950
    %954 = vrot.lane.b32.xlu0 %v948, 96
    %v955 = vpop.permute.xlu0 %954
    %v957 = vmul.f32 %v947, %v955
    %959 = vrot.lane.b32.xlu0 %v957, 16
    %v960 = vpop.permute.xlu0 %959
    %v962 = vadd.f32 %v952, %v960
    %v963 = vtanh.pop %v962
    %965 = vrot.lane.b32.xlu0 %v963, 32
    %v966 = vpop.permute.xlu0 %965
    %v968 = vmul.f32 %v947, %v966
    %v970 = vrot.slane %v968, 6
    %971 = vrot.lane.b32.xlu0 %v970, 80
    %v972 = vpop.permute.xlu0 %971
    %v973 = vsel %vm225, %v972, 0
    %975 = vmatprep.subr.mxu0 0.0
    %976 = vmatpush1.msra.mxu0 %v219
    %977 = vmatprep.subr.mxu0 0.0
    %978 = vmatpush1.msra.mxu0 %v220
    %979 = vmatprep.subr.mxu0 0.0
    %980 = vmatpush1.msra.mxu0 0.0
    %981 = vmatprep.subr.mxu0 0.0
    %982 = vmatpush1.msra.mxu0 0.0
    %983 = vmatprep.subr.mxu0 0.0
    %984 = vmatpush1.msra.mxu0 0.0
    %985 = vmatprep.subr.mxu0 0.0
    %986 = vmatpush1.msra.mxu0 0.0
    %987 = vmatprep.subr.mxu0 0.0
    %988 = vmatpush1.msra.mxu0 0.0
    %989 = vmatprep.subr.mxu0 0.0
    %990 = vmatpush1.msra.mxu0 0.0
    %991 = vmatprep.subr.mxu0 0.0
    %992 = vmatpush1.msra.mxu0 0.0
    %993 = vmatprep.subr.mxu0 0.0
    %994 = vmatpush1.msra.mxu0 0.0
    %995 = vmatprep.subr.mxu0 0.0
    %996 = vmatpush1.msra.mxu0 0.0
    %997 = vmatprep.subr.mxu0 0.0
    %998 = vmatpush1.msra.mxu0 0.0
    %999 = vmatprep.subr.mxu0 0.0
    %1000 = vmatpush1.msra.mxu0 0.0
    %1001 = vmatprep.subr.mxu0 0.0
    %1002 = vmatpush1.msra.mxu0 0.0
    %1003 = vmatprep.subr.mxu0 0.0
    %1004 = vmatpush1.msra.mxu0 0.0
    %1005 = vmatprep.subr.mxu0 0.0
    %1006 = vmatpush1.msra.mxu0 0.0
    %1007 = vmatprep.subr.mxu0 0.0
    %1008 = vmatpush1.msra.mxu0 0.0
    %1009 = vmatprep.subr.mxu0 0.0
    %1010 = vmatpush1.msra.mxu0 0.0
    %1011 = vmatprep.subr.mxu0 0.0
    %1012 = vmatpush1.msra.mxu0 0.0
    %1013 = vmatprep.subr.mxu0 0.0
    %1014 = vmatpush1.msra.mxu0 0.0
    %1015 = vmatprep.subr.mxu0 0.0
    %1016 = vmatpush1.msra.mxu0 0.0
    %1017 = vmatprep.subr.mxu0 0.0
    %1018 = vmatpush1.msra.mxu0 0.0
    %1019 = vmatprep.subr.mxu0 0.0
    %1020 = vmatpush1.msra.mxu0 0.0
    %1021 = vmatprep.subr.mxu0 0.0
    %1022 = vmatpush1.msra.mxu0 0.0
    %1023 = vmatprep.subr.mxu0 0.0
    %1024 = vmatpush1.msra.mxu0 0.0
    %1025 = vmatprep.subr.mxu0 0.0
    %1026 = vmatpush1.msra.mxu0 0.0
    %1027 = vmatprep.subr.mxu0 0.0
    %1028 = vmatpush1.msra.mxu0 0.0
    %1029 = vmatprep.subr.mxu0 0.0
    %1030 = vmatpush1.msra.mxu0 0.0
    %1031 = vmatprep.subr.mxu0 0.0
    %1032 = vmatpush1.msra.mxu0 0.0
    %1033 = vmatprep.subr.mxu0 0.0
    %1034 = vmatpush1.msra.mxu0 0.0
    %1035 = vmatprep.subr.mxu0 0.0
    %1036 = vmatpush1.msra.mxu0 0.0
    %1037 = vmatprep.subr.mxu0 0.0
    %1038 = vmatpush1.msra.mxu0 0.0
    %1039 = vmatprep.mubr.f32.mxu0 0.0
    %1040 = vmatmul.mubr.f32.gmra.mrb[0].mxu0 %v973
    %v1041 = vpop.f32.mrb[0].mxu0
    %v1042 = vadd.f32 0.0, %v1041
    %v1043 = vpop.f32.mrb[0].mxu0
    %1044 = vdwg.mxu0
    %v1046 = vrot.slane %v1042, 1
    %v1048 = vadd.f32 %v216, %v1046
    %v1049 = vxor.u32 %v1048, 2147483648
    %v1050 = vmul.f32 %v1049, 1.442695
    %v1051 = vpow.pop %v1050
    %v1052 = vadd.f32 %v1051, 1.0
    %v1053 = vrcp.pop %v1052
    %v1054 = vmul.f32 1.0, %v1053
    %v1055 = vtanh.pop %v1048
    %v1057 = vrot.slane %v962, 7
    %v1059 = vmul.f32 %v1054, %v1057
    %1061 = vrot.lane.b32.xlu0 %v1055, 96
    %v1062 = vpop.permute.xlu0 %1061
    %v1064 = vmul.f32 %v1054, %v1062
    %1066 = vrot.lane.b32.xlu0 %v1064, 16
    %v1067 = vpop.permute.xlu0 %1066
    %v1069 = vadd.f32 %v1059, %v1067
    %v1070 = vtanh.pop %v1069
    %1072 = vrot.lane.b32.xlu0 %v1070, 32
    %v1073 = vpop.permute.xlu0 %1072
    %v1075 = vmul.f32 %v1054, %v1073
    %v1076 = vld [vmem:[#allocation2 + $0x1] sm:$0x1]
    %v1077 = vld [vmem:[#allocation5 + $0x1] sm:$0x1]
    %v1079 = vsel %vm225, %v1076, 0
    %1081 = vmatprep.subr.mxu0 0.0
    %1082 = vmatpush1.msra.mxu0 %v221
    %1083 = vmatprep.subr.mxu0 0.0
    %1084 = vmatpush1.msra.mxu0 %v222
    %1085 = vmatprep.subr.mxu0 0.0
    %1086 = vmatpush1.msra.mxu0 0.0
    %1087 = vmatprep.subr.mxu0 0.0
    %1088 = vmatpush1.msra.mxu0 0.0
    %1089 = vmatprep.subr.mxu0 0.0
    %1090 = vmatpush1.msra.mxu0 0.0
    %1091 = vmatprep.subr.mxu0 0.0
    %1092 = vmatpush1.msra.mxu0 0.0
    %1093 = vmatprep.subr.mxu0 0.0
    %1094 = vmatpush1.msra.mxu0 0.0
    %1095 = vmatprep.subr.mxu0 0.0
    %1096 = vmatpush1.msra.mxu0 0.0
    %1097 = vmatprep.subr.mxu0 0.0
    %1098 = vmatpush1.msra.mxu0 0.0
    %1099 = vmatprep.subr.mxu0 0.0
    %1100 = vmatpush1.msra.mxu0 0.0
    %1101 = vmatprep.subr.mxu0 0.0
    %1102 = vmatpush1.msra.mxu0 0.0
    %1103 = vmatprep.subr.mxu0 0.0
    %1104 = vmatpush1.msra.mxu0 0.0
    %1105 = vmatprep.subr.mxu0 0.0
    %1106 = vmatpush1.msra.mxu0 0.0
    %1107 = vmatprep.subr.mxu0 0.0
    %1108 = vmatpush1.msra.mxu0 0.0
    %1109 = vmatprep.subr.mxu0 0.0
    %1110 = vmatpush1.msra.mxu0 0.0
    %1111 = vmatprep.subr.mxu0 0.0
    %1112 = vmatpush1.msra.mxu0 0.0
    %1113 = vmatprep.subr.mxu0 0.0
    %1114 = vmatpush1.msra.mxu0 0.0
    %1115 = vmatprep.subr.mxu0 0.0
    %1116 = vmatpush1.msra.mxu0 0.0
    %1117 = vmatprep.subr.mxu0 0.0
    %1118 = vmatpush1.msra.mxu0 0.0
    %1119 = vmatprep.subr.mxu0 0.0
    %1120 = vmatpush1.msra.mxu0 0.0
    %1121 = vmatprep.subr.mxu0 0.0
    %1122 = vmatpush1.msra.mxu0 0.0
    %1123 = vmatprep.subr.mxu0 0.0
    %1124 = vmatpush1.msra.mxu0 0.0
    %1125 = vmatprep.subr.mxu0 0.0
    %1126 = vmatpush1.msra.mxu0 0.0
    %1127 = vmatprep.subr.mxu0 0.0
    %1128 = vmatpush1.msra.mxu0 0.0
    %1129 = vmatprep.subr.mxu0 0.0
    %1130 = vmatpush1.msra.mxu0 0.0
    %1131 = vmatprep.subr.mxu0 0.0
    %1132 = vmatpush1.msra.mxu0 0.0
    %1133 = vmatprep.subr.mxu0 0.0
    %1134 = vmatpush1.msra.mxu0 0.0
    %1135 = vmatprep.subr.mxu0 0.0
    %1136 = vmatpush1.msra.mxu0 0.0
    %1137 = vmatprep.subr.mxu0 0.0
    %1138 = vmatpush1.msra.mxu0 0.0
    %1139 = vmatprep.subr.mxu0 0.0
    %1140 = vmatpush1.msra.mxu0 0.0
    %1141 = vmatprep.subr.mxu0 0.0
    %1142 = vmatpush1.msra.mxu0 0.0
    %1143 = vmatprep.subr.mxu0 0.0
    %1144 = vmatpush1.msra.mxu0 0.0
    %1145 = vmatprep.mubr.f32.mxu0 0.0
    %1146 = vmatmul.mubr.f32.gmra.mrb[0].mxu0 %v1079
    %v1147 = vpop.f32.mrb[0].mxu0
    %v1148 = vadd.f32 0.0, %v1147
    %v1149 = vpop.f32.mrb[0].mxu0
    %1150 = vdwg.mxu0
    %v1152 = vrot.slane %v1148, 1
    %1153 = vrot.lane.b32.xlu0 %v1152, 64
    %v1154 = vpop.permute.xlu0 %1153
    %v1156 = vadd.f32 %v216, %v1154
    %v1157 = vxor.u32 %v1156, 2147483648
    %v1158 = vmul.f32 %v1157, 1.442695
    %v1159 = vpow.pop %v1158
    %v1160 = vadd.f32 %v1159, 1.0
    %v1161 = vrcp.pop %v1160
    %v1162 = vmul.f32 1.0, %v1161
    %v1163 = vtanh.pop %v1156
    %v1165 = vrot.slane %v1077, 1
    %1166 = vrot.lane.b32.xlu0 %v1165, 80
    %v1167 = vpop.permute.xlu0 %1166
    %v1169 = vmul.f32 %v1162, %v1167
    %1171 = vrot.lane.b32.xlu0 %v1163, 96
    %v1172 = vpop.permute.xlu0 %1171
    %v1174 = vmul.f32 %v1162, %v1172
    %1176 = vrot.lane.b32.xlu0 %v1174, 16
    %v1177 = vpop.permute.xlu0 %1176
    %v1179 = vadd.f32 %v1169, %v1177
    %v1180 = vtanh.pop %v1179
    %1182 = vrot.lane.b32.xlu0 %v1180, 32
    %v1183 = vpop.permute.xlu0 %1182
    %v1185 = vmul.f32 %v1162, %v1183
    %v1187 = vrot.slane %v1185, 7
    %1188 = vrot.lane.b32.xlu0 %v1187, 16
    %v1189 = vpop.permute.xlu0 %1188
    %v1190 = vsel %vm225, %v1189, 0
    %1192 = vmatprep.subr.mxu0 0.0
    %1193 = vmatpush1.msra.mxu0 %v221
    %1194 = vmatprep.subr.mxu0 0.0
    %1195 = vmatpush1.msra.mxu0 %v222
    %1196 = vmatprep.subr.mxu0 0.0
    %1197 = vmatpush1.msra.mxu0 0.0
    %1198 = vmatprep.subr.mxu0 0.0
    %1199 = vmatpush1.msra.mxu0 0.0
    %1200 = vmatprep.subr.mxu0 0.0
    %1201 = vmatpush1.msra.mxu0 0.0
    %1202 = vmatprep.subr.mxu0 0.0
    %1203 = vmatpush1.msra.mxu0 0.0
    %1204 = vmatprep.subr.mxu0 0.0
    %1205 = vmatpush1.msra.mxu0 0.0
    %1206 = vmatprep.subr.mxu0 0.0
    %1207 = vmatpush1.msra.mxu0 0.0
    %1208 = vmatprep.subr.mxu0 0.0
    %1209 = vmatpush1.msra.mxu0 0.0
    %1210 = vmatprep.subr.mxu0 0.0
    %1211 = vmatpush1.msra.mxu0 0.0
    %1212 = vmatprep.subr.mxu0 0.0
    %1213 = vmatpush1.msra.mxu0 0.0
    %1214 = vmatprep.subr.mxu0 0.0
    %1215 = vmatpush1.msra.mxu0 0.0
    %1216 = vmatprep.subr.mxu0 0.0
    %1217 = vmatpush1.msra.mxu0 0.0
    %1218 = vmatprep.subr.mxu0 0.0
    %1219 = vmatpush1.msra.mxu0 0.0
    %1220 = vmatprep.subr.mxu0 0.0
    %1221 = vmatpush1.msra.mxu0 0.0
    %1222 = vmatprep.subr.mxu0 0.0
    %1223 = vmatpush1.msra.mxu0 0.0
    %1224 = vmatprep.subr.mxu0 0.0
    %1225 = vmatpush1.msra.mxu0 0.0
    %1226 = vmatprep.subr.mxu0 0.0
    %1227 = vmatpush1.msra.mxu0 0.0
    %1228 = vmatprep.subr.mxu0 0.0
    %1229 = vmatpush1.msra.mxu0 0.0
    %1230 = vmatprep.subr.mxu0 0.0
    %1231 = vmatpush1.msra.mxu0 0.0
    %1232 = vmatprep.subr.mxu0 0.0
    %1233 = vmatpush1.msra.mxu0 0.0
    %1234 = vmatprep.subr.mxu0 0.0
    %1235 = vmatpush1.msra.mxu0 0.0
    %1236 = vmatprep.subr.mxu0 0.0
    %1237 = vmatpush1.msra.mxu0 0.0
    %1238 = vmatprep.subr.mxu0 0.0
    %1239 = vmatpush1.msra.mxu0 0.0
    %1240 = vmatprep.subr.mxu0 0.0
    %1241 = vmatpush1.msra.mxu0 0.0
    %1242 = vmatprep.subr.mxu0 0.0
    %1243 = vmatpush1.msra.mxu0 0.0
    %1244 = vmatprep.subr.mxu0 0.0
    %1245 = vmatpush1.msra.mxu0 0.0
    %1246 = vmatprep.subr.mxu0 0.0
    %1247 = vmatpush1.msra.mxu0 0.0
    %1248 = vmatprep.subr.mxu0 0.0
    %1249 = vmatpush1.msra.mxu0 0.0
    %1250 = vmatprep.subr.mxu0 0.0
    %1251 = vmatpush1.msra.mxu0 0.0
    %1252 = vmatprep.subr.mxu0 0.0
    %1253 = vmatpush1.msra.mxu0 0.0
    %1254 = vmatprep.subr.mxu0 0.0
    %1255 = vmatpush1.msra.mxu0 0.0
    %1256 = vmatprep.mubr.f32.mxu0 0.0
    %1257 = vmatmul.mubr.f32.gmra.mrb[0].mxu0 %v1190
    %v1258 = vpop.f32.mrb[0].mxu0
    %v1259 = vadd.f32 0.0, %v1258
    %v1260 = vpop.f32.mrb[0].mxu0
    %1261 = vdwg.mxu0
    %v1263 = vrot.slane %v1259, 2
    %1264 = vrot.lane.b32.xlu0 %v1263, 64
    %v1265 = vpop.permute.xlu0 %1264
    %v1267 = vadd.f32 %v216, %v1265
    %v1268 = vxor.u32 %v1267, 2147483648
    %v1269 = vmul.f32 %v1268, 1.442695
    %v1270 = vpow.pop %v1269
    %v1271 = vadd.f32 %v1270, 1.0
    %v1272 = vrcp.pop %v1271
    %v1273 = vmul.f32 1.0, %v1272
    %v1274 = vtanh.pop %v1267
    %v1276 = vrot.slane %v1179, 1
    %v1278 = vmul.f32 %v1273, %v1276
    %1280 = vrot.lane.b32.xlu0 %v1274, 96
    %v1281 = vpop.permute.xlu0 %1280
    %v1283 = vmul.f32 %v1273, %v1281
    %1285 = vrot.lane.b32.xlu0 %v1283, 16
    %v1286 = vpop.permute.xlu0 %1285
    %v1288 = vadd.f32 %v1278, %v1286
    %v1289 = vtanh.pop %v1288
    %1291 = vrot.lane.b32.xlu0 %v1289, 32
    %v1292 = vpop.permute.xlu0 %1291
    %v1294 = vmul.f32 %v1273, %v1292
    %v1296 = vrot.slane %v1294, 6
    %1297 = vrot.lane.b32.xlu0 %v1296, 16
    %v1298 = vpop.permute.xlu0 %1297
    %v1299 = vsel %vm225, %v1298, 0
    %1301 = vmatprep.subr.mxu0 0.0
    %1302 = vmatpush1.msra.mxu0 %v221
    %1303 = vmatprep.subr.mxu0 0.0
    %1304 = vmatpush1.msra.mxu0 %v222
    %1305 = vmatprep.subr.mxu0 0.0
    %1306 = vmatpush1.msra.mxu0 0.0
    %1307 = vmatprep.subr.mxu0 0.0
    %1308 = vmatpush1.msra.mxu0 0.0
    %1309 = vmatprep.subr.mxu0 0.0
    %1310 = vmatpush1.msra.mxu0 0.0
    %1311 = vmatprep.subr.mxu0 0.0
    %1312 = vmatpush1.msra.mxu0 0.0
    %1313 = vmatprep.subr.mxu0 0.0
    %1314 = vmatpush1.msra.mxu0 0.0
    %1315 = vmatprep.subr.mxu0 0.0
    %1316 = vmatpush1.msra.mxu0 0.0
    %1317 = vmatprep.subr.mxu0 0.0
    %1318 = vmatpush1.msra.mxu0 0.0
    %1319 = vmatprep.subr.mxu0 0.0
    %1320 = vmatpush1.msra.mxu0 0.0
    %1321 = vmatprep.subr.mxu0 0.0
    %1322 = vmatpush1.msra.mxu0 0.0
    %1323 = vmatprep.subr.mxu0 0.0
    %1324 = vmatpush1.msra.mxu0 0.0
    %1325 = vmatprep.subr.mxu0 0.0
    %1326 = vmatpush1.msra.mxu0 0.0
    %1327 = vmatprep.subr.mxu0 0.0
    %1328 = vmatpush1.msra.mxu0 0.0
    %1329 = vmatprep.subr.mxu0 0.0
    %1330 = vmatpush1.msra.mxu0 0.0
    %1331 = vmatprep.subr.mxu0 0.0
    %1332 = vmatpush1.msra.mxu0 0.0
    %1333 = vmatprep.subr.mxu0 0.0
    %1334 = vmatpush1.msra.mxu0 0.0
    %1335 = vmatprep.subr.mxu0 0.0
    %1336 = vmatpush1.msra.mxu0 0.0
    %1337 = vmatprep.subr.mxu0 0.0
    %1338 = vmatpush1.msra.mxu0 0.0
    %1339 = vmatprep.subr.mxu0 0.0
    %1340 = vmatpush1.msra.mxu0 0.0
    %1341 = vmatprep.subr.mxu0 0.0
    %1342 = vmatpush1.msra.mxu0 0.0
    %1343 = vmatprep.subr.mxu0 0.0
    %1344 = vmatpush1.msra.mxu0 0.0
    %1345 = vmatprep.subr.mxu0 0.0
    %1346 = vmatpush1.msra.mxu0 0.0
    %1347 = vmatprep.subr.mxu0 0.0
    %1348 = vmatpush1.msra.mxu0 0.0
    %1349 = vmatprep.subr.mxu0 0.0
    %1350 = vmatpush1.msra.mxu0 0.0
    %1351 = vmatprep.subr.mxu0 0.0
    %1352 = vmatpush1.msra.mxu0 0.0
    %1353 = vmatprep.subr.mxu0 0.0
    %1354 = vmatpush1.msra.mxu0 0.0
    %1355 = vmatprep.subr.mxu0 0.0
    %1356 = vmatpush1.msra.mxu0 0.0
    %1357 = vmatprep.subr.mxu0 0.0
    %1358 = vmatpush1.msra.mxu0 0.0
    %1359 = vmatprep.subr.mxu0 0.0
    %1360 = vmatpush1.msra.mxu0 0.0
    %1361 = vmatprep.subr.mxu0 0.0
    %1362 = vmatpush1.msra.mxu0 0.0
    %1363 = vmatprep.subr.mxu0 0.0
    %1364 = vmatpush1.msra.mxu0 0.0
    %1365 = vmatprep.mubr.f32.mxu0 0.0
    %1366 = vmatmul.mubr.f32.gmra.mrb[0].mxu0 %v1299
    %v1367 = vpop.f32.mrb[0].mxu0
    %v1368 = vadd.f32 0.0, %v1367
    %v1369 = vpop.f32.mrb[0].mxu0
    %1370 = vdwg.mxu0
    %v1372 = vrot.slane %v1368, 3
    %1373 = vrot.lane.b32.xlu0 %v1372, 64
    %v1374 = vpop.permute.xlu0 %1373
    %v1376 = vadd.f32 %v216, %v1374
    %v1377 = vxor.u32 %v1376, 2147483648
    %v1378 = vmul.f32 %v1377, 1.442695
    %v1379 = vpow.pop %v1378
    %v1380 = vadd.f32 %v1379, 1.0
    %v1381 = vrcp.pop %v1380
    %v1382 = vmul.f32 1.0, %v1381
    %v1383 = vtanh.pop %v1376
    %v1385 = vrot.slane %v1288, 1
    %v1387 = vmul.f32 %v1382, %v1385
    %1389 = vrot.lane.b32.xlu0 %v1383, 96
    %v1390 = vpop.permute.xlu0 %1389
    %v1392 = vmul.f32 %v1382, %v1390
    %1394 = vrot.lane.b32.xlu0 %v1392, 16
    %v1395 = vpop.permute.xlu0 %1394
    %v1397 = vadd.f32 %v1387, %v1395
    %v1398 = vtanh.pop %v1397
    %1400 = vrot.lane.b32.xlu0 %v1398, 32
    %v1401 = vpop.permute.xlu0 %1400
    %v1403 = vmul.f32 %v1382, %v1401
    %v1405 = vrot.slane %v1403, 5
    %1406 = vrot.lane.b32.xlu0 %v1405, 16
    %v1407 = vpop.permute.xlu0 %1406
    %v1408 = vsel %vm225, %v1407, 0
    %1410 = vmatprep.subr.mxu0 0.0
    %1411 = vmatpush1.msra.mxu0 %v221
    %1412 = vmatprep.subr.mxu0 0.0
    %1413 = vmatpush1.msra.mxu0 %v222
    %1414 = vmatprep.subr.mxu0 0.0
    %1415 = vmatpush1.msra.mxu0 0.0
    %1416 = vmatprep.subr.mxu0 0.0
    %1417 = vmatpush1.msra.mxu0 0.0
    %1418 = vmatprep.subr.mxu0 0.0
    %1419 = vmatpush1.msra.mxu0 0.0
    %1420 = vmatprep.subr.mxu0 0.0
    %1421 = vmatpush1.msra.mxu0 0.0
    %1422 = vmatprep.subr.mxu0 0.0
    %1423 = vmatpush1.msra.mxu0 0.0
    %1424 = vmatprep.subr.mxu0 0.0
    %1425 = vmatpush1.msra.mxu0 0.0
    %1426 = vmatprep.subr.mxu0 0.0
    %1427 = vmatpush1.msra.mxu0 0.0
    %1428 = vmatprep.subr.mxu0 0.0
    %1429 = vmatpush1.msra.mxu0 0.0
    %1430 = vmatprep.subr.mxu0 0.0
    %1431 = vmatpush1.msra.mxu0 0.0
    %1432 = vmatprep.subr.mxu0 0.0
    %1433 = vmatpush1.msra.mxu0 0.0
    %1434 = vmatprep.subr.mxu0 0.0
    %1435 = vmatpush1.msra.mxu0 0.0
    %1436 = vmatprep.subr.mxu0 0.0
    %1437 = vmatpush1.msra.mxu0 0.0
    %1438 = vmatprep.subr.mxu0 0.0
    %1439 = vmatpush1.msra.mxu0 0.0
    %1440 = vmatprep.subr.mxu0 0.0
    %1441 = vmatpush1.msra.mxu0 0.0
    %1442 = vmatprep.subr.mxu0 0.0
    %1443 = vmatpush1.msra.mxu0 0.0
    %1444 = vmatprep.subr.mxu0 0.0
    %1445 = vmatpush1.msra.mxu0 0.0
    %1446 = vmatprep.subr.mxu0 0.0
    %1447 = vmatpush1.msra.mxu0 0.0
    %1448 = vmatprep.subr.mxu0 0.0
    %1449 = vmatpush1.msra.mxu0 0.0
    %1450 = vmatprep.subr.mxu0 0.0
    %1451 = vmatpush1.msra.mxu0 0.0
    %1452 = vmatprep.subr.mxu0 0.0
    %1453 = vmatpush1.msra.mxu0 0.0
    %1454 = vmatprep.subr.mxu0 0.0
    %1455 = vmatpush1.msra.mxu0 0.0
    %1456 = vmatprep.subr.mxu0 0.0
    %1457 = vmatpush1.msra.mxu0 0.0
    %1458 = vmatprep.subr.mxu0 0.0
    %1459 = vmatpush1.msra.mxu0 0.0
    %1460 = vmatprep.subr.mxu0 0.0
    %1461 = vmatpush1.msra.mxu0 0.0
    %1462 = vmatprep.subr.mxu0 0.0
    %1463 = vmatpush1.msra.mxu0 0.0
    %1464 = vmatprep.subr.mxu0 0.0
    %1465 = vmatpush1.msra.mxu0 0.0
    %1466 = vmatprep.subr.mxu0 0.0
    %1467 = vmatpush1.msra.mxu0 0.0
    %1468 = vmatprep.subr.mxu0 0.0
    %1469 = vmatpush1.msra.mxu0 0.0
    %1470 = vmatprep.subr.mxu0 0.0
    %1471 = vmatpush1.msra.mxu0 0.0
    %1472 = vmatprep.subr.mxu0 0.0
    %1473 = vmatpush1.msra.mxu0 0.0
    %1474 = vmatprep.mubr.f32.mxu0 0.0
    %1475 = vmatmul.mubr.f32.gmra.mrb[0].mxu0 %v1408
    %v1476 = vpop.f32.mrb[0].mxu0
    %v1477 = vadd.f32 0.0, %v1476
    %v1478 = vpop.f32.mrb[0].mxu0
    %1479 = vdwg.mxu0
    %v1481 = vrot.slane %v1477, 4
    %1482 = vrot.lane.b32.xlu0 %v1481, 64
    %v1483 = vpop.permute.xlu0 %1482
    %v1485 = vadd.f32 %v216, %v1483
    %v1486 = vxor.u32 %v1485, 2147483648
    %v1487 = vmul.f32 %v1486, 1.442695
    %v1488 = vpow.pop %v1487
    %v1489 = vadd.f32 %v1488, 1.0
    %v1490 = vrcp.pop %v1489
    %v1491 = vmul.f32 1.0, %v1490
    %v1492 = vtanh.pop %v1485
    %v1494 = vrot.slane %v1397, 1
    %v1496 = vmul.f32 %v1491, %v1494
    %1498 = vrot.lane.b32.xlu0 %v1492, 96
    %v1499 = vpop.permute.xlu0 %1498
    %v1501 = vmul.f32 %v1491, %v1499
    %1503 = vrot.lane.b32.xlu0 %v1501, 16
    %v1504 = vpop.permute.xlu0 %1503
    %v1506 = vadd.f32 %v1496, %v1504
    %v1507 = vtanh.pop %v1506
    %1509 = vrot.lane.b32.xlu0 %v1507, 32
    %v1510 = vpop.permute.xlu0 %1509
    %v1512 = vmul.f32 %v1491, %v1510
    %v1514 = vrot.slane %v1512, 4
    %1515 = vrot.lane.b32.xlu0 %v1514, 16
    %v1516 = vpop.permute.xlu0 %1515
    %v1517 = vsel %vm225, %v1516, 0
    %1519 = vmatprep.subr.mxu0 0.0
    %1520 = vmatpush1.msra.mxu0 %v221
    %1521 = vmatprep.subr.mxu0 0.0
    %1522 = vmatpush1.msra.mxu0 %v222
    %1523 = vmatprep.subr.mxu0 0.0
    %1524 = vmatpush1.msra.mxu0 0.0
    %1525 = vmatprep.subr.mxu0 0.0
    %1526 = vmatpush1.msra.mxu0 0.0
    %1527 = vmatprep.subr.mxu0 0.0
    %1528 = vmatpush1.msra.mxu0 0.0
    %1529 = vmatprep.subr.mxu0 0.0
    %1530 = vmatpush1.msra.mxu0 0.0
    %1531 = vmatprep.subr.mxu0 0.0
    %1532 = vmatpush1.msra.mxu0 0.0
    %1533 = vmatprep.subr.mxu0 0.0
    %1534 = vmatpush1.msra.mxu0 0.0
    %1535 = vmatprep.subr.mxu0 0.0
    %1536 = vmatpush1.msra.mxu0 0.0
    %1537 = vmatprep.subr.mxu0 0.0
    %1538 = vmatpush1.msra.mxu0 0.0
    %1539 = vmatprep.subr.mxu0 0.0
    %1540 = vmatpush1.msra.mxu0 0.0
    %1541 = vmatprep.subr.mxu0 0.0
    %1542 = vmatpush1.msra.mxu0 0.0
    %1543 = vmatprep.subr.mxu0 0.0
    %1544 = vmatpush1.msra.mxu0 0.0
    %1545 = vmatprep.subr.mxu0 0.0
    %1546 = vmatpush1.msra.mxu0 0.0
    %1547 = vmatprep.subr.mxu0 0.0
    %1548 = vmatpush1.msra.mxu0 0.0
    %1549 = vmatprep.subr.mxu0 0.0
    %1550 = vmatpush1.msra.mxu0 0.0
    %1551 = vmatprep.subr.mxu0 0.0
    %1552 = vmatpush1.msra.mxu0 0.0
    %1553 = vmatprep.subr.mxu0 0.0
    %1554 = vmatpush1.msra.mxu0 0.0
    %1555 = vmatprep.subr.mxu0 0.0
    %1556 = vmatpush1.msra.mxu0 0.0
    %1557 = vmatprep.subr.mxu0 0.0
    %1558 = vmatpush1.msra.mxu0 0.0
    %1559 = vmatprep.subr.mxu0 0.0
    %1560 = vmatpush1.msra.mxu0 0.0
    %1561 = vmatprep.subr.mxu0 0.0
    %1562 = vmatpush1.msra.mxu0 0.0
    %1563 = vmatprep.subr.mxu0 0.0
    %1564 = vmatpush1.msra.mxu0 0.0
    %1565 = vmatprep.subr.mxu0 0.0
    %1566 = vmatpush1.msra.mxu0 0.0
    %1567 = vmatprep.subr.mxu0 0.0
    %1568 = vmatpush1.msra.mxu0 0.0
    %1569 = vmatprep.subr.mxu0 0.0
    %1570 = vmatpush1.msra.mxu0 0.0
    %1571 = vmatprep.subr.mxu0 0.0
    %1572 = vmatpush1.msra.mxu0 0.0
    %1573 = vmatprep.subr.mxu0 0.0
    %1574 = vmatpush1.msra.mxu0 0.0
    %1575 = vmatprep.subr.mxu0 0.0
    %1576 = vmatpush1.msra.mxu0 0.0
    %1577 = vmatprep.subr.mxu0 0.0
    %1578 = vmatpush1.msra.mxu0 0.0
    %1579 = vmatprep.subr.mxu0 0.0
    %1580 = vmatpush1.msra.mxu0 0.0
    %1581 = vmatprep.subr.mxu0 0.0
    %1582 = vmatpush1.msra.mxu0 0.0
    %1583 = vmatprep.mubr.f32.mxu0 0.0
    %1584 = vmatmul.mubr.f32.gmra.mrb[0].mxu0 %v1517
    %v1585 = vpop.f32.mrb[0].mxu0
    %v1586 = vadd.f32 0.0, %v1585
    %v1587 = vpop.f32.mrb[0].mxu0
    %1588 = vdwg.mxu0
    %v1590 = vrot.slane %v1586, 5
    %1591 = vrot.lane.b32.xlu0 %v1590, 64
    %v1592 = vpop.permute.xlu0 %1591
    %v1594 = vadd.f32 %v216, %v1592
    %v1595 = vxor.u32 %v1594, 2147483648
    %v1596 = vmul.f32 %v1595, 1.442695
    %v1597 = vpow.pop %v1596
    %v1598 = vadd.f32 %v1597, 1.0
    %v1599 = vrcp.pop %v1598
    %v1600 = vmul.f32 1.0, %v1599
    %v1601 = vtanh.pop %v1594
    %v1603 = vrot.slane %v1506, 1
    %v1605 = vmul.f32 %v1600, %v1603
    %1607 = vrot.lane.b32.xlu0 %v1601, 96
    %v1608 = vpop.permute.xlu0 %1607
    %v1610 = vmul.f32 %v1600, %v1608
    %1612 = vrot.lane.b32.xlu0 %v1610, 16
    %v1613 = vpop.permute.xlu0 %1612
    %v1615 = vadd.f32 %v1605, %v1613
    %v1616 = vtanh.pop %v1615
    %1618 = vrot.lane.b32.xlu0 %v1616, 32
    %v1619 = vpop.permute.xlu0 %1618
    %v1621 = vmul.f32 %v1600, %v1619
    %v1623 = vrot.slane %v1621, 3
    %1624 = vrot.lane.b32.xlu0 %v1623, 16
    %v1625 = vpop.permute.xlu0 %1624
    %v1626 = vsel %vm225, %v1625, 0
    %1628 = vmatprep.subr.mxu0 0.0
    %1629 = vmatpush1.msra.mxu0 %v221
    %1630 = vmatprep.subr.mxu0 0.0
    %1631 = vmatpush1.msra.mxu0 %v222
    %1632 = vmatprep.subr.mxu0 0.0
    %1633 = vmatpush1.msra.mxu0 0.0
    %1634 = vmatprep.subr.mxu0 0.0
    %1635 = vmatpush1.msra.mxu0 0.0
    %1636 = vmatprep.subr.mxu0 0.0
    %1637 = vmatpush1.msra.mxu0 0.0
    %1638 = vmatprep.subr.mxu0 0.0
    %1639 = vmatpush1.msra.mxu0 0.0
    %1640 = vmatprep.subr.mxu0 0.0
    %1641 = vmatpush1.msra.mxu0 0.0
    %1642 = vmatprep.subr.mxu0 0.0
    %1643 = vmatpush1.msra.mxu0 0.0
    %1644 = vmatprep.subr.mxu0 0.0
    %1645 = vmatpush1.msra.mxu0 0.0
    %1646 = vmatprep.subr.mxu0 0.0
    %1647 = vmatpush1.msra.mxu0 0.0
    %1648 = vmatprep.subr.mxu0 0.0
    %1649 = vmatpush1.msra.mxu0 0.0
    %1650 = vmatprep.subr.mxu0 0.0
    %1651 = vmatpush1.msra.mxu0 0.0
    %1652 = vmatprep.subr.mxu0 0.0
    %1653 = vmatpush1.msra.mxu0 0.0
    %1654 = vmatprep.subr.mxu0 0.0
    %1655 = vmatpush1.msra.mxu0 0.0
    %1656 = vmatprep.subr.mxu0 0.0
    %1657 = vmatpush1.msra.mxu0 0.0
    %1658 = vmatprep.subr.mxu0 0.0
    %1659 = vmatpush1.msra.mxu0 0.0
    %1660 = vmatprep.subr.mxu0 0.0
    %1661 = vmatpush1.msra.mxu0 0.0
    %1662 = vmatprep.subr.mxu0 0.0
    %1663 = vmatpush1.msra.mxu0 0.0
    %1664 = vmatprep.subr.mxu0 0.0
    %1665 = vmatpush1.msra.mxu0 0.0
    %1666 = vmatprep.subr.mxu0 0.0
    %1667 = vmatpush1.msra.mxu0 0.0
    %1668 = vmatprep.subr.mxu0 0.0
    %1669 = vmatpush1.msra.mxu0 0.0
    %1670 = vmatprep.subr.mxu0 0.0
    %1671 = vmatpush1.msra.mxu0 0.0
    %1672 = vmatprep.subr.mxu0 0.0
    %1673 = vmatpush1.msra.mxu0 0.0
    %1674 = vmatprep.subr.mxu0 0.0
    %1675 = vmatpush1.msra.mxu0 0.0
    %1676 = vmatprep.subr.mxu0 0.0
    %1677 = vmatpush1.msra.mxu0 0.0
    %1678 = vmatprep.subr.mxu0 0.0
    %1679 = vmatpush1.msra.mxu0 0.0
    %1680 = vmatprep.subr.mxu0 0.0
    %1681 = vmatpush1.msra.mxu0 0.0
    %1682 = vmatprep.subr.mxu0 0.0
    %1683 = vmatpush1.msra.mxu0 0.0
    %1684 = vmatprep.subr.mxu0 0.0
    %1685 = vmatpush1.msra.mxu0 0.0
    %1686 = vmatprep.subr.mxu0 0.0
    %1687 = vmatpush1.msra.mxu0 0.0
    %1688 = vmatprep.subr.mxu0 0.0
    %1689 = vmatpush1.msra.mxu0 0.0
    %1690 = vmatprep.subr.mxu0 0.0
    %1691 = vmatpush1.msra.mxu0 0.0
    %1692 = vmatprep.mubr.f32.mxu0 0.0
    %1693 = vmatmul.mubr.f32.gmra.mrb[0].mxu0 %v1626
    %v1694 = vpop.f32.mrb[0].mxu0
    %v1695 = vadd.f32 0.0, %v1694
    %v1696 = vpop.f32.mrb[0].mxu0
    %1697 = vdwg.mxu0
    %v1699 = vrot.slane %v1695, 6
    %1700 = vrot.lane.b32.xlu0 %v1699, 64
    %v1701 = vpop.permute.xlu0 %1700
    %v1703 = vadd.f32 %v216, %v1701
    %v1704 = vxor.u32 %v1703, 2147483648
    %v1705 = vmul.f32 %v1704, 1.442695
    %v1706 = vpow.pop %v1705
    %v1707 = vadd.f32 %v1706, 1.0
    %v1708 = vrcp.pop %v1707
    %v1709 = vmul.f32 1.0, %v1708
    %v1710 = vtanh.pop %v1703
    %v1712 = vrot.slane %v1615, 1
    %v1714 = vmul.f32 %v1709, %v1712
    %1716 = vrot.lane.b32.xlu0 %v1710, 96
    %v1717 = vpop.permute.xlu0 %1716
    %v1719 = vmul.f32 %v1709, %v1717
    %1721 = vrot.lane.b32.xlu0 %v1719, 16
    %v1722 = vpop.permute.xlu0 %1721
    %v1724 = vadd.f32 %v1714, %v1722
    %v1725 = vtanh.pop %v1724
    %1727 = vrot.lane.b32.xlu0 %v1725, 32
    %v1728 = vpop.permute.xlu0 %1727
    %v1730 = vmul.f32 %v1709, %v1728
    %v1732 = vrot.slane %v1730, 2
    %1733 = vrot.lane.b32.xlu0 %v1732, 16
    %v1734 = vpop.permute.xlu0 %1733
    %v1735 = vsel %vm225, %v1734, 0
    %1737 = vmatprep.subr.mxu0 0.0
    %1738 = vmatpush1.msra.mxu0 %v221
    %1739 = vmatprep.subr.mxu0 0.0
    %1740 = vmatpush1.msra.mxu0 %v222
    %1741 = vmatprep.subr.mxu0 0.0
    %1742 = vmatpush1.msra.mxu0 0.0
    %1743 = vmatprep.subr.mxu0 0.0
    %1744 = vmatpush1.msra.mxu0 0.0
    %1745 = vmatprep.subr.mxu0 0.0
    %1746 = vmatpush1.msra.mxu0 0.0
    %1747 = vmatprep.subr.mxu0 0.0
    %1748 = vmatpush1.msra.mxu0 0.0
    %1749 = vmatprep.subr.mxu0 0.0
    %1750 = vmatpush1.msra.mxu0 0.0
    %1751 = vmatprep.subr.mxu0 0.0
    %1752 = vmatpush1.msra.mxu0 0.0
    %1753 = vmatprep.subr.mxu0 0.0
    %1754 = vmatpush1.msra.mxu0 0.0
    %1755 = vmatprep.subr.mxu0 0.0
    %1756 = vmatpush1.msra.mxu0 0.0
    %1757 = vmatprep.subr.mxu0 0.0
    %1758 = vmatpush1.msra.mxu0 0.0
    %1759 = vmatprep.subr.mxu0 0.0
    %1760 = vmatpush1.msra.mxu0 0.0
    %1761 = vmatprep.subr.mxu0 0.0
    %1762 = vmatpush1.msra.mxu0 0.0
    %1763 = vmatprep.subr.mxu0 0.0
    %1764 = vmatpush1.msra.mxu0 0.0
    %1765 = vmatprep.subr.mxu0 0.0
    %1766 = vmatpush1.msra.mxu0 0.0
    %1767 = vmatprep.subr.mxu0 0.0
    %1768 = vmatpush1.msra.mxu0 0.0
    %1769 = vmatprep.subr.mxu0 0.0
    %1770 = vmatpush1.msra.mxu0 0.0
    %1771 = vmatprep.subr.mxu0 0.0
    %1772 = vmatpush1.msra.mxu0 0.0
    %1773 = vmatprep.subr.mxu0 0.0
    %1774 = vmatpush1.msra.mxu0 0.0
    %1775 = vmatprep.subr.mxu0 0.0
    %1776 = vmatpush1.msra.mxu0 0.0
    %1777 = vmatprep.subr.mxu0 0.0
    %1778 = vmatpush1.msra.mxu0 0.0
    %1779 = vmatprep.subr.mxu0 0.0
    %1780 = vmatpush1.msra.mxu0 0.0
    %1781 = vmatprep.subr.mxu0 0.0
    %1782 = vmatpush1.msra.mxu0 0.0
    %1783 = vmatprep.subr.mxu0 0.0
    %1784 = vmatpush1.msra.mxu0 0.0
    %1785 = vmatprep.subr.mxu0 0.0
    %1786 = vmatpush1.msra.mxu0 0.0
    %1787 = vmatprep.subr.mxu0 0.0
    %1788 = vmatpush1.msra.mxu0 0.0
    %1789 = vmatprep.subr.mxu0 0.0
    %1790 = vmatpush1.msra.mxu0 0.0
    %1791 = vmatprep.subr.mxu0 0.0
    %1792 = vmatpush1.msra.mxu0 0.0
    %1793 = vmatprep.subr.mxu0 0.0
    %1794 = vmatpush1.msra.mxu0 0.0
    %1795 = vmatprep.subr.mxu0 0.0
    %1796 = vmatpush1.msra.mxu0 0.0
    %1797 = vmatprep.subr.mxu0 0.0
    %1798 = vmatpush1.msra.mxu0 0.0
    %1799 = vmatprep.subr.mxu0 0.0
    %1800 = vmatpush1.msra.mxu0 0.0
    %1801 = vmatprep.mubr.f32.mxu0 0.0
    %1802 = vmatmul.mubr.f32.gmra.mrb[0].mxu0 %v1735
    %v1803 = vpop.f32.mrb[0].mxu0
    %v1804 = vadd.f32 0.0, %v1803
    %v1805 = vpop.f32.mrb[0].mxu0
    %1806 = vdwg.mxu0
    %v1808 = vrot.slane %v1804, 7
    %1809 = vrot.lane.b32.xlu0 %v1808, 64
    %v1810 = vpop.permute.xlu0 %1809
    %v1812 = vadd.f32 %v216, %v1810
    %v1813 = vxor.u32 %v1812, 2147483648
    %v1814 = vmul.f32 %v1813, 1.442695
    %v1815 = vpow.pop %v1814
    %v1816 = vadd.f32 %v1815, 1.0
    %v1817 = vrcp.pop %v1816
    %v1818 = vmul.f32 1.0, %v1817
    %v1819 = vtanh.pop %v1812
    %v1821 = vrot.slane %v1724, 1
    %v1823 = vmul.f32 %v1818, %v1821
    %1825 = vrot.lane.b32.xlu0 %v1819, 96
    %v1826 = vpop.permute.xlu0 %1825
    %v1828 = vmul.f32 %v1818, %v1826
    %1830 = vrot.lane.b32.xlu0 %v1828, 16
    %v1831 = vpop.permute.xlu0 %1830
    %v1833 = vadd.f32 %v1823, %v1831
    %v1834 = vtanh.pop %v1833
    %1836 = vrot.lane.b32.xlu0 %v1834, 32
    %v1837 = vpop.permute.xlu0 %1836
    %v1839 = vmul.f32 %v1818, %v1837
    %v1841 = vrot.slane %v1839, 1
    %1842 = vrot.lane.b32.xlu0 %v1841, 16
    %v1843 = vpop.permute.xlu0 %1842
    %v1844 = vsel %vm225, %v1843, 0
    %1846 = vmatprep.subr.mxu0 0.0
    %1847 = vmatpush1.msra.mxu0 %v221
    %1848 = vmatprep.subr.mxu0 0.0
    %1849 = vmatpush1.msra.mxu0 %v222
    %1850 = vmatprep.subr.mxu0 0.0
    %1851 = vmatpush1.msra.mxu0 0.0
    %1852 = vmatprep.subr.mxu0 0.0
    %1853 = vmatpush1.msra.mxu0 0.0
    %1854 = vmatprep.subr.mxu0 0.0
    %1855 = vmatpush1.msra.mxu0 0.0
    %1856 = vmatprep.subr.mxu0 0.0
    %1857 = vmatpush1.msra.mxu0 0.0
    %1858 = vmatprep.subr.mxu0 0.0
    %1859 = vmatpush1.msra.mxu0 0.0
    %1860 = vmatprep.subr.mxu0 0.0
    %1861 = vmatpush1.msra.mxu0 0.0
    %1862 = vmatprep.subr.mxu0 0.0
    %1863 = vmatpush1.msra.mxu0 0.0
    %1864 = vmatprep.subr.mxu0 0.0
    %1865 = vmatpush1.msra.mxu0 0.0
    %1866 = vmatprep.subr.mxu0 0.0
    %1867 = vmatpush1.msra.mxu0 0.0
    %1868 = vmatprep.subr.mxu0 0.0
    %1869 = vmatpush1.msra.mxu0 0.0
    %1870 = vmatprep.subr.mxu0 0.0
    %1871 = vmatpush1.msra.mxu0 0.0
    %1872 = vmatprep.subr.mxu0 0.0
    %1873 = vmatpush1.msra.mxu0 0.0
    %1874 = vmatprep.subr.mxu0 0.0
    %1875 = vmatpush1.msra.mxu0 0.0
    %1876 = vmatprep.subr.mxu0 0.0
    %1877 = vmatpush1.msra.mxu0 0.0
    %1878 = vmatprep.subr.mxu0 0.0
    %1879 = vmatpush1.msra.mxu0 0.0
    %1880 = vmatprep.subr.mxu0 0.0
    %1881 = vmatpush1.msra.mxu0 0.0
    %1882 = vmatprep.subr.mxu0 0.0
    %1883 = vmatpush1.msra.mxu0 0.0
    %1884 = vmatprep.subr.mxu0 0.0
    %1885 = vmatpush1.msra.mxu0 0.0
    %1886 = vmatprep.subr.mxu0 0.0
    %1887 = vmatpush1.msra.mxu0 0.0
    %1888 = vmatprep.subr.mxu0 0.0
    %1889 = vmatpush1.msra.mxu0 0.0
    %1890 = vmatprep.subr.mxu0 0.0
    %1891 = vmatpush1.msra.mxu0 0.0
    %1892 = vmatprep.subr.mxu0 0.0
    %1893 = vmatpush1.msra.mxu0 0.0
    %1894 = vmatprep.subr.mxu0 0.0
    %1895 = vmatpush1.msra.mxu0 0.0
    %1896 = vmatprep.subr.mxu0 0.0
    %1897 = vmatpush1.msra.mxu0 0.0
    %1898 = vmatprep.subr.mxu0 0.0
    %1899 = vmatpush1.msra.mxu0 0.0
    %1900 = vmatprep.subr.mxu0 0.0
    %1901 = vmatpush1.msra.mxu0 0.0
    %1902 = vmatprep.subr.mxu0 0.0
    %1903 = vmatpush1.msra.mxu0 0.0
    %1904 = vmatprep.subr.mxu0 0.0
    %1905 = vmatpush1.msra.mxu0 0.0
    %1906 = vmatprep.subr.mxu0 0.0
    %1907 = vmatpush1.msra.mxu0 0.0
    %1908 = vmatprep.subr.mxu0 0.0
    %1909 = vmatpush1.msra.mxu0 0.0
    %1910 = vmatprep.mubr.f32.mxu0 0.0
    %1911 = vmatmul.mubr.f32.gmra.mrb[0].mxu0 %v1844
    %v1912 = vpop.f32.mrb[0].mxu0
    %v1913 = vadd.f32 0.0, %v1912
    %v1914 = vpop.f32.mrb[0].mxu0
    %1915 = vdwg.mxu0
    %1917 = vrot.lane.b32.xlu0 %v1913, 64
    %v1918 = vpop.permute.xlu0 %1917
    %v1920 = vadd.f32 %v216, %v1918
    %v1921 = vxor.u32 %v1920, 2147483648
    %v1922 = vmul.f32 %v1921, 1.442695
    %v1923 = vpow.pop %v1922
    %v1924 = vadd.f32 %v1923, 1.0
    %v1925 = vrcp.pop %v1924
    %v1926 = vmul.f32 1.0, %v1925
    %v1927 = vtanh.pop %v1920
    %v1929 = vrot.slane %v1833, 1
    %v1931 = vmul.f32 %v1926, %v1929
    %1933 = vrot.lane.b32.xlu0 %v1927, 96
    %v1934 = vpop.permute.xlu0 %1933
    %v1936 = vmul.f32 %v1926, %v1934
    %1938 = vrot.lane.b32.xlu0 %v1936, 16
    %v1939 = vpop.permute.xlu0 %1938
    %v1941 = vadd.f32 %v1931, %v1939
    %v1942 = vtanh.pop %v1941
    %1944 = vrot.lane.b32.xlu0 %v1942, 32
    %v1945 = vpop.permute.xlu0 %1944
    %v1947 = vmul.f32 %v1926, %v1945
    %vm1948 = vcmask 1040384
    %v1949 = vsel %vm1948, %v327, %v433
    %vm1950 = vcmask 1041408
    %v1951 = vsel %vm1950, %v1949, %v540
    %vm1952 = vcmask 1042432
    %v1953 = vsel %vm1952, %v1951, %v647
    %vm1954 = vcmask 1043456
    %v1955 = vsel %vm1954, %v1953, %v754
    %vm1956 = vcmask 1044480
    %v1957 = vsel %vm1956, %v1955, %v861
    %vm1958 = vcmask 1045504
    %v1959 = vsel %vm1958, %v1957, %v968
    %vm1960 = vcmask 1046528
    %v1961 = vsel %vm1960, %v1959, %v1075
    %v1962 = vsel %vm1948, %v1947, %v1839
    %v1963 = vsel %vm1950, %v1962, %v1730
    %v1964 = vsel %vm1952, %v1963, %v1621
    %v1965 = vsel %vm1954, %v1964, %v1512
    %v1966 = vsel %vm1956, %v1965, %v1403
    %v1967 = vsel %vm1958, %v1966, %v1294
    %v1968 = vsel %vm1960, %v1967, %v1185
    %1970 = vrot.lane.b32.xlu0 %v1961, 80
    %v1971 = vpop.permute.xlu0 %1970
    %1974 = vrot.lane.b32.xlu0 %v1968, 32
    %v1975 = vpop.permute.xlu0 %1974
    %v1977 = vsel %vm225, %v1971, %v1975
    %v1978 = vld [vmem:[#allocation10] sm:$0xff]
    %v1979 = vld [vmem:[#allocation10 + $0x8] sm:$0xff]
    %v1980 = vld [vmem:[#allocation10 + $0x10] sm:$0xff]
    %v1981 = vld [vmem:[#allocation10 + $0x18] sm:$0xff]
    %v1982 = vld [vmem:[%s8] sm:$0x1]
    %v1984 = vlaneseq
    %v1985 = vshrl.u32 %v1984, 7
    %v1986 = vsub.s32 0, %v1985
    %v1987 = vrot.slane %v1982, %v1986
    %vm1989 = vcmask 261120
    %v1991 = vsel %vm1989, %v1977, 0
    %1993 = vmatprep.subr.mxu0 0.0
    %1994 = vmatpush1.msra.mxu0 %v1978
    %1995 = vmatprep.subr.mxu0 0.0
    %1996 = vmatpush1.msra.mxu0 %v1979
    %1997 = vmatprep.subr.mxu0 0.0
    %1998 = vmatpush1.msra.mxu0 %v1980
    %1999 = vmatprep.subr.mxu0 0.0
    %2000 = vmatpush1.msra.mxu0 %v1981
    %2001 = vmatprep.subr.mxu0 0.0
    %2002 = vmatpush1.msra.mxu0 0.0
    %2003 = vmatprep.subr.mxu0 0.0
    %2004 = vmatpush1.msra.mxu0 0.0
    %2005 = vmatprep.subr.mxu0 0.0
    %2006 = vmatpush1.msra.mxu0 0.0
    %2007 = vmatprep.subr.mxu0 0.0
    %2008 = vmatpush1.msra.mxu0 0.0
    %2009 = vmatprep.subr.mxu0 0.0
    %2010 = vmatpush1.msra.mxu0 0.0
    %2011 = vmatprep.subr.mxu0 0.0
    %2012 = vmatpush1.msra.mxu0 0.0
    %2013 = vmatprep.subr.mxu0 0.0
    %2014 = vmatpush1.msra.mxu0 0.0
    %2015 = vmatprep.subr.mxu0 0.0
    %2016 = vmatpush1.msra.mxu0 0.0
    %2017 = vmatprep.subr.mxu0 0.0
    %2018 = vmatpush1.msra.mxu0 0.0
    %2019 = vmatprep.subr.mxu0 0.0
    %2020 = vmatpush1.msra.mxu0 0.0
    %2021 = vmatprep.subr.mxu0 0.0
    %2022 = vmatpush1.msra.mxu0 0.0
    %2023 = vmatprep.subr.mxu0 0.0
    %2024 = vmatpush1.msra.mxu0 0.0
    %2025 = vmatprep.subr.mxu0 0.0
    %2026 = vmatpush1.msra.mxu0 0.0
    %2027 = vmatprep.subr.mxu0 0.0
    %2028 = vmatpush1.msra.mxu0 0.0
    %2029 = vmatprep.subr.mxu0 0.0
    %2030 = vmatpush1.msra.mxu0 0.0
    %2031 = vmatprep.subr.mxu0 0.0
    %2032 = vmatpush1.msra.mxu0 0.0
    %2033 = vmatprep.subr.mxu0 0.0
    %2034 = vmatpush1.msra.mxu0 0.0
    %2035 = vmatprep.subr.mxu0 0.0
    %2036 = vmatpush1.msra.mxu0 0.0
    %2037 = vmatprep.subr.mxu0 0.0
    %2038 = vmatpush1.msra.mxu0 0.0
    %2039 = vmatprep.subr.mxu0 0.0
    %2040 = vmatpush1.msra.mxu0 0.0
    %2041 = vmatprep.subr.mxu0 0.0
    %2042 = vmatpush1.msra.mxu0 0.0
    %2043 = vmatprep.subr.mxu0 0.0
    %2044 = vmatpush1.msra.mxu0 0.0
    %2045 = vmatprep.subr.mxu0 0.0
    %2046 = vmatpush1.msra.mxu0 0.0
    %2047 = vmatprep.subr.mxu0 0.0
    %2048 = vmatpush1.msra.mxu0 0.0
    %2049 = vmatprep.subr.mxu0 0.0
    %2050 = vmatpush1.msra.mxu0 0.0
    %2051 = vmatprep.subr.mxu0 0.0
    %2052 = vmatpush1.msra.mxu0 0.0
    %2053 = vmatprep.subr.mxu0 0.0
    %2054 = vmatpush1.msra.mxu0 0.0
    %2055 = vmatprep.subr.mxu0 0.0
    %2056 = vmatpush1.msra.mxu0 0.0
    %2057 = vmatprep.mubr.f32.mxu0 0.0
    %2058 = vmatmul.mubr.f32.gmra.mrb[0].mxu0 %v1991
    %v2059 = vpop.f32.mrb[0].mxu0
    %v2060 = vadd.f32 %v1987, %v2059
    %v2061 = vpop.f32.mrb[0].mxu0
    %2062 = vdwg.mxu0
    %v2063 = vld [vmem:[%s7] sm:$0xff]
    %v2064 = vld [vmem:[%s7 + $0x8] sm:$0xff]
    %v2065 = vld [vmem:[%s7 + $0x10] sm:$0xff]
    %v2066 = vld [vmem:[%s7 + $0x18] sm:$0xff]
    %v2067 = vld [vmem:[#allocation2 + $0x2] sm:$0x1]
    %v2068 = vld [vmem:[#allocation5 + $0x2] sm:$0x1]
    %v2070 = vsel %vm225, %v2067, 0
    %2072 = vmatprep.subr.mxu0 0.0
    %2073 = vmatpush1.msra.mxu0 %v2063
    %2074 = vmatprep.subr.mxu0 0.0
    %2075 = vmatpush1.msra.mxu0 %v2064
    %2076 = vmatprep.subr.mxu0 0.0
    %2077 = vmatpush1.msra.mxu0 0.0
    %2078 = vmatprep.subr.mxu0 0.0
    %2079 = vmatpush1.msra.mxu0 0.0
    %2080 = vmatprep.subr.mxu0 0.0
    %2081 = vmatpush1.msra.mxu0 0.0
    %2082 = vmatprep.subr.mxu0 0.0
    %2083 = vmatpush1.msra.mxu0 0.0
    %2084 = vmatprep.subr.mxu0 0.0
    %2085 = vmatpush1.msra.mxu0 0.0
    %2086 = vmatprep.subr.mxu0 0.0
    %2087 = vmatpush1.msra.mxu0 0.0
    %2088 = vmatprep.subr.mxu0 0.0
    %2089 = vmatpush1.msra.mxu0 0.0
    %2090 = vmatprep.subr.mxu0 0.0
    %2091 = vmatpush1.msra.mxu0 0.0
    %2092 = vmatprep.subr.mxu0 0.0
    %2093 = vmatpush1.msra.mxu0 0.0
    %2094 = vmatprep.subr.mxu0 0.0
    %2095 = vmatpush1.msra.mxu0 0.0
    %2096 = vmatprep.subr.mxu0 0.0
    %2097 = vmatpush1.msra.mxu0 0.0
    %2098 = vmatprep.subr.mxu0 0.0
    %2099 = vmatpush1.msra.mxu0 0.0
    %2100 = vmatprep.subr.mxu0 0.0
    %2101 = vmatpush1.msra.mxu0 0.0
    %2102 = vmatprep.subr.mxu0 0.0
    %2103 = vmatpush1.msra.mxu0 0.0
    %2104 = vmatprep.subr.mxu0 0.0
    %2105 = vmatpush1.msra.mxu0 0.0
    %2106 = vmatprep.subr.mxu0 0.0
    %2107 = vmatpush1.msra.mxu0 0.0
    %2108 = vmatprep.subr.mxu0 0.0
    %2109 = vmatpush1.msra.mxu0 0.0
    %2110 = vmatprep.subr.mxu0 0.0
    %2111 = vmatpush1.msra.mxu0 0.0
    %2112 = vmatprep.subr.mxu0 0.0
    %2113 = vmatpush1.msra.mxu0 0.0
    %2114 = vmatprep.subr.mxu0 0.0
    %2115 = vmatpush1.msra.mxu0 0.0
    %2116 = vmatprep.subr.mxu0 0.0
    %2117 = vmatpush1.msra.mxu0 0.0
    %2118 = vmatprep.subr.mxu0 0.0
    %2119 = vmatpush1.msra.mxu0 0.0
    %2120 = vmatprep.subr.mxu0 0.0
    %2121 = vmatpush1.msra.mxu0 0.0
    %2122 = vmatprep.subr.mxu0 0.0
    %2123 = vmatpush1.msra.mxu0 0.0
    %2124 = vmatprep.subr.mxu0 0.0
    %2125 = vmatpush1.msra.mxu0 0.0
    %2126 = vmatprep.subr.mxu0 0.0
    %2127 = vmatpush1.msra.mxu0 0.0
    %2128 = vmatprep.subr.mxu0 0.0
    %2129 = vmatpush1.msra.mxu0 0.0
    %2130 = vmatprep.subr.mxu0 0.0
    %2131 = vmatpush1.msra.mxu0 0.0
    %2132 = vmatprep.subr.mxu0 0.0
    %2133 = vmatpush1.msra.mxu0 0.0
    %2134 = vmatprep.subr.mxu0 0.0
    %2135 = vmatpush1.msra.mxu0 0.0
    %2136 = vmatprep.mubr.f32.mxu0 0.0
    %2137 = vmatmul.mubr.f32.gmra.mrb[0].mxu0 %v2070
    %v2138 = vpop.f32.mrb[0].mxu0
    %v2139 = vadd.f32 0.0, %v2138
    %v2140 = vpop.f32.mrb[0].mxu0
    %2141 = vdwg.mxu0
    %v2142 = vadd.f32 %v2060, %v2139
    %v2143 = vxor.u32 %v2142, 2147483648
    %v2144 = vmul.f32 %v2143, 1.442695
    %v2145 = vpow.pop %v2144
    %v2146 = vadd.f32 %v2145, 1.0
    %v2147 = vrcp.pop %v2146
    %v2148 = vmul.f32 1.0, %v2147
    %v2149 = vtanh.pop %v2142
    %2151 = vrot.lane.b32.xlu0 %v2068, 16
    %v2152 = vpop.permute.xlu0 %2151
    %v2154 = vmul.f32 %v2148, %v2152
    %2156 = vrot.lane.b32.xlu0 %v2149, 96
    %v2157 = vpop.permute.xlu0 %2156
    %v2159 = vmul.f32 %v2148, %v2157
    %2161 = vrot.lane.b32.xlu0 %v2159, 16
    %v2162 = vpop.permute.xlu0 %2161
    %v2164 = vadd.f32 %v2154, %v2162
    %v2165 = vtanh.pop %v2164
    %2167 = vrot.lane.b32.xlu0 %v2165, 32
    %v2168 = vpop.permute.xlu0 %2167
    %v2170 = vmul.f32 %v2148, %v2168
    %2172 = vrot.lane.b32.xlu0 %v2170, 80
    %v2173 = vpop.permute.xlu0 %2172
    %v2174 = vsel %vm225, %v2173, 0
    %2176 = vmatprep.subr.mxu0 0.0
    %2177 = vmatpush1.msra.mxu0 %v2063
    %2178 = vmatprep.subr.mxu0 0.0
    %2179 = vmatpush1.msra.mxu0 %v2064
    %2180 = vmatprep.subr.mxu0 0.0
    %2181 = vmatpush1.msra.mxu0 0.0
    %2182 = vmatprep.subr.mxu0 0.0
    %2183 = vmatpush1.msra.mxu0 0.0
    %2184 = vmatprep.subr.mxu0 0.0
    %2185 = vmatpush1.msra.mxu0 0.0
    %2186 = vmatprep.subr.mxu0 0.0
    %2187 = vmatpush1.msra.mxu0 0.0
    %2188 = vmatprep.subr.mxu0 0.0
    %2189 = vmatpush1.msra.mxu0 0.0
    %2190 = vmatprep.subr.mxu0 0.0
    %2191 = vmatpush1.msra.mxu0 0.0
    %2192 = vmatprep.subr.mxu0 0.0
    %2193 = vmatpush1.msra.mxu0 0.0
    %2194 = vmatprep.subr.mxu0 0.0
    %2195 = vmatpush1.msra.mxu0 0.0
    %2196 = vmatprep.subr.mxu0 0.0
    %2197 = vmatpush1.msra.mxu0 0.0
    %2198 = vmatprep.subr.mxu0 0.0
    %2199 = vmatpush1.msra.mxu0 0.0
    %2200 = vmatprep.subr.mxu0 0.0
    %2201 = vmatpush1.msra.mxu0 0.0
    %2202 = vmatprep.subr.mxu0 0.0
    %2203 = vmatpush1.msra.mxu0 0.0
    %2204 = vmatprep.subr.mxu0 0.0
    %2205 = vmatpush1.msra.mxu0 0.0
    %2206 = vmatprep.subr.mxu0 0.0
    %2207 = vmatpush1.msra.mxu0 0.0
    %2208 = vmatprep.subr.mxu0 0.0
    %2209 = vmatpush1.msra.mxu0 0.0
    %2210 = vmatprep.subr.mxu0 0.0
    %2211 = vmatpush1.msra.mxu0 0.0
    %2212 = vmatprep.subr.mxu0 0.0
    %2213 = vmatpush1.msra.mxu0 0.0
    %2214 = vmatprep.subr.mxu0 0.0
    %2215 = vmatpush1.msra.mxu0 0.0
    %2216 = vmatprep.subr.mxu0 0.0
    %2217 = vmatpush1.msra.mxu0 0.0
    %2218 = vmatprep.subr.mxu0 0.0
    %2219 = vmatpush1.msra.mxu0 0.0
    %2220 = vmatprep.subr.mxu0 0.0
    %2221 = vmatpush1.msra.mxu0 0.0
    %2222 = vmatprep.subr.mxu0 0.0
    %2223 = vmatpush1.msra.mxu0 0.0
    %2224 = vmatprep.subr.mxu0 0.0
    %2225 = vmatpush1.msra.mxu0 0.0
    %2226 = vmatprep.subr.mxu0 0.0
    %2227 = vmatpush1.msra.mxu0 0.0
    %2228 = vmatprep.subr.mxu0 0.0
    %2229 = vmatpush1.msra.mxu0 0.0
    %2230 = vmatprep.subr.mxu0 0.0
    %2231 = vmatpush1.msra.mxu0 0.0
    %2232 = vmatprep.subr.mxu0 0.0
    %2233 = vmatpush1.msra.mxu0 0.0
    %2234 = vmatprep.subr.mxu0 0.0
    %2235 = vmatpush1.msra.mxu0 0.0
    %2236 = vmatprep.subr.mxu0 0.0
    %2237 = vmatpush1.msra.mxu0 0.0
    %2238 = vmatprep.subr.mxu0 0.0
    %2239 = vmatpush1.msra.mxu0 0.0
    %2240 = vmatprep.mubr.f32.mxu0 0.0
    %2241 = vmatmul.mubr.f32.gmra.mrb[0].mxu0 %v2174
    %v2242 = vpop.f32.mrb[0].mxu0
    %v2243 = vadd.f32 0.0, %v2242
    %v2244 = vpop.f32.mrb[0].mxu0
    %2245 = vdwg.mxu0
    %v2247 = vrot.slane %v2243, 7
    %v2249 = vadd.f32 %v2060, %v2247
    %v2250 = vxor.u32 %v2249, 2147483648
    %v2251 = vmul.f32 %v2250, 1.442695
    %v2252 = vpow.pop %v2251
    %v2253 = vadd.f32 %v2252, 1.0
    %v2254 = vrcp.pop %v2253
    %v2255 = vmul.f32 1.0, %v2254
    %v2256 = vtanh.pop %v2249
    %v2258 = vrot.slane %v2164, 7
    %v2260 = vmul.f32 %v2255, %v2258
    %2262 = vrot.lane.b32.xlu0 %v2256, 96
    %v2263 = vpop.permute.xlu0 %2262
    %v2265 = vmul.f32 %v2255, %v2263
    %2267 = vrot.lane.b32.xlu0 %v2265, 16
    %v2268 = vpop.permute.xlu0 %2267
    %v2270 = vadd.f32 %v2260, %v2268
    %v2271 = vtanh.pop %v2270
    %2273 = vrot.lane.b32.xlu0 %v2271, 32
    %v2274 = vpop.permute.xlu0 %2273
    %v2276 = vmul.f32 %v2255, %v2274
    %v2278 = vrot.slane %v2276, 1
    %2279 = vrot.lane.b32.xlu0 %v2278, 80
    %v2280 = vpop.permute.xlu0 %2279
    %v2281 = vsel %vm225, %v2280, 0
    %2283 = vmatprep.subr.mxu0 0.0
    %2284 = vmatpush1.msra.mxu0 %v2063
    %2285 = vmatprep.subr.mxu0 0.0
    %2286 = vmatpush1.msra.mxu0 %v2064
    %2287 = vmatprep.subr.mxu0 0.0
    %2288 = vmatpush1.msra.mxu0 0.0
    %2289 = vmatprep.subr.mxu0 0.0
    %2290 = vmatpush1.msra.mxu0 0.0
    %2291 = vmatprep.subr.mxu0 0.0
    %2292 = vmatpush1.msra.mxu0 0.0
    %2293 = vmatprep.subr.mxu0 0.0
    %2294 = vmatpush1.msra.mxu0 0.0
    %2295 = vmatprep.subr.mxu0 0.0
    %2296 = vmatpush1.msra.mxu0 0.0
    %2297 = vmatprep.subr.mxu0 0.0
    %2298 = vmatpush1.msra.mxu0 0.0
    %2299 = vmatprep.subr.mxu0 0.0
    %2300 = vmatpush1.msra.mxu0 0.0
    %2301 = vmatprep.subr.mxu0 0.0
    %2302 = vmatpush1.msra.mxu0 0.0
    %2303 = vmatprep.subr.mxu0 0.0
    %2304 = vmatpush1.msra.mxu0 0.0
    %2305 = vmatprep.subr.mxu0 0.0
    %2306 = vmatpush1.msra.mxu0 0.0
    %2307 = vmatprep.subr.mxu0 0.0
    %2308 = vmatpush1.msra.mxu0 0.0
    %2309 = vmatprep.subr.mxu0 0.0
    %2310 = vmatpush1.msra.mxu0 0.0
    %2311 = vmatprep.subr.mxu0 0.0
    %2312 = vmatpush1.msra.mxu0 0.0
    %2313 = vmatprep.subr.mxu0 0.0
    %2314 = vmatpush1.msra.mxu0 0.0
    %2315 = vmatprep.subr.mxu0 0.0
    %2316 = vmatpush1.msra.mxu0 0.0
    %2317 = vmatprep.subr.mxu0 0.0
    %2318 = vmatpush1.msra.mxu0 0.0
    %2319 = vmatprep.subr.mxu0 0.0
    %2320 = vmatpush1.msra.mxu0 0.0
    %2321 = vmatprep.subr.mxu0 0.0
    %2322 = vmatpush1.msra.mxu0 0.0
    %2323 = vmatprep.subr.mxu0 0.0
    %2324 = vmatpush1.msra.mxu0 0.0
    %2325 = vmatprep.subr.mxu0 0.0
    %2326 = vmatpush1.msra.mxu0 0.0
    %2327 = vmatprep.subr.mxu0 0.0
    %2328 = vmatpush1.msra.mxu0 0.0
    %2329 = vmatprep.subr.mxu0 0.0
    %2330 = vmatpush1.msra.mxu0 0.0
    %2331 = vmatprep.subr.mxu0 0.0
    %2332 = vmatpush1.msra.mxu0 0.0
    %2333 = vmatprep.subr.mxu0 0.0
    %2334 = vmatpush1.msra.mxu0 0.0
    %2335 = vmatprep.subr.mxu0 0.0
    %2336 = vmatpush1.msra.mxu0 0.0
    %2337 = vmatprep.subr.mxu0 0.0
    %2338 = vmatpush1.msra.mxu0 0.0
    %2339 = vmatprep.subr.mxu0 0.0
    %2340 = vmatpush1.msra.mxu0 0.0
    %2341 = vmatprep.subr.mxu0 0.0
    %2342 = vmatpush1.msra.mxu0 0.0
    %2343 = vmatprep.subr.mxu0 0.0
    %2344 = vmatpush1.msra.mxu0 0.0
    %2345 = vmatprep.subr.mxu0 0.0
    %2346 = vmatpush1.msra.mxu0 0.0
    %2347 = vmatprep.mubr.f32.mxu0 0.0
    %2348 = vmatmul.mubr.f32.gmra.mrb[0].mxu0 %v2281
    %v2349 = vpop.f32.mrb[0].mxu0
    %v2350 = vadd.f32 0.0, %v2349
    %v2351 = vpop.f32.mrb[0].mxu0
    %2352 = vdwg.mxu0
    %v2354 = vrot.slane %v2350, 6
    %v2356 = vadd.f32 %v2060, %v2354
    %v2357 = vxor.u32 %v2356, 2147483648
    %v2358 = vmul.f32 %v2357, 1.442695
    %v2359 = vpow.pop %v2358
    %v2360 = vadd.f32 %v2359, 1.0
    %v2361 = vrcp.pop %v2360
    %v2362 = vmul.f32 1.0, %v2361
    %v2363 = vtanh.pop %v2356
    %v2365 = vrot.slane %v2270, 7
    %v2367 = vmul.f32 %v2362, %v2365
    %2369 = vrot.lane.b32.xlu0 %v2363, 96
    %v2370 = vpop.permute.xlu0 %2369
    %v2372 = vmul.f32 %v2362, %v2370
    %2374 = vrot.lane.b32.xlu0 %v2372, 16
    %v2375 = vpop.permute.xlu0 %2374
    %v2377 = vadd.f32 %v2367, %v2375
    %v2378 = vtanh.pop %v2377
    %2380 = vrot.lane.b32.xlu0 %v2378, 32
    %v2381 = vpop.permute.xlu0 %2380
    %v2383 = vmul.f32 %v2362, %v2381
    %v2385 = vrot.slane %v2383, 2
    %2386 = vrot.lane.b32.xlu0 %v2385, 80
    %v2387 = vpop.permute.xlu0 %2386
    %v2388 = vsel %vm225, %v2387, 0
    %2390 = vmatprep.subr.mxu0 0.0
    %2391 = vmatpush1.msra.mxu0 %v2063
    %2392 = vmatprep.subr.mxu0 0.0
    %2393 = vmatpush1.msra.mxu0 %v2064
    %2394 = vmatprep.subr.mxu0 0.0
    %2395 = vmatpush1.msra.mxu0 0.0
    %2396 = vmatprep.subr.mxu0 0.0
    %2397 = vmatpush1.msra.mxu0 0.0
    %2398 = vmatprep.subr.mxu0 0.0
    %2399 = vmatpush1.msra.mxu0 0.0
    %2400 = vmatprep.subr.mxu0 0.0
    %2401 = vmatpush1.msra.mxu0 0.0
    %2402 = vmatprep.subr.mxu0 0.0
    %2403 = vmatpush1.msra.mxu0 0.0
    %2404 = vmatprep.subr.mxu0 0.0
    %2405 = vmatpush1.msra.mxu0 0.0
    %2406 = vmatprep.subr.mxu0 0.0
    %2407 = vmatpush1.msra.mxu0 0.0
    %2408 = vmatprep.subr.mxu0 0.0
    %2409 = vmatpush1.msra.mxu0 0.0
    %2410 = vmatprep.subr.mxu0 0.0
    %2411 = vmatpush1.msra.mxu0 0.0
    %2412 = vmatprep.subr.mxu0 0.0
    %2413 = vmatpush1.msra.mxu0 0.0
    %2414 = vmatprep.subr.mxu0 0.0
    %2415 = vmatpush1.msra.mxu0 0.0
    %2416 = vmatprep.subr.mxu0 0.0
    %2417 = vmatpush1.msra.mxu0 0.0
    %2418 = vmatprep.subr.mxu0 0.0
    %2419 = vmatpush1.msra.mxu0 0.0
    %2420 = vmatprep.subr.mxu0 0.0
    %2421 = vmatpush1.msra.mxu0 0.0
    %2422 = vmatprep.subr.mxu0 0.0
    %2423 = vmatpush1.msra.mxu0 0.0
    %2424 = vmatprep.subr.mxu0 0.0
    %2425 = vmatpush1.msra.mxu0 0.0
    %2426 = vmatprep.subr.mxu0 0.0
    %2427 = vmatpush1.msra.mxu0 0.0
    %2428 = vmatprep.subr.mxu0 0.0
    %2429 = vmatpush1.msra.mxu0 0.0
    %2430 = vmatprep.subr.mxu0 0.0
    %2431 = vmatpush1.msra.mxu0 0.0
    %2432 = vmatprep.subr.mxu0 0.0
    %2433 = vmatpush1.msra.mxu0 0.0
    %2434 = vmatprep.subr.mxu0 0.0
    %2435 = vmatpush1.msra.mxu0 0.0
    %2436 = vmatprep.subr.mxu0 0.0
    %2437 = vmatpush1.msra.mxu0 0.0
    %2438 = vmatprep.subr.mxu0 0.0
    %2439 = vmatpush1.msra.mxu0 0.0
    %2440 = vmatprep.subr.mxu0 0.0
    %2441 = vmatpush1.msra.mxu0 0.0
    %2442 = vmatprep.subr.mxu0 0.0
    %2443 = vmatpush1.msra.mxu0 0.0
    %2444 = vmatprep.subr.mxu0 0.0
    %2445 = vmatpush1.msra.mxu0 0.0
    %2446 = vmatprep.subr.mxu0 0.0
    %2447 = vmatpush1.msra.mxu0 0.0
    %2448 = vmatprep.subr.mxu0 0.0
    %2449 = vmatpush1.msra.mxu0 0.0
    %2450 = vmatprep.subr.mxu0 0.0
    %2451 = vmatpush1.msra.mxu0 0.0
    %2452 = vmatprep.subr.mxu0 0.0
    %2453 = vmatpush1.msra.mxu0 0.0
    %2454 = vmatprep.mubr.f32.mxu0 0.0
    %2455 = vmatmul.mubr.f32.gmra.mrb[0].mxu0 %v2388
    %v2456 = vpop.f32.mrb[0].mxu0
    %v2457 = vadd.f32 0.0, %v2456
    %v2458 = vpop.f32.mrb[0].mxu0
    %2459 = vdwg.mxu0
    %v2461 = vrot.slane %v2457, 5
    %v2463 = vadd.f32 %v2060, %v2461
    %v2464 = vxor.u32 %v2463, 2147483648
    %v2465 = vmul.f32 %v2464, 1.442695
    %v2466 = vpow.pop %v2465
    %v2467 = vadd.f32 %v2466, 1.0
    %v2468 = vrcp.pop %v2467
    %v2469 = vmul.f32 1.0, %v2468
    %v2470 = vtanh.pop %v2463
    %v2472 = vrot.slane %v2377, 7
    %v2474 = vmul.f32 %v2469, %v2472
    %2476 = vrot.lane.b32.xlu0 %v2470, 96
    %v2477 = vpop.permute.xlu0 %2476
    %v2479 = vmul.f32 %v2469, %v2477
    %2481 = vrot.lane.b32.xlu0 %v2479, 16
    %v2482 = vpop.permute.xlu0 %2481
    %v2484 = vadd.f32 %v2474, %v2482
    %v2485 = vtanh.pop %v2484
    %2487 = vrot.lane.b32.xlu0 %v2485, 32
    %v2488 = vpop.permute.xlu0 %2487
    %v2490 = vmul.f32 %v2469, %v2488
    %v2492 = vrot.slane %v2490, 3
    %2493 = vrot.lane.b32.xlu0 %v2492, 80
    %v2494 = vpop.permute.xlu0 %2493
    %v2495 = vsel %vm225, %v2494, 0
    %2497 = vmatprep.subr.mxu0 0.0
    %2498 = vmatpush1.msra.mxu0 %v2063
    %2499 = vmatprep.subr.mxu0 0.0
    %2500 = vmatpush1.msra.mxu0 %v2064
    %2501 = vmatprep.subr.mxu0 0.0
    %2502 = vmatpush1.msra.mxu0 0.0
    %2503 = vmatprep.subr.mxu0 0.0
    %2504 = vmatpush1.msra.mxu0 0.0
    %2505 = vmatprep.subr.mxu0 0.0
    %2506 = vmatpush1.msra.mxu0 0.0
    %2507 = vmatprep.subr.mxu0 0.0
    %2508 = vmatpush1.msra.mxu0 0.0
    %2509 = vmatprep.subr.mxu0 0.0
    %2510 = vmatpush1.msra.mxu0 0.0
    %2511 = vmatprep.subr.mxu0 0.0
    %2512 = vmatpush1.msra.mxu0 0.0
    %2513 = vmatprep.subr.mxu0 0.0
    %2514 = vmatpush1.msra.mxu0 0.0
    %2515 = vmatprep.subr.mxu0 0.0
    %2516 = vmatpush1.msra.mxu0 0.0
    %2517 = vmatprep.subr.mxu0 0.0
    %2518 = vmatpush1.msra.mxu0 0.0
    %2519 = vmatprep.subr.mxu0 0.0
    %2520 = vmatpush1.msra.mxu0 0.0
    %2521 = vmatprep.subr.mxu0 0.0
    %2522 = vmatpush1.msra.mxu0 0.0
    %2523 = vmatprep.subr.mxu0 0.0
    %2524 = vmatpush1.msra.mxu0 0.0
    %2525 = vmatprep.subr.mxu0 0.0
    %2526 = vmatpush1.msra.mxu0 0.0
    %2527 = vmatprep.subr.mxu0 0.0
    %2528 = vmatpush1.msra.mxu0 0.0
    %2529 = vmatprep.subr.mxu0 0.0
    %2530 = vmatpush1.msra.mxu0 0.0
    %2531 = vmatprep.subr.mxu0 0.0
    %2532 = vmatpush1.msra.mxu0 0.0
    %2533 = vmatprep.subr.mxu0 0.0
    %2534 = vmatpush1.msra.mxu0 0.0
    %2535 = vmatprep.subr.mxu0 0.0
    %2536 = vmatpush1.msra.mxu0 0.0
    %2537 = vmatprep.subr.mxu0 0.0
    %2538 = vmatpush1.msra.mxu0 0.0
    %2539 = vmatprep.subr.mxu0 0.0
    %2540 = vmatpush1.msra.mxu0 0.0
    %2541 = vmatprep.subr.mxu0 0.0
    %2542 = vmatpush1.msra.mxu0 0.0
    %2543 = vmatprep.subr.mxu0 0.0
    %2544 = vmatpush1.msra.mxu0 0.0
    %2545 = vmatprep.subr.mxu0 0.0
    %2546 = vmatpush1.msra.mxu0 0.0
    %2547 = vmatprep.subr.mxu0 0.0
    %2548 = vmatpush1.msra.mxu0 0.0
    %2549 = vmatprep.subr.mxu0 0.0
    %2550 = vmatpush1.msra.mxu0 0.0
    %2551 = vmatprep.subr.mxu0 0.0
    %2552 = vmatpush1.msra.mxu0 0.0
    %2553 = vmatprep.subr.mxu0 0.0
    %2554 = vmatpush1.msra.mxu0 0.0
    %2555 = vmatprep.subr.mxu0 0.0
    %2556 = vmatpush1.msra.mxu0 0.0
    %2557 = vmatprep.subr.mxu0 0.0
    %2558 = vmatpush1.msra.mxu0 0.0
    %2559 = vmatprep.subr.mxu0 0.0
    %2560 = vmatpush1.msra.mxu0 0.0
    %2561 = vmatprep.mubr.f32.mxu0 0.0
    %2562 = vmatmul.mubr.f32.gmra.mrb[0].mxu0 %v2495
    %v2563 = vpop.f32.mrb[0].mxu0
    %v2564 = vadd.f32 0.0, %v2563
    %v2565 = vpop.f32.mrb[0].mxu0
    %2566 = vdwg.mxu0
    %v2568 = vrot.slane %v2564, 4
    %v2570 = vadd.f32 %v2060, %v2568
    %v2571 = vxor.u32 %v2570, 2147483648
    %v2572 = vmul.f32 %v2571, 1.442695
    %v2573 = vpow.pop %v2572
    %v2574 = vadd.f32 %v2573, 1.0
    %v2575 = vrcp.pop %v2574
    %v2576 = vmul.f32 1.0, %v2575
    %v2577 = vtanh.pop %v2570
    %v2579 = vrot.slane %v2484, 7
    %v2581 = vmul.f32 %v2576, %v2579
    %2583 = vrot.lane.b32.xlu0 %v2577, 96
    %v2584 = vpop.permute.xlu0 %2583
    %v2586 = vmul.f32 %v2576, %v2584
    %2588 = vrot.lane.b32.xlu0 %v2586, 16
    %v2589 = vpop.permute.xlu0 %2588
    %v2591 = vadd.f32 %v2581, %v2589
    %v2592 = vtanh.pop %v2591
    %2594 = vrot.lane.b32.xlu0 %v2592, 32
    %v2595 = vpop.permute.xlu0 %2594
    %v2597 = vmul.f32 %v2576, %v2595
    %v2599 = vrot.slane %v2597, 4
    %2600 = vrot.lane.b32.xlu0 %v2599, 80
    %v2601 = vpop.permute.xlu0 %2600
    %v2602 = vsel %vm225, %v2601, 0
    %2604 = vmatprep.subr.mxu0 0.0
    %2605 = vmatpush1.msra.mxu0 %v2063
    %2606 = vmatprep.subr.mxu0 0.0
    %2607 = vmatpush1.msra.mxu0 %v2064
    %2608 = vmatprep.subr.mxu0 0.0
    %2609 = vmatpush1.msra.mxu0 0.0
    %2610 = vmatprep.subr.mxu0 0.0
    %2611 = vmatpush1.msra.mxu0 0.0
    %2612 = vmatprep.subr.mxu0 0.0
    %2613 = vmatpush1.msra.mxu0 0.0
    %2614 = vmatprep.subr.mxu0 0.0
    %2615 = vmatpush1.msra.mxu0 0.0
    %2616 = vmatprep.subr.mxu0 0.0
    %2617 = vmatpush1.msra.mxu0 0.0
    %2618 = vmatprep.subr.mxu0 0.0
    %2619 = vmatpush1.msra.mxu0 0.0
    %2620 = vmatprep.subr.mxu0 0.0
    %2621 = vmatpush1.msra.mxu0 0.0
    %2622 = vmatprep.subr.mxu0 0.0
    %2623 = vmatpush1.msra.mxu0 0.0
    %2624 = vmatprep.subr.mxu0 0.0
    %2625 = vmatpush1.msra.mxu0 0.0
    %2626 = vmatprep.subr.mxu0 0.0
    %2627 = vmatpush1.msra.mxu0 0.0
    %2628 = vmatprep.subr.mxu0 0.0
    %2629 = vmatpush1.msra.mxu0 0.0
    %2630 = vmatprep.subr.mxu0 0.0
    %2631 = vmatpush1.msra.mxu0 0.0
    %2632 = vmatprep.subr.mxu0 0.0
    %2633 = vmatpush1.msra.mxu0 0.0
    %2634 = vmatprep.subr.mxu0 0.0
    %2635 = vmatpush1.msra.mxu0 0.0
    %2636 = vmatprep.subr.mxu0 0.0
    %2637 = vmatpush1.msra.mxu0 0.0
    %2638 = vmatprep.subr.mxu0 0.0
    %2639 = vmatpush1.msra.mxu0 0.0
    %2640 = vmatprep.subr.mxu0 0.0
    %2641 = vmatpush1.msra.mxu0 0.0
    %2642 = vmatprep.subr.mxu0 0.0
    %2643 = vmatpush1.msra.mxu0 0.0
    %2644 = vmatprep.subr.mxu0 0.0
    %2645 = vmatpush1.msra.mxu0 0.0
    %2646 = vmatprep.subr.mxu0 0.0
    %2647 = vmatpush1.msra.mxu0 0.0
    %2648 = vmatprep.subr.mxu0 0.0
    %2649 = vmatpush1.msra.mxu0 0.0
    %2650 = vmatprep.subr.mxu0 0.0
    %2651 = vmatpush1.msra.mxu0 0.0
    %2652 = vmatprep.subr.mxu0 0.0
    %2653 = vmatpush1.msra.mxu0 0.0
    %2654 = vmatprep.subr.mxu0 0.0
    %2655 = vmatpush1.msra.mxu0 0.0
    %2656 = vmatprep.subr.mxu0 0.0
    %2657 = vmatpush1.msra.mxu0 0.0
    %2658 = vmatprep.subr.mxu0 0.0
    %2659 = vmatpush1.msra.mxu0 0.0
    %2660 = vmatprep.subr.mxu0 0.0
    %2661 = vmatpush1.msra.mxu0 0.0
    %2662 = vmatprep.subr.mxu0 0.0
    %2663 = vmatpush1.msra.mxu0 0.0
    %2664 = vmatprep.subr.mxu0 0.0
    %2665 = vmatpush1.msra.mxu0 0.0
    %2666 = vmatprep.subr.mxu0 0.0
    %2667 = vmatpush1.msra.mxu0 0.0
    %2668 = vmatprep.mubr.f32.mxu0 0.0
    %2669 = vmatmul.mubr.f32.gmra.mrb[0].mxu0 %v2602
    %v2670 = vpop.f32.mrb[0].mxu0
    %v2671 = vadd.f32 0.0, %v2670
    %v2672 = vpop.f32.mrb[0].mxu0
    %2673 = vdwg.mxu0
    %v2675 = vrot.slane %v2671, 3
    %v2677 = vadd.f32 %v2060, %v2675
    %v2678 = vxor.u32 %v2677, 2147483648
    %v2679 = vmul.f32 %v2678, 1.442695
    %v2680 = vpow.pop %v2679
    %v2681 = vadd.f32 %v2680, 1.0
    %v2682 = vrcp.pop %v2681
    %v2683 = vmul.f32 1.0, %v2682
    %v2684 = vtanh.pop %v2677
    %v2686 = vrot.slane %v2591, 7
    %v2688 = vmul.f32 %v2683, %v2686
    %2690 = vrot.lane.b32.xlu0 %v2684, 96
    %v2691 = vpop.permute.xlu0 %2690
    %v2693 = vmul.f32 %v2683, %v2691
    %2695 = vrot.lane.b32.xlu0 %v2693, 16
    %v2696 = vpop.permute.xlu0 %2695
    %v2698 = vadd.f32 %v2688, %v2696
    %v2699 = vtanh.pop %v2698
    %2701 = vrot.lane.b32.xlu0 %v2699, 32
    %v2702 = vpop.permute.xlu0 %2701
    %v2704 = vmul.f32 %v2683, %v2702
    %v2706 = vrot.slane %v2704, 5
    %2707 = vrot.lane.b32.xlu0 %v2706, 80
    %v2708 = vpop.permute.xlu0 %2707
    %v2709 = vsel %vm225, %v2708, 0
    %2711 = vmatprep.subr.mxu0 0.0
    %2712 = vmatpush1.msra.mxu0 %v2063
    %2713 = vmatprep.subr.mxu0 0.0
    %2714 = vmatpush1.msra.mxu0 %v2064
    %2715 = vmatprep.subr.mxu0 0.0
    %2716 = vmatpush1.msra.mxu0 0.0
    %2717 = vmatprep.subr.mxu0 0.0
    %2718 = vmatpush1.msra.mxu0 0.0
    %2719 = vmatprep.subr.mxu0 0.0
    %2720 = vmatpush1.msra.mxu0 0.0
    %2721 = vmatprep.subr.mxu0 0.0
    %2722 = vmatpush1.msra.mxu0 0.0
    %2723 = vmatprep.subr.mxu0 0.0
    %2724 = vmatpush1.msra.mxu0 0.0
    %2725 = vmatprep.subr.mxu0 0.0
    %2726 = vmatpush1.msra.mxu0 0.0
    %2727 = vmatprep.subr.mxu0 0.0
    %2728 = vmatpush1.msra.mxu0 0.0
    %2729 = vmatprep.subr.mxu0 0.0
    %2730 = vmatpush1.msra.mxu0 0.0
    %2731 = vmatprep.subr.mxu0 0.0
    %2732 = vmatpush1.msra.mxu0 0.0
    %2733 = vmatprep.subr.mxu0 0.0
    %2734 = vmatpush1.msra.mxu0 0.0
    %2735 = vmatprep.subr.mxu0 0.0
    %2736 = vmatpush1.msra.mxu0 0.0
    %2737 = vmatprep.subr.mxu0 0.0
    %2738 = vmatpush1.msra.mxu0 0.0
    %2739 = vmatprep.subr.mxu0 0.0
    %2740 = vmatpush1.msra.mxu0 0.0
    %2741 = vmatprep.subr.mxu0 0.0
    %2742 = vmatpush1.msra.mxu0 0.0
    %2743 = vmatprep.subr.mxu0 0.0
    %2744 = vmatpush1.msra.mxu0 0.0
    %2745 = vmatprep.subr.mxu0 0.0
    %2746 = vmatpush1.msra.mxu0 0.0
    %2747 = vmatprep.subr.mxu0 0.0
    %2748 = vmatpush1.msra.mxu0 0.0
    %2749 = vmatprep.subr.mxu0 0.0
    %2750 = vmatpush1.msra.mxu0 0.0
    %2751 = vmatprep.subr.mxu0 0.0
    %2752 = vmatpush1.msra.mxu0 0.0
    %2753 = vmatprep.subr.mxu0 0.0
    %2754 = vmatpush1.msra.mxu0 0.0
    %2755 = vmatprep.subr.mxu0 0.0
    %2756 = vmatpush1.msra.mxu0 0.0
    %2757 = vmatprep.subr.mxu0 0.0
    %2758 = vmatpush1.msra.mxu0 0.0
    %2759 = vmatprep.subr.mxu0 0.0
    %2760 = vmatpush1.msra.mxu0 0.0
    %2761 = vmatprep.subr.mxu0 0.0
    %2762 = vmatpush1.msra.mxu0 0.0
    %2763 = vmatprep.subr.mxu0 0.0
    %2764 = vmatpush1.msra.mxu0 0.0
    %2765 = vmatprep.subr.mxu0 0.0
    %2766 = vmatpush1.msra.mxu0 0.0
    %2767 = vmatprep.subr.mxu0 0.0
    %2768 = vmatpush1.msra.mxu0 0.0
    %2769 = vmatprep.subr.mxu0 0.0
    %2770 = vmatpush1.msra.mxu0 0.0
    %2771 = vmatprep.subr.mxu0 0.0
    %2772 = vmatpush1.msra.mxu0 0.0
    %2773 = vmatprep.subr.mxu0 0.0
    %2774 = vmatpush1.msra.mxu0 0.0
    %2775 = vmatprep.mubr.f32.mxu0 0.0
    %2776 = vmatmul.mubr.f32.gmra.mrb[0].mxu0 %v2709
    %v2777 = vpop.f32.mrb[0].mxu0
    %v2778 = vadd.f32 0.0, %v2777
    %v2779 = vpop.f32.mrb[0].mxu0
    %2780 = vdwg.mxu0
    %v2782 = vrot.slane %v2778, 2
    %v2784 = vadd.f32 %v2060, %v2782
    %v2785 = vxor.u32 %v2784, 2147483648
    %v2786 = vmul.f32 %v2785, 1.442695
    %v2787 = vpow.pop %v2786
    %v2788 = vadd.f32 %v2787, 1.0
    %v2789 = vrcp.pop %v2788
    %v2790 = vmul.f32 1.0, %v2789
    %v2791 = vtanh.pop %v2784
    %v2793 = vrot.slane %v2698, 7
    %v2795 = vmul.f32 %v2790, %v2793
    %2797 = vrot.lane.b32.xlu0 %v2791, 96
    %v2798 = vpop.permute.xlu0 %2797
    %v2800 = vmul.f32 %v2790, %v2798
    %2802 = vrot.lane.b32.xlu0 %v2800, 16
    %v2803 = vpop.permute.xlu0 %2802
    %v2805 = vadd.f32 %v2795, %v2803
    %v2806 = vtanh.pop %v2805
    %2808 = vrot.lane.b32.xlu0 %v2806, 32
    %v2809 = vpop.permute.xlu0 %2808
    %v2811 = vmul.f32 %v2790, %v2809
    %v2813 = vrot.slane %v2811, 6
    %2814 = vrot.lane.b32.xlu0 %v2813, 80
    %v2815 = vpop.permute.xlu0 %2814
    %v2816 = vsel %vm225, %v2815, 0
    %2818 = vmatprep.subr.mxu0 0.0
    %2819 = vmatpush1.msra.mxu0 %v2063
    %2820 = vmatprep.subr.mxu0 0.0
    %2821 = vmatpush1.msra.mxu0 %v2064
    %2822 = vmatprep.subr.mxu0 0.0
    %2823 = vmatpush1.msra.mxu0 0.0
    %2824 = vmatprep.subr.mxu0 0.0
    %2825 = vmatpush1.msra.mxu0 0.0
    %2826 = vmatprep.subr.mxu0 0.0
    %2827 = vmatpush1.msra.mxu0 0.0
    %2828 = vmatprep.subr.mxu0 0.0
    %2829 = vmatpush1.msra.mxu0 0.0
    %2830 = vmatprep.subr.mxu0 0.0
    %2831 = vmatpush1.msra.mxu0 0.0
    %2832 = vmatprep.subr.mxu0 0.0
    %2833 = vmatpush1.msra.mxu0 0.0
    %2834 = vmatprep.subr.mxu0 0.0
    %2835 = vmatpush1.msra.mxu0 0.0
    %2836 = vmatprep.subr.mxu0 0.0
    %2837 = vmatpush1.msra.mxu0 0.0
    %2838 = vmatprep.subr.mxu0 0.0
    %2839 = vmatpush1.msra.mxu0 0.0
    %2840 = vmatprep.subr.mxu0 0.0
    %2841 = vmatpush1.msra.mxu0 0.0
    %2842 = vmatprep.subr.mxu0 0.0
    %2843 = vmatpush1.msra.mxu0 0.0
    %2844 = vmatprep.subr.mxu0 0.0
    %2845 = vmatpush1.msra.mxu0 0.0
    %2846 = vmatprep.subr.mxu0 0.0
    %2847 = vmatpush1.msra.mxu0 0.0
    %2848 = vmatprep.subr.mxu0 0.0
    %2849 = vmatpush1.msra.mxu0 0.0
    %2850 = vmatprep.subr.mxu0 0.0
    %2851 = vmatpush1.msra.mxu0 0.0
    %2852 = vmatprep.subr.mxu0 0.0
    %2853 = vmatpush1.msra.mxu0 0.0
    %2854 = vmatprep.subr.mxu0 0.0
    %2855 = vmatpush1.msra.mxu0 0.0
    %2856 = vmatprep.subr.mxu0 0.0
    %2857 = vmatpush1.msra.mxu0 0.0
    %2858 = vmatprep.subr.mxu0 0.0
    %2859 = vmatpush1.msra.mxu0 0.0
    %2860 = vmatprep.subr.mxu0 0.0
    %2861 = vmatpush1.msra.mxu0 0.0
    %2862 = vmatprep.subr.mxu0 0.0
    %2863 = vmatpush1.msra.mxu0 0.0
    %2864 = vmatprep.subr.mxu0 0.0
    %2865 = vmatpush1.msra.mxu0 0.0
    %2866 = vmatprep.subr.mxu0 0.0
    %2867 = vmatpush1.msra.mxu0 0.0
    %2868 = vmatprep.subr.mxu0 0.0
    %2869 = vmatpush1.msra.mxu0 0.0
    %2870 = vmatprep.subr.mxu0 0.0
    %2871 = vmatpush1.msra.mxu0 0.0
    %2872 = vmatprep.subr.mxu0 0.0
    %2873 = vmatpush1.msra.mxu0 0.0
    %2874 = vmatprep.subr.mxu0 0.0
    %2875 = vmatpush1.msra.mxu0 0.0
    %2876 = vmatprep.subr.mxu0 0.0
    %2877 = vmatpush1.msra.mxu0 0.0
    %2878 = vmatprep.subr.mxu0 0.0
    %2879 = vmatpush1.msra.mxu0 0.0
    %2880 = vmatprep.subr.mxu0 0.0
    %2881 = vmatpush1.msra.mxu0 0.0
    %2882 = vmatprep.mubr.f32.mxu0 0.0
    %2883 = vmatmul.mubr.f32.gmra.mrb[0].mxu0 %v2816
    %v2884 = vpop.f32.mrb[0].mxu0
    %v2885 = vadd.f32 0.0, %v2884
    %v2886 = vpop.f32.mrb[0].mxu0
    %2887 = vdwg.mxu0
    %v2889 = vrot.slane %v2885, 1
    %v2891 = vadd.f32 %v2060, %v2889
    %v2892 = vxor.u32 %v2891, 2147483648
    %v2893 = vmul.f32 %v2892, 1.442695
    %v2894 = vpow.pop %v2893
    %v2895 = vadd.f32 %v2894, 1.0
    %v2896 = vrcp.pop %v2895
    %v2897 = vmul.f32 1.0, %v2896
    %v2898 = vtanh.pop %v2891
    %v2900 = vrot.slane %v2805, 7
    %v2902 = vmul.f32 %v2897, %v2900
    %2904 = vrot.lane.b32.xlu0 %v2898, 96
    %v2905 = vpop.permute.xlu0 %2904
    %v2907 = vmul.f32 %v2897, %v2905
    %2909 = vrot.lane.b32.xlu0 %v2907, 16
    %v2910 = vpop.permute.xlu0 %2909
    %v2912 = vadd.f32 %v2902, %v2910
    %v2913 = vtanh.pop %v2912
    %2915 = vrot.lane.b32.xlu0 %v2913, 32
    %v2916 = vpop.permute.xlu0 %2915
    %v2918 = vmul.f32 %v2897, %v2916
    %v2919 = vld [vmem:[#allocation2 + $0x3] sm:$0x1]
    %v2920 = vld [vmem:[#allocation5 + $0x3] sm:$0x1]
    %v2922 = vsel %vm225, %v2919, 0
    %2924 = vmatprep.subr.mxu0 0.0
    %2925 = vmatpush1.msra.mxu0 %v2065
    %2926 = vmatprep.subr.mxu0 0.0
    %2927 = vmatpush1.msra.mxu0 %v2066
    %2928 = vmatprep.subr.mxu0 0.0
    %2929 = vmatpush1.msra.mxu0 0.0
    %2930 = vmatprep.subr.mxu0 0.0
    %2931 = vmatpush1.msra.mxu0 0.0
    %2932 = vmatprep.subr.mxu0 0.0
    %2933 = vmatpush1.msra.mxu0 0.0
    %2934 = vmatprep.subr.mxu0 0.0
    %2935 = vmatpush1.msra.mxu0 0.0
    %2936 = vmatprep.subr.mxu0 0.0
    %2937 = vmatpush1.msra.mxu0 0.0
    %2938 = vmatprep.subr.mxu0 0.0
    %2939 = vmatpush1.msra.mxu0 0.0
    %2940 = vmatprep.subr.mxu0 0.0
    %2941 = vmatpush1.msra.mxu0 0.0
    %2942 = vmatprep.subr.mxu0 0.0
    %2943 = vmatpush1.msra.mxu0 0.0
    %2944 = vmatprep.subr.mxu0 0.0
    %2945 = vmatpush1.msra.mxu0 0.0
    %2946 = vmatprep.subr.mxu0 0.0
    %2947 = vmatpush1.msra.mxu0 0.0
    %2948 = vmatprep.subr.mxu0 0.0
    %2949 = vmatpush1.msra.mxu0 0.0
    %2950 = vmatprep.subr.mxu0 0.0
    %2951 = vmatpush1.msra.mxu0 0.0
    %2952 = vmatprep.subr.mxu0 0.0
    %2953 = vmatpush1.msra.mxu0 0.0
    %2954 = vmatprep.subr.mxu0 0.0
    %2955 = vmatpush1.msra.mxu0 0.0
    %2956 = vmatprep.subr.mxu0 0.0
    %2957 = vmatpush1.msra.mxu0 0.0
    %2958 = vmatprep.subr.mxu0 0.0
    %2959 = vmatpush1.msra.mxu0 0.0
    %2960 = vmatprep.subr.mxu0 0.0
    %2961 = vmatpush1.msra.mxu0 0.0
    %2962 = vmatprep.subr.mxu0 0.0
    %2963 = vmatpush1.msra.mxu0 0.0
    %2964 = vmatprep.subr.mxu0 0.0
    %2965 = vmatpush1.msra.mxu0 0.0
    %2966 = vmatprep.subr.mxu0 0.0
    %2967 = vmatpush1.msra.mxu0 0.0
    %2968 = vmatprep.subr.mxu0 0.0
    %2969 = vmatpush1.msra.mxu0 0.0
    %2970 = vmatprep.subr.mxu0 0.0
    %2971 = vmatpush1.msra.mxu0 0.0
    %2972 = vmatprep.subr.mxu0 0.0
    %2973 = vmatpush1.msra.mxu0 0.0
    %2974 = vmatprep.subr.mxu0 0.0
    %2975 = vmatpush1.msra.mxu0 0.0
    %2976 = vmatprep.subr.mxu0 0.0
    %2977 = vmatpush1.msra.mxu0 0.0
    %2978 = vmatprep.subr.mxu0 0.0
    %2979 = vmatpush1.msra.mxu0 0.0
    %2980 = vmatprep.subr.mxu0 0.0
    %2981 = vmatpush1.msra.mxu0 0.0
    %2982 = vmatprep.subr.mxu0 0.0
    %2983 = vmatpush1.msra.mxu0 0.0
    %2984 = vmatprep.subr.mxu0 0.0
    %2985 = vmatpush1.msra.mxu0 0.0
    %2986 = vmatprep.subr.mxu0 0.0
    %2987 = vmatpush1.msra.mxu0 0.0
    %2988 = vmatprep.mubr.f32.mxu0 0.0
    %2989 = vmatmul.mubr.f32.gmra.mrb[0].mxu0 %v2922
    %v2990 = vpop.f32.mrb[0].mxu0
    %v2991 = vadd.f32 0.0, %v2990
    %v2992 = vpop.f32.mrb[0].mxu0
    %2993 = vdwg.mxu0
    %v2995 = vrot.slane %v2991, 1
    %2996 = vrot.lane.b32.xlu0 %v2995, 64
    %v2997 = vpop.permute.xlu0 %2996
    %v2999 = vadd.f32 %v2060, %v2997
    %v3000 = vxor.u32 %v2999, 2147483648
    %v3001 = vmul.f32 %v3000, 1.442695
    %v3002 = vpow.pop %v3001
    %v3003 = vadd.f32 %v3002, 1.0
    %v3004 = vrcp.pop %v3003
    %v3005 = vmul.f32 1.0, %v3004
    %v3006 = vtanh.pop %v2999
    %v3008 = vrot.slane %v2920, 1
    %3009 = vrot.lane.b32.xlu0 %v3008, 80
    %v3010 = vpop.permute.xlu0 %3009
    %v3012 = vmul.f32 %v3005, %v3010
    %3014 = vrot.lane.b32.xlu0 %v3006, 96
    %v3015 = vpop.permute.xlu0 %3014
    %v3017 = vmul.f32 %v3005, %v3015
    %3019 = vrot.lane.b32.xlu0 %v3017, 16
    %v3020 = vpop.permute.xlu0 %3019
    %v3022 = vadd.f32 %v3012, %v3020
    %v3023 = vtanh.pop %v3022
    %3025 = vrot.lane.b32.xlu0 %v3023, 32
    %v3026 = vpop.permute.xlu0 %3025
    %v3028 = vmul.f32 %v3005, %v3026
    %v3030 = vrot.slane %v3028, 7
    %3031 = vrot.lane.b32.xlu0 %v3030, 16
    %v3032 = vpop.permute.xlu0 %3031
    %v3033 = vsel %vm225, %v3032, 0
    %3035 = vmatprep.subr.mxu0 0.0
    %3036 = vmatpush1.msra.mxu0 %v2065
    %3037 = vmatprep.subr.mxu0 0.0
    %3038 = vmatpush1.msra.mxu0 %v2066
    %3039 = vmatprep.subr.mxu0 0.0
    %3040 = vmatpush1.msra.mxu0 0.0
    %3041 = vmatprep.subr.mxu0 0.0
    %3042 = vmatpush1.msra.mxu0 0.0
    %3043 = vmatprep.subr.mxu0 0.0
    %3044 = vmatpush1.msra.mxu0 0.0
    %3045 = vmatprep.subr.mxu0 0.0
    %3046 = vmatpush1.msra.mxu0 0.0
    %3047 = vmatprep.subr.mxu0 0.0
    %3048 = vmatpush1.msra.mxu0 0.0
    %3049 = vmatprep.subr.mxu0 0.0
    %3050 = vmatpush1.msra.mxu0 0.0
    %3051 = vmatprep.subr.mxu0 0.0
    %3052 = vmatpush1.msra.mxu0 0.0
    %3053 = vmatprep.subr.mxu0 0.0
    %3054 = vmatpush1.msra.mxu0 0.0
    %3055 = vmatprep.subr.mxu0 0.0
    %3056 = vmatpush1.msra.mxu0 0.0
    %3057 = vmatprep.subr.mxu0 0.0
    %3058 = vmatpush1.msra.mxu0 0.0
    %3059 = vmatprep.subr.mxu0 0.0
    %3060 = vmatpush1.msra.mxu0 0.0
    %3061 = vmatprep.subr.mxu0 0.0
    %3062 = vmatpush1.msra.mxu0 0.0
    %3063 = vmatprep.subr.mxu0 0.0
    %3064 = vmatpush1.msra.mxu0 0.0
    %3065 = vmatprep.subr.mxu0 0.0
    %3066 = vmatpush1.msra.mxu0 0.0
    %3067 = vmatprep.subr.mxu0 0.0
    %3068 = vmatpush1.msra.mxu0 0.0
    %3069 = vmatprep.subr.mxu0 0.0
    %3070 = vmatpush1.msra.mxu0 0.0
    %3071 = vmatprep.subr.mxu0 0.0
    %3072 = vmatpush1.msra.mxu0 0.0
    %3073 = vmatprep.subr.mxu0 0.0
    %3074 = vmatpush1.msra.mxu0 0.0
    %3075 = vmatprep.subr.mxu0 0.0
    %3076 = vmatpush1.msra.mxu0 0.0
    %3077 = vmatprep.subr.mxu0 0.0
    %3078 = vmatpush1.msra.mxu0 0.0
    %3079 = vmatprep.subr.mxu0 0.0
    %3080 = vmatpush1.msra.mxu0 0.0
    %3081 = vmatprep.subr.mxu0 0.0
    %3082 = vmatpush1.msra.mxu0 0.0
    %3083 = vmatprep.subr.mxu0 0.0
    %3084 = vmatpush1.msra.mxu0 0.0
    %3085 = vmatprep.subr.mxu0 0.0
    %3086 = vmatpush1.msra.mxu0 0.0
    %3087 = vmatprep.subr.mxu0 0.0
    %3088 = vmatpush1.msra.mxu0 0.0
    %3089 = vmatprep.subr.mxu0 0.0
    %3090 = vmatpush1.msra.mxu0 0.0
    %3091 = vmatprep.subr.mxu0 0.0
    %3092 = vmatpush1.msra.mxu0 0.0
    %3093 = vmatprep.subr.mxu0 0.0
    %3094 = vmatpush1.msra.mxu0 0.0
    %3095 = vmatprep.subr.mxu0 0.0
    %3096 = vmatpush1.msra.mxu0 0.0
    %3097 = vmatprep.subr.mxu0 0.0
    %3098 = vmatpush1.msra.mxu0 0.0
    %3099 = vmatprep.mubr.f32.mxu0 0.0
    %3100 = vmatmul.mubr.f32.gmra.mrb[0].mxu0 %v3033
    %v3101 = vpop.f32.mrb[0].mxu0
    %v3102 = vadd.f32 0.0, %v3101
    %v3103 = vpop.f32.mrb[0].mxu0
    %3104 = vdwg.mxu0
    %v3106 = vrot.slane %v3102, 2
    %3107 = vrot.lane.b32.xlu0 %v3106, 64
    %v3108 = vpop.permute.xlu0 %3107
    %v3110 = vadd.f32 %v2060, %v3108
    %v3111 = vxor.u32 %v3110, 2147483648
    %v3112 = vmul.f32 %v3111, 1.442695
    %v3113 = vpow.pop %v3112
    %v3114 = vadd.f32 %v3113, 1.0
    %v3115 = vrcp.pop %v3114
    %v3116 = vmul.f32 1.0, %v3115
    %v3117 = vtanh.pop %v3110
    %v3119 = vrot.slane %v3022, 1
    %v3121 = vmul.f32 %v3116, %v3119
    %3123 = vrot.lane.b32.xlu0 %v3117, 96
    %v3124 = vpop.permute.xlu0 %3123
    %v3126 = vmul.f32 %v3116, %v3124
    %3128 = vrot.lane.b32.xlu0 %v3126, 16
    %v3129 = vpop.permute.xlu0 %3128
    %v3131 = vadd.f32 %v3121, %v3129
    %v3132 = vtanh.pop %v3131
    %3134 = vrot.lane.b32.xlu0 %v3132, 32
    %v3135 = vpop.permute.xlu0 %3134
    %v3137 = vmul.f32 %v3116, %v3135
    %v3139 = vrot.slane %v3137, 6
    %3140 = vrot.lane.b32.xlu0 %v3139, 16
    %v3141 = vpop.permute.xlu0 %3140
    %v3142 = vsel %vm225, %v3141, 0
    %3144 = vmatprep.subr.mxu0 0.0
    %3145 = vmatpush1.msra.mxu0 %v2065
    %3146 = vmatprep.subr.mxu0 0.0
    %3147 = vmatpush1.msra.mxu0 %v2066
    %3148 = vmatprep.subr.mxu0 0.0
    %3149 = vmatpush1.msra.mxu0 0.0
    %3150 = vmatprep.subr.mxu0 0.0
    %3151 = vmatpush1.msra.mxu0 0.0
    %3152 = vmatprep.subr.mxu0 0.0
    %3153 = vmatpush1.msra.mxu0 0.0
    %3154 = vmatprep.subr.mxu0 0.0
    %3155 = vmatpush1.msra.mxu0 0.0
    %3156 = vmatprep.subr.mxu0 0.0
    %3157 = vmatpush1.msra.mxu0 0.0
    %3158 = vmatprep.subr.mxu0 0.0
    %3159 = vmatpush1.msra.mxu0 0.0
    %3160 = vmatprep.subr.mxu0 0.0
    %3161 = vmatpush1.msra.mxu0 0.0
    %3162 = vmatprep.subr.mxu0 0.0
    %3163 = vmatpush1.msra.mxu0 0.0
    %3164 = vmatprep.subr.mxu0 0.0
    %3165 = vmatpush1.msra.mxu0 0.0
    %3166 = vmatprep.subr.mxu0 0.0
    %3167 = vmatpush1.msra.mxu0 0.0
    %3168 = vmatprep.subr.mxu0 0.0
    %3169 = vmatpush1.msra.mxu0 0.0
    %3170 = vmatprep.subr.mxu0 0.0
    %3171 = vmatpush1.msra.mxu0 0.0
    %3172 = vmatprep.subr.mxu0 0.0
    %3173 = vmatpush1.msra.mxu0 0.0
    %3174 = vmatprep.subr.mxu0 0.0
    %3175 = vmatpush1.msra.mxu0 0.0
    %3176 = vmatprep.subr.mxu0 0.0
    %3177 = vmatpush1.msra.mxu0 0.0
    %3178 = vmatprep.subr.mxu0 0.0
    %3179 = vmatpush1.msra.mxu0 0.0
    %3180 = vmatprep.subr.mxu0 0.0
    %3181 = vmatpush1.msra.mxu0 0.0
    %3182 = vmatprep.subr.mxu0 0.0
    %3183 = vmatpush1.msra.mxu0 0.0
    %3184 = vmatprep.subr.mxu0 0.0
    %3185 = vmatpush1.msra.mxu0 0.0
    %3186 = vmatprep.subr.mxu0 0.0
    %3187 = vmatpush1.msra.mxu0 0.0
    %3188 = vmatprep.subr.mxu0 0.0
    %3189 = vmatpush1.msra.mxu0 0.0
    %3190 = vmatprep.subr.mxu0 0.0
    %3191 = vmatpush1.msra.mxu0 0.0
    %3192 = vmatprep.subr.mxu0 0.0
    %3193 = vmatpush1.msra.mxu0 0.0
    %3194 = vmatprep.subr.mxu0 0.0
    %3195 = vmatpush1.msra.mxu0 0.0
    %3196 = vmatprep.subr.mxu0 0.0
    %3197 = vmatpush1.msra.mxu0 0.0
    %3198 = vmatprep.subr.mxu0 0.0
    %3199 = vmatpush1.msra.mxu0 0.0
    %3200 = vmatprep.subr.mxu0 0.0
    %3201 = vmatpush1.msra.mxu0 0.0
    %3202 = vmatprep.subr.mxu0 0.0
    %3203 = vmatpush1.msra.mxu0 0.0
    %3204 = vmatprep.subr.mxu0 0.0
    %3205 = vmatpush1.msra.mxu0 0.0
    %3206 = vmatprep.subr.mxu0 0.0
    %3207 = vmatpush1.msra.mxu0 0.0
    %3208 = vmatprep.mubr.f32.mxu0 0.0
    %3209 = vmatmul.mubr.f32.gmra.mrb[0].mxu0 %v3142
    %v3210 = vpop.f32.mrb[0].mxu0
    %v3211 = vadd.f32 0.0, %v3210
    %v3212 = vpop.f32.mrb[0].mxu0
    %3213 = vdwg.mxu0
    %v3215 = vrot.slane %v3211, 3
    %3216 = vrot.lane.b32.xlu0 %v3215, 64
    %v3217 = vpop.permute.xlu0 %3216
    %v3219 = vadd.f32 %v2060, %v3217
    %v3220 = vxor.u32 %v3219, 2147483648
    %v3221 = vmul.f32 %v3220, 1.442695
    %v3222 = vpow.pop %v3221
    %v3223 = vadd.f32 %v3222, 1.0
    %v3224 = vrcp.pop %v3223
    %v3225 = vmul.f32 1.0, %v3224
    %v3226 = vtanh.pop %v3219
    %v3228 = vrot.slane %v3131, 1
    %v3230 = vmul.f32 %v3225, %v3228
    %3232 = vrot.lane.b32.xlu0 %v3226, 96
    %v3233 = vpop.permute.xlu0 %3232
    %v3235 = vmul.f32 %v3225, %v3233
    %3237 = vrot.lane.b32.xlu0 %v3235, 16
    %v3238 = vpop.permute.xlu0 %3237
    %v3240 = vadd.f32 %v3230, %v3238
    %v3241 = vtanh.pop %v3240
    %3243 = vrot.lane.b32.xlu0 %v3241, 32
    %v3244 = vpop.permute.xlu0 %3243
    %v3246 = vmul.f32 %v3225, %v3244
    %v3248 = vrot.slane %v3246, 5
    %3249 = vrot.lane.b32.xlu0 %v3248, 16
    %v3250 = vpop.permute.xlu0 %3249
    %v3251 = vsel %vm225, %v3250, 0
    %3253 = vmatprep.subr.mxu0 0.0
    %3254 = vmatpush1.msra.mxu0 %v2065
    %3255 = vmatprep.subr.mxu0 0.0
    %3256 = vmatpush1.msra.mxu0 %v2066
    %3257 = vmatprep.subr.mxu0 0.0
    %3258 = vmatpush1.msra.mxu0 0.0
    %3259 = vmatprep.subr.mxu0 0.0
    %3260 = vmatpush1.msra.mxu0 0.0
    %3261 = vmatprep.subr.mxu0 0.0
    %3262 = vmatpush1.msra.mxu0 0.0
    %3263 = vmatprep.subr.mxu0 0.0
    %3264 = vmatpush1.msra.mxu0 0.0
    %3265 = vmatprep.subr.mxu0 0.0
    %3266 = vmatpush1.msra.mxu0 0.0
    %3267 = vmatprep.subr.mxu0 0.0
    %3268 = vmatpush1.msra.mxu0 0.0
    %3269 = vmatprep.subr.mxu0 0.0
    %3270 = vmatpush1.msra.mxu0 0.0
    %3271 = vmatprep.subr.mxu0 0.0
    %3272 = vmatpush1.msra.mxu0 0.0
    %3273 = vmatprep.subr.mxu0 0.0
    %3274 = vmatpush1.msra.mxu0 0.0
    %3275 = vmatprep.subr.mxu0 0.0
    %3276 = vmatpush1.msra.mxu0 0.0
    %3277 = vmatprep.subr.mxu0 0.0
    %3278 = vmatpush1.msra.mxu0 0.0
    %3279 = vmatprep.subr.mxu0 0.0
    %3280 = vmatpush1.msra.mxu0 0.0
    %3281 = vmatprep.subr.mxu0 0.0
    %3282 = vmatpush1.msra.mxu0 0.0
    %3283 = vmatprep.subr.mxu0 0.0
    %3284 = vmatpush1.msra.mxu0 0.0
    %3285 = vmatprep.subr.mxu0 0.0
    %3286 = vmatpush1.msra.mxu0 0.0
    %3287 = vmatprep.subr.mxu0 0.0
    %3288 = vmatpush1.msra.mxu0 0.0
    %3289 = vmatprep.subr.mxu0 0.0
    %3290 = vmatpush1.msra.mxu0 0.0
    %3291 = vmatprep.subr.mxu0 0.0
    %3292 = vmatpush1.msra.mxu0 0.0
    %3293 = vmatprep.subr.mxu0 0.0
    %3294 = vmatpush1.msra.mxu0 0.0
    %3295 = vmatprep.subr.mxu0 0.0
    %3296 = vmatpush1.msra.mxu0 0.0
    %3297 = vmatprep.subr.mxu0 0.0
    %3298 = vmatpush1.msra.mxu0 0.0
    %3299 = vmatprep.subr.mxu0 0.0
    %3300 = vmatpush1.msra.mxu0 0.0
    %3301 = vmatprep.subr.mxu0 0.0
    %3302 = vmatpush1.msra.mxu0 0.0
    %3303 = vmatprep.subr.mxu0 0.0
    %3304 = vmatpush1.msra.mxu0 0.0
    %3305 = vmatprep.subr.mxu0 0.0
    %3306 = vmatpush1.msra.mxu0 0.0
    %3307 = vmatprep.subr.mxu0 0.0
    %3308 = vmatpush1.msra.mxu0 0.0
    %3309 = vmatprep.subr.mxu0 0.0
    %3310 = vmatpush1.msra.mxu0 0.0
    %3311 = vmatprep.subr.mxu0 0.0
    %3312 = vmatpush1.msra.mxu0 0.0
    %3313 = vmatprep.subr.mxu0 0.0
    %3314 = vmatpush1.msra.mxu0 0.0
    %3315 = vmatprep.subr.mxu0 0.0
    %3316 = vmatpush1.msra.mxu0 0.0
    %3317 = vmatprep.mubr.f32.mxu0 0.0
    %3318 = vmatmul.mubr.f32.gmra.mrb[0].mxu0 %v3251
    %v3319 = vpop.f32.mrb[0].mxu0
    %v3320 = vadd.f32 0.0, %v3319
    %v3321 = vpop.f32.mrb[0].mxu0
    %3322 = vdwg.mxu0
    %v3324 = vrot.slane %v3320, 4
    %3325 = vrot.lane.b32.xlu0 %v3324, 64
    %v3326 = vpop.permute.xlu0 %3325
    %v3328 = vadd.f32 %v2060, %v3326
    %v3329 = vxor.u32 %v3328, 2147483648
    %v3330 = vmul.f32 %v3329, 1.442695
    %v3331 = vpow.pop %v3330
    %v3332 = vadd.f32 %v3331, 1.0
    %v3333 = vrcp.pop %v3332
    %v3334 = vmul.f32 1.0, %v3333
    %v3335 = vtanh.pop %v3328
    %v3337 = vrot.slane %v3240, 1
    %v3339 = vmul.f32 %v3334, %v3337
    %3341 = vrot.lane.b32.xlu0 %v3335, 96
    %v3342 = vpop.permute.xlu0 %3341
    %v3344 = vmul.f32 %v3334, %v3342
    %3346 = vrot.lane.b32.xlu0 %v3344, 16
    %v3347 = vpop.permute.xlu0 %3346
    %v3349 = vadd.f32 %v3339, %v3347
    %v3350 = vtanh.pop %v3349
    %3352 = vrot.lane.b32.xlu0 %v3350, 32
    %v3353 = vpop.permute.xlu0 %3352
    %v3355 = vmul.f32 %v3334, %v3353
    %v3357 = vrot.slane %v3355, 4
    %3358 = vrot.lane.b32.xlu0 %v3357, 16
    %v3359 = vpop.permute.xlu0 %3358
    %v3360 = vsel %vm225, %v3359, 0
    %3362 = vmatprep.subr.mxu0 0.0
    %3363 = vmatpush1.msra.mxu0 %v2065
    %3364 = vmatprep.subr.mxu0 0.0
    %3365 = vmatpush1.msra.mxu0 %v2066
    %3366 = vmatprep.subr.mxu0 0.0
    %3367 = vmatpush1.msra.mxu0 0.0
    %3368 = vmatprep.subr.mxu0 0.0
    %3369 = vmatpush1.msra.mxu0 0.0
    %3370 = vmatprep.subr.mxu0 0.0
    %3371 = vmatpush1.msra.mxu0 0.0
    %3372 = vmatprep.subr.mxu0 0.0
    %3373 = vmatpush1.msra.mxu0 0.0
    %3374 = vmatprep.subr.mxu0 0.0
    %3375 = vmatpush1.msra.mxu0 0.0
    %3376 = vmatprep.subr.mxu0 0.0
    %3377 = vmatpush1.msra.mxu0 0.0
    %3378 = vmatprep.subr.mxu0 0.0
    %3379 = vmatpush1.msra.mxu0 0.0
    %3380 = vmatprep.subr.mxu0 0.0
    %3381 = vmatpush1.msra.mxu0 0.0
    %3382 = vmatprep.subr.mxu0 0.0
    %3383 = vmatpush1.msra.mxu0 0.0
    %3384 = vmatprep.subr.mxu0 0.0
    %3385 = vmatpush1.msra.mxu0 0.0
    %3386 = vmatprep.subr.mxu0 0.0
    %3387 = vmatpush1.msra.mxu0 0.0
    %3388 = vmatprep.subr.mxu0 0.0
    %3389 = vmatpush1.msra.mxu0 0.0
    %3390 = vmatprep.subr.mxu0 0.0
    %3391 = vmatpush1.msra.mxu0 0.0
    %3392 = vmatprep.subr.mxu0 0.0
    %3393 = vmatpush1.msra.mxu0 0.0
    %3394 = vmatprep.subr.mxu0 0.0
    %3395 = vmatpush1.msra.mxu0 0.0
    %3396 = vmatprep.subr.mxu0 0.0
    %3397 = vmatpush1.msra.mxu0 0.0
    %3398 = vmatprep.subr.mxu0 0.0
    %3399 = vmatpush1.msra.mxu0 0.0
    %3400 = vmatprep.subr.mxu0 0.0
    %3401 = vmatpush1.msra.mxu0 0.0
    %3402 = vmatprep.subr.mxu0 0.0
    %3403 = vmatpush1.msra.mxu0 0.0
    %3404 = vmatprep.subr.mxu0 0.0
    %3405 = vmatpush1.msra.mxu0 0.0
    %3406 = vmatprep.subr.mxu0 0.0
    %3407 = vmatpush1.msra.mxu0 0.0
    %3408 = vmatprep.subr.mxu0 0.0
    %3409 = vmatpush1.msra.mxu0 0.0
    %3410 = vmatprep.subr.mxu0 0.0
    %3411 = vmatpush1.msra.mxu0 0.0
    %3412 = vmatprep.subr.mxu0 0.0
    %3413 = vmatpush1.msra.mxu0 0.0
    %3414 = vmatprep.subr.mxu0 0.0
    %3415 = vmatpush1.msra.mxu0 0.0
    %3416 = vmatprep.subr.mxu0 0.0
    %3417 = vmatpush1.msra.mxu0 0.0
    %3418 = vmatprep.subr.mxu0 0.0
    %3419 = vmatpush1.msra.mxu0 0.0
    %3420 = vmatprep.subr.mxu0 0.0
    %3421 = vmatpush1.msra.mxu0 0.0
    %3422 = vmatprep.subr.mxu0 0.0
    %3423 = vmatpush1.msra.mxu0 0.0
    %3424 = vmatprep.subr.mxu0 0.0
    %3425 = vmatpush1.msra.mxu0 0.0
    %3426 = vmatprep.mubr.f32.mxu0 0.0
    %3427 = vmatmul.mubr.f32.gmra.mrb[0].mxu0 %v3360
    %v3428 = vpop.f32.mrb[0].mxu0
    %v3429 = vadd.f32 0.0, %v3428
    %v3430 = vpop.f32.mrb[0].mxu0
    %3431 = vdwg.mxu0
    %v3433 = vrot.slane %v3429, 5
    %3434 = vrot.lane.b32.xlu0 %v3433, 64
    %v3435 = vpop.permute.xlu0 %3434
    %v3437 = vadd.f32 %v2060, %v3435
    %v3438 = vxor.u32 %v3437, 2147483648
    %v3439 = vmul.f32 %v3438, 1.442695
    %v3440 = vpow.pop %v3439
    %v3441 = vadd.f32 %v3440, 1.0
    %v3442 = vrcp.pop %v3441
    %v3443 = vmul.f32 1.0, %v3442
    %v3444 = vtanh.pop %v3437
    %v3446 = vrot.slane %v3349, 1
    %v3448 = vmul.f32 %v3443, %v3446
    %3450 = vrot.lane.b32.xlu0 %v3444, 96
    %v3451 = vpop.permute.xlu0 %3450
    %v3453 = vmul.f32 %v3443, %v3451
    %3455 = vrot.lane.b32.xlu0 %v3453, 16
    %v3456 = vpop.permute.xlu0 %3455
    %v3458 = vadd.f32 %v3448, %v3456
    %v3459 = vtanh.pop %v3458
    %3461 = vrot.lane.b32.xlu0 %v3459, 32
    %v3462 = vpop.permute.xlu0 %3461
    %v3464 = vmul.f32 %v3443, %v3462
    %v3466 = vrot.slane %v3464, 3
    %3467 = vrot.lane.b32.xlu0 %v3466, 16
    %v3468 = vpop.permute.xlu0 %3467
    %v3469 = vsel %vm225, %v3468, 0
    %3471 = vmatprep.subr.mxu0 0.0
    %3472 = vmatpush1.msra.mxu0 %v2065
    %3473 = vmatprep.subr.mxu0 0.0
    %3474 = vmatpush1.msra.mxu0 %v2066
    %3475 = vmatprep.subr.mxu0 0.0
    %3476 = vmatpush1.msra.mxu0 0.0
    %3477 = vmatprep.subr.mxu0 0.0
    %3478 = vmatpush1.msra.mxu0 0.0
    %3479 = vmatprep.subr.mxu0 0.0
    %3480 = vmatpush1.msra.mxu0 0.0
    %3481 = vmatprep.subr.mxu0 0.0
    %3482 = vmatpush1.msra.mxu0 0.0
    %3483 = vmatprep.subr.mxu0 0.0
    %3484 = vmatpush1.msra.mxu0 0.0
    %3485 = vmatprep.subr.mxu0 0.0
    %3486 = vmatpush1.msra.mxu0 0.0
    %3487 = vmatprep.subr.mxu0 0.0
    %3488 = vmatpush1.msra.mxu0 0.0
    %3489 = vmatprep.subr.mxu0 0.0
    %3490 = vmatpush1.msra.mxu0 0.0
    %3491 = vmatprep.subr.mxu0 0.0
    %3492 = vmatpush1.msra.mxu0 0.0
    %3493 = vmatprep.subr.mxu0 0.0
    %3494 = vmatpush1.msra.mxu0 0.0
    %3495 = vmatprep.subr.mxu0 0.0
    %3496 = vmatpush1.msra.mxu0 0.0
    %3497 = vmatprep.subr.mxu0 0.0
    %3498 = vmatpush1.msra.mxu0 0.0
    %3499 = vmatprep.subr.mxu0 0.0
    %3500 = vmatpush1.msra.mxu0 0.0
    %3501 = vmatprep.subr.mxu0 0.0
    %3502 = vmatpush1.msra.mxu0 0.0
    %3503 = vmatprep.subr.mxu0 0.0
    %3504 = vmatpush1.msra.mxu0 0.0
    %3505 = vmatprep.subr.mxu0 0.0
    %3506 = vmatpush1.msra.mxu0 0.0
    %3507 = vmatprep.subr.mxu0 0.0
    %3508 = vmatpush1.msra.mxu0 0.0
    %3509 = vmatprep.subr.mxu0 0.0
    %3510 = vmatpush1.msra.mxu0 0.0
    %3511 = vmatprep.subr.mxu0 0.0
    %3512 = vmatpush1.msra.mxu0 0.0
    %3513 = vmatprep.subr.mxu0 0.0
    %3514 = vmatpush1.msra.mxu0 0.0
    %3515 = vmatprep.subr.mxu0 0.0
    %3516 = vmatpush1.msra.mxu0 0.0
    %3517 = vmatprep.subr.mxu0 0.0
    %3518 = vmatpush1.msra.mxu0 0.0
    %3519 = vmatprep.subr.mxu0 0.0
    %3520 = vmatpush1.msra.mxu0 0.0
    %3521 = vmatprep.subr.mxu0 0.0
    %3522 = vmatpush1.msra.mxu0 0.0
    %3523 = vmatprep.subr.mxu0 0.0
    %3524 = vmatpush1.msra.mxu0 0.0
    %3525 = vmatprep.subr.mxu0 0.0
    %3526 = vmatpush1.msra.mxu0 0.0
    %3527 = vmatprep.subr.mxu0 0.0
    %3528 = vmatpush1.msra.mxu0 0.0
    %3529 = vmatprep.subr.mxu0 0.0
    %3530 = vmatpush1.msra.mxu0 0.0
    %3531 = vmatprep.subr.mxu0 0.0
    %3532 = vmatpush1.msra.mxu0 0.0
    %3533 = vmatprep.subr.mxu0 0.0
    %3534 = vmatpush1.msra.mxu0 0.0
    %3535 = vmatprep.mubr.f32.mxu0 0.0
    %3536 = vmatmul.mubr.f32.gmra.mrb[0].mxu0 %v3469
    %v3537 = vpop.f32.mrb[0].mxu0
    %v3538 = vadd.f32 0.0, %v3537
    %v3539 = vpop.f32.mrb[0].mxu0
    %3540 = vdwg.mxu0
    %v3542 = vrot.slane %v3538, 6
    %3543 = vrot.lane.b32.xlu0 %v3542, 64
    %v3544 = vpop.permute.xlu0 %3543
    %v3546 = vadd.f32 %v2060, %v3544
    %v3547 = vxor.u32 %v3546, 2147483648
    %v3548 = vmul.f32 %v3547, 1.442695
    %v3549 = vpow.pop %v3548
    %v3550 = vadd.f32 %v3549, 1.0
    %v3551 = vrcp.pop %v3550
    %v3552 = vmul.f32 1.0, %v3551
    %v3553 = vtanh.pop %v3546
    %v3555 = vrot.slane %v3458, 1
    %v3557 = vmul.f32 %v3552, %v3555
    %3559 = vrot.lane.b32.xlu0 %v3553, 96
    %v3560 = vpop.permute.xlu0 %3559
    %v3562 = vmul.f32 %v3552, %v3560
    %3564 = vrot.lane.b32.xlu0 %v3562, 16
    %v3565 = vpop.permute.xlu0 %3564
    %v3567 = vadd.f32 %v3557, %v3565
    %v3568 = vtanh.pop %v3567
    %3570 = vrot.lane.b32.xlu0 %v3568, 32
    %v3571 = vpop.permute.xlu0 %3570
    %v3573 = vmul.f32 %v3552, %v3571
    %v3575 = vrot.slane %v3573, 2
    %3576 = vrot.lane.b32.xlu0 %v3575, 16
    %v3577 = vpop.permute.xlu0 %3576
    %v3578 = vsel %vm225, %v3577, 0
    %3580 = vmatprep.subr.mxu0 0.0
    %3581 = vmatpush1.msra.mxu0 %v2065
    %3582 = vmatprep.subr.mxu0 0.0
    %3583 = vmatpush1.msra.mxu0 %v2066
    %3584 = vmatprep.subr.mxu0 0.0
    %3585 = vmatpush1.msra.mxu0 0.0
    %3586 = vmatprep.subr.mxu0 0.0
    %3587 = vmatpush1.msra.mxu0 0.0
    %3588 = vmatprep.subr.mxu0 0.0
    %3589 = vmatpush1.msra.mxu0 0.0
    %3590 = vmatprep.subr.mxu0 0.0
    %3591 = vmatpush1.msra.mxu0 0.0
    %3592 = vmatprep.subr.mxu0 0.0
    %3593 = vmatpush1.msra.mxu0 0.0
    %3594 = vmatprep.subr.mxu0 0.0
    %3595 = vmatpush1.msra.mxu0 0.0
    %3596 = vmatprep.subr.mxu0 0.0
    %3597 = vmatpush1.msra.mxu0 0.0
    %3598 = vmatprep.subr.mxu0 0.0
    %3599 = vmatpush1.msra.mxu0 0.0
    %3600 = vmatprep.subr.mxu0 0.0
    %3601 = vmatpush1.msra.mxu0 0.0
    %3602 = vmatprep.subr.mxu0 0.0
    %3603 = vmatpush1.msra.mxu0 0.0
    %3604 = vmatprep.subr.mxu0 0.0
    %3605 = vmatpush1.msra.mxu0 0.0
    %3606 = vmatprep.subr.mxu0 0.0
    %3607 = vmatpush1.msra.mxu0 0.0
    %3608 = vmatprep.subr.mxu0 0.0
    %3609 = vmatpush1.msra.mxu0 0.0
    %3610 = vmatprep.subr.mxu0 0.0
    %3611 = vmatpush1.msra.mxu0 0.0
    %3612 = vmatprep.subr.mxu0 0.0
    %3613 = vmatpush1.msra.mxu0 0.0
    %3614 = vmatprep.subr.mxu0 0.0
    %3615 = vmatpush1.msra.mxu0 0.0
    %3616 = vmatprep.subr.mxu0 0.0
    %3617 = vmatpush1.msra.mxu0 0.0
    %3618 = vmatprep.subr.mxu0 0.0
    %3619 = vmatpush1.msra.mxu0 0.0
    %3620 = vmatprep.subr.mxu0 0.0
    %3621 = vmatpush1.msra.mxu0 0.0
    %3622 = vmatprep.subr.mxu0 0.0
    %3623 = vmatpush1.msra.mxu0 0.0
    %3624 = vmatprep.subr.mxu0 0.0
    %3625 = vmatpush1.msra.mxu0 0.0
    %3626 = vmatprep.subr.mxu0 0.0
    %3627 = vmatpush1.msra.mxu0 0.0
    %3628 = vmatprep.subr.mxu0 0.0
    %3629 = vmatpush1.msra.mxu0 0.0
    %3630 = vmatprep.subr.mxu0 0.0
    %3631 = vmatpush1.msra.mxu0 0.0
    %3632 = vmatprep.subr.mxu0 0.0
    %3633 = vmatpush1.msra.mxu0 0.0
    %3634 = vmatprep.subr.mxu0 0.0
    %3635 = vmatpush1.msra.mxu0 0.0
    %3636 = vmatprep.subr.mxu0 0.0
    %3637 = vmatpush1.msra.mxu0 0.0
    %3638 = vmatprep.subr.mxu0 0.0
    %3639 = vmatpush1.msra.mxu0 0.0
    %3640 = vmatprep.subr.mxu0 0.0
    %3641 = vmatpush1.msra.mxu0 0.0
    %3642 = vmatprep.subr.mxu0 0.0
    %3643 = vmatpush1.msra.mxu0 0.0
    %3644 = vmatprep.mubr.f32.mxu0 0.0
    %3645 = vmatmul.mubr.f32.gmra.mrb[0].mxu0 %v3578
    %v3646 = vpop.f32.mrb[0].mxu0
    %v3647 = vadd.f32 0.0, %v3646
    %v3648 = vpop.f32.mrb[0].mxu0
    %3649 = vdwg.mxu0
    %v3651 = vrot.slane %v3647, 7
    %3652 = vrot.lane.b32.xlu0 %v3651, 64
    %v3653 = vpop.permute.xlu0 %3652
    %v3655 = vadd.f32 %v2060, %v3653
    %v3656 = vxor.u32 %v3655, 2147483648
    %v3657 = vmul.f32 %v3656, 1.442695
    %v3658 = vpow.pop %v3657
    %v3659 = vadd.f32 %v3658, 1.0
    %v3660 = vrcp.pop %v3659
    %v3661 = vmul.f32 1.0, %v3660
    %v3662 = vtanh.pop %v3655
    %v3664 = vrot.slane %v3567, 1
    %v3666 = vmul.f32 %v3661, %v3664
    %3668 = vrot.lane.b32.xlu0 %v3662, 96
    %v3669 = vpop.permute.xlu0 %3668
    %v3671 = vmul.f32 %v3661, %v3669
    %3673 = vrot.lane.b32.xlu0 %v3671, 16
    %v3674 = vpop.permute.xlu0 %3673
    %v3676 = vadd.f32 %v3666, %v3674
    %v3677 = vtanh.pop %v3676
    %3679 = vrot.lane.b32.xlu0 %v3677, 32
    %v3680 = vpop.permute.xlu0 %3679
    %v3682 = vmul.f32 %v3661, %v3680
    %v3684 = vrot.slane %v3682, 1
    %3685 = vrot.lane.b32.xlu0 %v3684, 16
    %v3686 = vpop.permute.xlu0 %3685
    %v3687 = vsel %vm225, %v3686, 0
    %3689 = vmatprep.subr.mxu0 0.0
    %3690 = vmatpush1.msra.mxu0 %v2065
    %3691 = vmatprep.subr.mxu0 0.0
    %3692 = vmatpush1.msra.mxu0 %v2066
    %3693 = vmatprep.subr.mxu0 0.0
    %3694 = vmatpush1.msra.mxu0 0.0
    %3695 = vmatprep.subr.mxu0 0.0
    %3696 = vmatpush1.msra.mxu0 0.0
    %3697 = vmatprep.subr.mxu0 0.0
    %3698 = vmatpush1.msra.mxu0 0.0
    %3699 = vmatprep.subr.mxu0 0.0
    %3700 = vmatpush1.msra.mxu0 0.0
    %3701 = vmatprep.subr.mxu0 0.0
    %3702 = vmatpush1.msra.mxu0 0.0
    %3703 = vmatprep.subr.mxu0 0.0
    %3704 = vmatpush1.msra.mxu0 0.0
    %3705 = vmatprep.subr.mxu0 0.0
    %3706 = vmatpush1.msra.mxu0 0.0
    %3707 = vmatprep.subr.mxu0 0.0
    %3708 = vmatpush1.msra.mxu0 0.0
    %3709 = vmatprep.subr.mxu0 0.0
    %3710 = vmatpush1.msra.mxu0 0.0
    %3711 = vmatprep.subr.mxu0 0.0
    %3712 = vmatpush1.msra.mxu0 0.0
    %3713 = vmatprep.subr.mxu0 0.0
    %3714 = vmatpush1.msra.mxu0 0.0
    %3715 = vmatprep.subr.mxu0 0.0
    %3716 = vmatpush1.msra.mxu0 0.0
    %3717 = vmatprep.subr.mxu0 0.0
    %3718 = vmatpush1.msra.mxu0 0.0
    %3719 = vmatprep.subr.mxu0 0.0
    %3720 = vmatpush1.msra.mxu0 0.0
    %3721 = vmatprep.subr.mxu0 0.0
    %3722 = vmatpush1.msra.mxu0 0.0
    %3723 = vmatprep.subr.mxu0 0.0
    %3724 = vmatpush1.msra.mxu0 0.0
    %3725 = vmatprep.subr.mxu0 0.0
    %3726 = vmatpush1.msra.mxu0 0.0
    %3727 = vmatprep.subr.mxu0 0.0
    %3728 = vmatpush1.msra.mxu0 0.0
    %3729 = vmatprep.subr.mxu0 0.0
    %3730 = vmatpush1.msra.mxu0 0.0
    %3731 = vmatprep.subr.mxu0 0.0
    %3732 = vmatpush1.msra.mxu0 0.0
    %3733 = vmatprep.subr.mxu0 0.0
    %3734 = vmatpush1.msra.mxu0 0.0
    %3735 = vmatprep.subr.mxu0 0.0
    %3736 = vmatpush1.msra.mxu0 0.0
    %3737 = vmatprep.subr.mxu0 0.0
    %3738 = vmatpush1.msra.mxu0 0.0
    %3739 = vmatprep.subr.mxu0 0.0
    %3740 = vmatpush1.msra.mxu0 0.0
    %3741 = vmatprep.subr.mxu0 0.0
    %3742 = vmatpush1.msra.mxu0 0.0
    %3743 = vmatprep.subr.mxu0 0.0
    %3744 = vmatpush1.msra.mxu0 0.0
    %3745 = vmatprep.subr.mxu0 0.0
    %3746 = vmatpush1.msra.mxu0 0.0
    %3747 = vmatprep.subr.mxu0 0.0
    %3748 = vmatpush1.msra.mxu0 0.0
    %3749 = vmatprep.subr.mxu0 0.0
    %3750 = vmatpush1.msra.mxu0 0.0
    %3751 = vmatprep.subr.mxu0 0.0
    %3752 = vmatpush1.msra.mxu0 0.0
    %3753 = vmatprep.mubr.f32.mxu0 0.0
    %3754 = vmatmul.mubr.f32.gmra.mrb[0].mxu0 %v3687
    %v3755 = vpop.f32.mrb[0].mxu0
    %v3756 = vadd.f32 0.0, %v3755
    %v3757 = vpop.f32.mrb[0].mxu0
    %3758 = vdwg.mxu0
    %3760 = vrot.lane.b32.xlu0 %v3756, 64
    %v3761 = vpop.permute.xlu0 %3760
    %v3763 = vadd.f32 %v2060, %v3761
    %v3764 = vxor.u32 %v3763, 2147483648
    %v3765 = vmul.f32 %v3764, 1.442695
    %v3766 = vpow.pop %v3765
    %v3767 = vadd.f32 %v3766, 1.0
    %v3768 = vrcp.pop %v3767
    %v3769 = vmul.f32 1.0, %v3768
    %v3770 = vtanh.pop %v3763
    %v3772 = vrot.slane %v3676, 1
    %v3774 = vmul.f32 %v3769, %v3772
    %3776 = vrot.lane.b32.xlu0 %v3770, 96
    %v3777 = vpop.permute.xlu0 %3776
    %v3779 = vmul.f32 %v3769, %v3777
    %3781 = vrot.lane.b32.xlu0 %v3779, 16
    %v3782 = vpop.permute.xlu0 %3781
    %v3784 = vadd.f32 %v3774, %v3782
    %v3785 = vtanh.pop %v3784
    %3787 = vrot.lane.b32.xlu0 %v3785, 32
    %v3788 = vpop.permute.xlu0 %3787
    %v3790 = vmul.f32 %v3769, %v3788
    %v3791 = vsel %vm1948, %v2170, %v2276
    %v3792 = vsel %vm1950, %v3791, %v2383
    %v3793 = vsel %vm1952, %v3792, %v2490
    %v3794 = vsel %vm1954, %v3793, %v2597
    %v3795 = vsel %vm1956, %v3794, %v2704
    %v3796 = vsel %vm1958, %v3795, %v2811
    %v3797 = vsel %vm1960, %v3796, %v2918
    %v3798 = vsel %vm1948, %v3790, %v3682
    %v3799 = vsel %vm1950, %v3798, %v3573
    %v3800 = vsel %vm1952, %v3799, %v3464
    %v3801 = vsel %vm1954, %v3800, %v3355
    %v3802 = vsel %vm1956, %v3801, %v3246
    %v3803 = vsel %vm1958, %v3802, %v3137
    %v3804 = vsel %vm1960, %v3803, %v3028
    %3806 = vrot.lane.b32.xlu0 %v3797, 80
    %v3807 = vpop.permute.xlu0 %3806
    %3810 = vrot.lane.b32.xlu0 %v3804, 32
    %v3811 = vpop.permute.xlu0 %3810
    %v3813 = vsel %vm225, %v3807, %v3811
    %v3815 = vrot.slane %v1075, 7
    %v3818 = vrot.slane %v1947, 7
    %3819 = vrot.lane.b32.xlu0 %v3818, 64
    %v3820 = vpop.permute.xlu0 %3819
    %v3823 = vrot.slane %v2918, 5
    %v3826 = vrot.slane %v3790, 5
    %3827 = vrot.lane.b32.xlu0 %v3826, 64
    %v3828 = vpop.permute.xlu0 %3827
    %v3830 = vsel %vm1948, %v3815, %v3820
    %v3831 = vsel %vm1950, %v3830, %v3823
    %v3832 = vsel %vm1952, %v3831, %v3828
    %3834 = vrot.lane.b32.xlu0 %v3832, 80
    %v3835 = vpop.permute.xlu0 %3834
    %vm3837 = vcmask 125952
    %3838 = vst.msk [vmem:[#allocation14] sm:$0xf] %vm3837, %v3835
    %v3840 = vrot.slane %v1069, 7
    %v3843 = vrot.slane %v1941, 7
    %3844 = vrot.lane.b32.xlu0 %v3843, 64
    %v3845 = vpop.permute.xlu0 %3844
    %v3848 = vrot.slane %v2912, 5
    %v3851 = vrot.slane %v3784, 5
    %3852 = vrot.lane.b32.xlu0 %v3851, 64
    %v3853 = vpop.permute.xlu0 %3852
    %v3855 = vsel %vm1948, %v3840, %v3845
    %v3856 = vsel %vm1950, %v3855, %v3848
    %v3857 = vsel %vm1952, %v3856, %v3853
    %3859 = vrot.lane.b32.xlu0 %v3857, 112
    %v3860 = vpop.permute.xlu0 %3859
    %3862 = vst.msk [vmem:[#allocation16] sm:$0xf] %vm3837, %v3860
    %v3863 = vld [vmem:[#allocation11] sm:$0xff]
    %v3864 = vld [vmem:[#allocation11 + $0x8] sm:$0xff]
    %v3865 = vld [vmem:[#allocation11 + $0x10] sm:$0xff]
    %v3866 = vld [vmem:[#allocation11 + $0x18] sm:$0xff]
    %v3867 = vld [vmem:[%s10] sm:$0x1]
    %v3869 = vlaneseq
    %v3870 = vshrl.u32 %v3869, 7
    %v3871 = vsub.s32 0, %v3870
    %v3872 = vrot.slane %v3867, %v3871
    %v3875 = vsel %vm1989, %v3813, 0
    %3877 = vmatprep.subr.mxu0 0.0
    %3878 = vmatpush1.msra.mxu0 %v3863
    %3879 = vmatprep.subr.mxu0 0.0
    %3880 = vmatpush1.msra.mxu0 %v3864
    %3881 = vmatprep.subr.mxu0 0.0
    %3882 = vmatpush1.msra.mxu0 %v3865
    %3883 = vmatprep.subr.mxu0 0.0
    %3884 = vmatpush1.msra.mxu0 %v3866
    %3885 = vmatprep.subr.mxu0 0.0
    %3886 = vmatpush1.msra.mxu0 0.0
    %3887 = vmatprep.subr.mxu0 0.0
    %3888 = vmatpush1.msra.mxu0 0.0
    %3889 = vmatprep.subr.mxu0 0.0
    %3890 = vmatpush1.msra.mxu0 0.0
    %3891 = vmatprep.subr.mxu0 0.0
    %3892 = vmatpush1.msra.mxu0 0.0
    %3893 = vmatprep.subr.mxu0 0.0
    %3894 = vmatpush1.msra.mxu0 0.0
    %3895 = vmatprep.subr.mxu0 0.0
    %3896 = vmatpush1.msra.mxu0 0.0
    %3897 = vmatprep.subr.mxu0 0.0
    %3898 = vmatpush1.msra.mxu0 0.0
    %3899 = vmatprep.subr.mxu0 0.0
    %3900 = vmatpush1.msra.mxu0 0.0
    %3901 = vmatprep.subr.mxu0 0.0
    %3902 = vmatpush1.msra.mxu0 0.0
    %3903 = vmatprep.subr.mxu0 0.0
    %3904 = vmatpush1.msra.mxu0 0.0
    %3905 = vmatprep.subr.mxu0 0.0
    %3906 = vmatpush1.msra.mxu0 0.0
    %3907 = vmatprep.subr.mxu0 0.0
    %3908 = vmatpush1.msra.mxu0 0.0
    %3909 = vmatprep.subr.mxu0 0.0
    %3910 = vmatpush1.msra.mxu0 0.0
    %3911 = vmatprep.subr.mxu0 0.0
    %3912 = vmatpush1.msra.mxu0 0.0
    %3913 = vmatprep.subr.mxu0 0.0
    %3914 = vmatpush1.msra.mxu0 0.0
    %3915 = vmatprep.subr.mxu0 0.0
    %3916 = vmatpush1.msra.mxu0 0.0
    %3917 = vmatprep.subr.mxu0 0.0
    %3918 = vmatpush1.msra.mxu0 0.0
    %3919 = vmatprep.subr.mxu0 0.0
    %3920 = vmatpush1.msra.mxu0 0.0
    %3921 = vmatprep.subr.mxu0 0.0
    %3922 = vmatpush1.msra.mxu0 0.0
    %3923 = vmatprep.subr.mxu0 0.0
    %3924 = vmatpush1.msra.mxu0 0.0
    %3925 = vmatprep.subr.mxu0 0.0
    %3926 = vmatpush1.msra.mxu0 0.0
    %3927 = vmatprep.subr.mxu0 0.0
    %3928 = vmatpush1.msra.mxu0 0.0
    %3929 = vmatprep.subr.mxu0 0.0
    %3930 = vmatpush1.msra.mxu0 0.0
    %3931 = vmatprep.subr.mxu0 0.0
    %3932 = vmatpush1.msra.mxu0 0.0
    %3933 = vmatprep.subr.mxu0 0.0
    %3934 = vmatpush1.msra.mxu0 0.0
    %3935 = vmatprep.subr.mxu0 0.0
    %3936 = vmatpush1.msra.mxu0 0.0
    %3937 = vmatprep.subr.mxu0 0.0
    %3938 = vmatpush1.msra.mxu0 0.0
    %3939 = vmatprep.subr.mxu0 0.0
    %3940 = vmatpush1.msra.mxu0 0.0
    %3941 = vmatprep.mubr.f32.mxu0 0.0
    %3942 = vmatmul.mubr.f32.gmra.mrb[0].mxu0 %v3875
    %v3943 = vpop.f32.mrb[0].mxu0
    %v3944 = vadd.f32 %v3872, %v3943
    %v3945 = vpop.f32.mrb[0].mxu0
    %3946 = vdwg.mxu0
    %3947 = vmax.xlane.f32.xlu0 %v3944
    %v3948 = vpop.xlane.xlu0 %3947
    %v3949 = vsub.f32 %v3944, %v3948
    %v3950 = vmul.f32 %v3949, 1.442695
    %v3951 = vpow.pop %v3950
    %3952 = vadd.xlane.f32.xlu0 %v3951
    %v3953 = vpop.xlane.xlu0 %3952
    %v3954 = vrcp.pop %v3953
    %v3955 = vmul.f32 %v3953, %v3954
    %v3956 = vsub.f32 2.0, %v3955
    %v3957 = vmul.f32 %v3954, %v3956
    %v3958 = vmul.f32 %v3951, %v3957
    %3959 = vst [vmem:[#allocation13] sm:$0xff] %v3958
    // Predicated region
    $region70: #{tpu_custom_call.1} parent=1 // pred_check
      _
    $region71: #{tpu_custom_call.1} parent=1 // pred_check_branch
      %3961 = sbr.rel (0) target = $region73
    $region72: #{tpu_custom_call.1} parent=1 // pred_region
      %s3963 = ssub.s32 128, 128
      %3964 = vsyncadd [#allocation4], %s3963
      %s3966 = sshll.u32 [#allocation13], 4
      %s3967 = int_to_ptr.vmem [resolvable:$true] %s3966
      %3969 = dma.vmem_to_hbm [thread:$0]  %s3967, 128, %s11, [#allocation4]
    $region73: #{tpu_custom_call.1} parent=1 // pred_fallthru
      _
    // Predicated region
    $region74: #{tpu_custom_call.1} parent=1 // pred_check
      _
    $region75: #{tpu_custom_call.1} parent=1 // pred_check_branch
      %3971 = sbr.rel (0) target = $region77
    $region76: #{tpu_custom_call.1} parent=1 // pred_region
      %s3973 = ssub.s32 64, 64
      %3974 = vsyncadd [#allocation15], %s3973
      %s3976 = sshll.u32 [#allocation14], 4
      %s3977 = int_to_ptr.vmem [resolvable:$true] %s3976
      %3979 = dma.vmem_to_hbm [thread:$0]  %s3977, 64, %s12, [#allocation15]
    $region77: #{tpu_custom_call.1} parent=1 // pred_fallthru
      _
    // Predicated region
    $region78: #{tpu_custom_call.1} parent=1 // pred_check
      _
    $region79: #{tpu_custom_call.1} parent=1 // pred_check_branch
      %3981 = sbr.rel (0) target = $region81
    $region80: #{tpu_custom_call.1} parent=1 // pred_region
      %s3983 = ssub.s32 64, 64
      %3984 = vsyncadd [#allocation15], %s3983
      %s3986 = sshll.u32 [#allocation16], 4
      %s3987 = int_to_ptr.vmem [resolvable:$true] %s3986
      %3989 = dma.vmem_to_hbm [thread:$0]  %s3987, 64, %s13, [#allocation15]
    $region81: #{tpu_custom_call.1} parent=1 // pred_fallthru
      _
    // Predicated region
    $region82: #{tpu_custom_call.1} parent=1 // pred_check
      _
    $region83: #{tpu_custom_call.1} parent=1 // pred_check_branch
      %3991 = sbr.rel (0) target = $region85
    $region84: #{tpu_custom_call.1} parent=1 // pred_region
      %3992 = dma.done [#allocation4], 128
    $region85: #{tpu_custom_call.1} parent=1 // pred_fallthru
      _
    // Predicated region
    $region86: #{tpu_custom_call.1} parent=1 // pred_check
      _
    $region87: #{tpu_custom_call.1} parent=1 // pred_check_branch
      %3994 = sbr.rel (0) target = $region89
    $region88: #{tpu_custom_call.1} parent=1 // pred_region
      %3995 = dma.done [#allocation15], 64
    $region89: #{tpu_custom_call.1} parent=1 // pred_fallthru
      _
    // Predicated region
    $region90: #{tpu_custom_call.1} parent=1 // pred_check
      _
    $region91: #{tpu_custom_call.1} parent=1 // pred_check_branch
      %3997 = sbr.rel (0) target = $region93
    $region92: #{tpu_custom_call.1} parent=1 // pred_region
      %3998 = dma.done [#allocation15], 64
    $region93: #{tpu_custom_call.1} parent=1 // pred_fallthru
      _
    %3999 = vsyncpa [#allocation3], 1
    %4000 = vsyncpa [#allocation6], 1
    %4001 = vsyncpa [#allocation9], 1
    %4002 = vsyncpa [#allocation12], 1
    %4003 = vsyncpa [#allocation4], 1
    %4004 = vsyncpa [#allocation15], 1

</llo_original>
